<compile_context>
chip_gen: v6e
topology: v6e:2x2x1
jax: 0.10.0
libtpu: 0.0.40
codegen_flags: <defaults>
</compile_context>

<pallas_src>
import jax
import jax.numpy as jnp
from jax.experimental import pallas as pl
from jax.experimental.pallas import tpu as pltpu


# ----------------------------------------------------------------------------
# per-branch fused kernel (one grid step = one branch: full LSTM stack + sum)
# ----------------------------------------------------------------------------
def _make_branch_kernel(T, B, H, n_layers, n_scratch):
    n_w = 3 * n_layers
    f32 = jnp.float32
    cdt = jnp.bfloat16   # MXU input dtype

    def kernel(x_ref, msk_ref, *refs):
        w_refs = refs[:n_w]
        out_ref = refs[n_w]
        scr = refs[n_w + 1:]

        # Constant direction selector for the block-diagonal recurrent matmul:
        # rows 0:B (fwd state) keep lanes 0:H, rows B:2B (bwd state) keep H:2H.
        row = jax.lax.broadcasted_iota(jnp.int32, (2 * B, 2 * H), 0)
        col = jax.lax.broadcasted_iota(jnp.int32, (2 * B, 2 * H), 1)
        dir_mask = ((row < B) == (col < H)).astype(f32)

        acc = None
        for l in range(n_layers):
            last = l == n_layers - 1

            # -- point-of-use weight loads (bounds live ranges; bf16 for MXU) --
            wih = w_refs[3 * l][0]        # (D_in, 8H) bf16, [fwd | bwd] lanes
            whh = w_refs[3 * l + 1][0]    # (2H, 4H)   bf16, [fwd ; bwd] rows
            b = w_refs[3 * l + 2][0]      # (1, 8H)    f32

            # -- layer input slab (T*B, D_in): row block t = [y_f(t), y_b(t)] --
            if l == 0:
                x2d = x_ref[0]                                    # bf16
            else:
                x2d = scr[(l - 1) % n_scratch][...].astype(cdt)

            # -- ONE batched input projection per layer (off the serial path) --
            xw = jnp.dot(x2d, wih, preferred_element_type=f32) + b   # (T*B, 8H)

            # -- stacked fwd/bwd recurrence --
            s_h = jnp.zeros((2 * B, H), f32)
            s_c = jnp.zeros((2 * B, H), f32)
            if last:
                acc = jnp.zeros((2 * B, H), f32)

            for s in range(T):            # T small & static: fully unrolled
                rf = s * B                # fwd direction processes time s
                rb = (T - 1 - s) * B      # bwd direction processes time T-1-s
                x_st = jnp.concatenate(
                    [xw[rf:rf + B, 0:4 * H], xw[rb:rb + B, 4 * H:8 * H]],
                    axis=0)                                       # (2B, 4H)

                # block-diagonal h @ W_hh: one MXU push for both directions
                h_wide = (jnp.concatenate([s_h, s_h], axis=1)
                          * dir_mask).astype(cdt)                 # (2B, 2H)
                pre = x_st + jnp.dot(h_wide, whh, preferred_element_type=f32)

                sig = jax.nn.sigmoid(pre)          # full-width EUP pass
                th = jnp.tanh(pre)                 # full-width EUP pass
                i_g = sig[:, 0 * H:1 * H]
                f_g = sig[:, 1 * H:2 * H]
                g_g = th[:, 2 * H:3 * H]
                o_g = sig[:, 3 * H:4 * H]

                c_new = f_g * s_c + i_g * g_g
                h_new = o_g * jnp.tanh(c_new)

                m = msk_ref[0, pl.ds(s * 2 * B, 2 * B), :]   # (2B, H) lane-dense
                y = m * h_new                      # zero output at padded steps
                s_h = y + (1.0 - m) * s_h          # no state update when padded
                s_c = m * c_new + (1.0 - m) * s_c

                if last:
                    acc = acc + y                  # in-kernel torch.sum(out, dim=1)
                else:
                    # stream this step's outputs into next layer's input slab
                    buf = scr[l % n_scratch]
                    buf[pl.ds(rf, B), pl.ds(0, H)] = y[0:B, :]      # y_f(s)
                    buf[pl.ds(rb, B), pl.ds(H, H)] = y[B:2 * B, :]  # y_b(T-1-s)

        # [sum_fwd | sum_bwd]  -> (B, 2H)
        out_ref[0] = jnp.concatenate([acc[0:B, :], acc[B:2 * B, :]], axis=1)

    return kernel


def _branch_sums(x_all, msk_all, flat_w, *, T, B, D, H, n_layers):
    NB = x_all.shape[0]
    n_scratch = 0 if n_layers <= 1 else min(2, n_layers - 1)
    kernel = _make_branch_kernel(T, B, H, n_layers, n_scratch)

    in_specs = [
        pl.BlockSpec((1, T * B, D), lambda p: (p, 0, 0)),
        pl.BlockSpec((1, T * 2 * B, H), lambda p: (p, 0, 0)),
    ]
    for w in flat_w:
        in_specs.append(pl.BlockSpec((1,) + w.shape[1:], lambda p: (p, 0, 0)))

    return pl.pallas_call(
        kernel,
        out_shape=jax.ShapeDtypeStruct((NB, B, 2 * H), jnp.float32),
        grid=(NB,),
        in_specs=in_specs,
        out_specs=pl.BlockSpec((1, B, 2 * H), lambda p: (p, 0, 0)),
        scratch_shapes=[pltpu.VMEM((T * B, 2 * H), jnp.float32)
                        for _ in range(n_scratch)],
        compiler_params=pltpu.CompilerParams(
            dimension_semantics=("parallel",)),   # branch axis -> 2 TCs on v7x
    )(x_all, msk_all, *flat_w)


# ----------------------------------------------------------------------------
# parameter init (PyTorch i,f,g,o gate layout) + full forward wrapper
# ----------------------------------------------------------------------------
def init_lstm_params(key, n_layers, input_dim, hidden):
    """Per layer, per direction: (w_ih (D_in,4H), w_hh (H,4H), b (1,4H));
    gate blocks ordered [i, f, g, o] like PyTorch; b = b_ih + b_hh."""
    layers = []
    for l in range(n_layers):
        d_in = input_dim if l == 0 else 2 * hidden
        dirs = []
        for _ in range(2):  # forward, backward
            key, k1, k2, k3, k4 = jax.random.split(key, 5)
            w_ih = 0.1 * jax.random.normal(k1, (d_in, 4 * hidden), jnp.float32)
            w_hh = 0.1 * jax.random.normal(k2, (hidden, 4 * hidden), jnp.float32)
            b_ih = 0.1 * jax.random.normal(k3, (1, 4 * hidden), jnp.float32)
            b_hh = 0.1 * jax.random.normal(k4, (1, 4 * hidden), jnp.float32)
            dirs.append((w_ih, w_hh, b_ih + b_hh))
        layers.append(tuple(dirs))
    return layers


def model_forward(qus, ans, qus_len, ans_len, word_emb, tfidf,
                  params_q, params_a, evaluation_mode=False):
    B, Tq = qus.shape
    Ta = ans.shape[1]
    T = max(Tq, Ta)
    D = word_emb.shape[1]
    H = params_q[0][0][1].shape[0]
    n_layers = len(params_q)

    def embed(tok):
        return jnp.take(word_emb, tok, axis=0) * jnp.take(tfidf, tok, axis=0)

    def prep_x(tok, t_len):
        x = embed(tok).astype(jnp.float32)                    # (B, Tt, D)
        x = jnp.pad(x, ((0, 0), (0, T - t_len), (0, 0)))      # (B, T, D)
        x = jnp.transpose(x, (1, 0, 2)).reshape(T * B, D)     # rows t*B:(t+1)*B = x_t
        return x.astype(jnp.bfloat16)

    def prep_mask(lens):
        lens = lens.astype(jnp.int32)
        t = jnp.arange(T, dtype=jnp.int32)
        m_f = t[:, None] < lens[None, :]                      # fwd run: time s
        m_b = (T - 1 - t)[:, None] < lens[None, :]            # bwd run: time T-1-s
        m = jnp.concatenate([m_f, m_b], axis=1).astype(jnp.float32)   # (T, 2B)
        m = m.reshape(T * 2 * B)
        return jnp.broadcast_to(m[:, None], (T * 2 * B, H))   # lane-dense mask

    def prep_weights(params):
        # per layer: w_ih_cat (D_in,8H) bf16, w_hh_cat (2H,4H) bf16, b_cat (1,8H) f32
        out = []
        for (fwd, bwd) in params:
            w_ih = jnp.concatenate([fwd[0], bwd[0]], axis=1).astype(jnp.bfloat16)
            w_hh = jnp.concatenate([fwd[1], bwd[1]], axis=0).astype(jnp.bfloat16)
            bias = jnp.concatenate([fwd[2], bwd[2]], axis=1).astype(jnp.float32)
            out.append((w_ih, w_hh, bias))
        return out

    branches = [(qus, Tq, qus_len, params_q)]
    if not evaluation_mode:                      # eval mode: skip the A branch
        branches.append((ans, Ta, ans_len, params_a))

    x_all = jnp.stack([prep_x(tok, tl) for (tok, tl, _, _) in branches])
    m_all = jnp.stack([prep_mask(lens) for (_, _, lens, _) in branches])
    w_per_branch = [prep_weights(p) for (_, _, _, p) in branches]
    flat_w = []
    for l in range(n_layers):
        for k in range(3):
            flat_w.append(jnp.stack([w[l][k] for w in w_per_branch]))

    sums = _branch_sums(x_all, m_all, flat_w, T=T, B=B, D=D, H=H,
                        n_layers=n_layers)                    # (NB, B, 2H)

    if evaluation_mode:
        return sums[0]

    sq, sa = sums[0], sums[1]
    # Tiny epilogue kept outside the kernel so the two branch grid steps stay
    # fully independent (v7x core-parallel).  Matches the module's raw
    # dot / (||q|| * ||a||) division (no eps clamp) followed by sigmoid.
    dot = jnp.sum(sq * sa, axis=-1, keepdims=True)
    denom = (jnp.sqrt(jnp.sum(sq * sq, axis=-1, keepdims=True)) *
             jnp.sqrt(jnp.sum(sa * sa, axis=-1, keepdims=True)))
    # TODO(synk): nn.LSTM inter-layer dropout (train-mode only) is omitted;
    # this reproduces the deterministic / eval forward semantics.
    return jax.nn.sigmoid(dot / denom)


if __name__ == "__main__":
    vocab_size = 50       # input_size
    embedding_size = 32
    hidden_size = 32
    n_layers = 2
    batch = 2
    Tq, Ta = 8, 10

    key = jax.random.PRNGKey(0)
    k_emb, k_tfidf, k_q, k_a, k_pq, k_pa = jax.random.split(key, 6)

    word_embedding_matrix = 0.1 * jax.random.normal(
        k_emb, (vocab_size, embedding_size), jnp.float32)
    tfidf_matrix = jax.random.uniform(k_tfidf, (vocab_size, 1), jnp.float32)

    qus = jax.random.randint(k_q, (batch, Tq), 0, vocab_size)
    ans = jax.random.randint(k_a, (batch, Ta), 0, vocab_size)
    # lengths sorted descending (pack_padded_sequence enforce_sorted=True)
    qus_len = jnp.array([Tq, Tq - 3], jnp.int32)
    ans_len = jnp.array([Ta, Ta - 3], jnp.int32)

    params_q = init_lstm_params(k_pq, n_layers, embedding_size, hidden_size)
    params_a = init_lstm_params(k_pa, n_layers, embedding_size, hidden_size)

    score = model_forward(qus, ans, qus_len, ans_len,
                          word_embedding_matrix, tfidf_matrix,
                          params_q, params_a, evaluation_mode=False)
    jax.block_until_ready(score)
    assert score.shape == (batch, 1)
    assert bool(jnp.all(jnp.isfinite(score)))

    sum_q = model_forward(qus, ans, qus_len, ans_len,
                          word_embedding_matrix, tfidf_matrix,
                          params_q, params_a, evaluation_mode=True)
    jax.block_until_ready(sum_q)
    assert sum_q.shape == (batch, 2 * hidden_size)
    assert bool(jnp.all(jnp.isfinite(sum_q)))

    print("KERNEL_OK")
</pallas_src>

<mosaic_0001>
module attributes {stable_mosaic.version = 11 : i64} {
  func.func @kernel(%arg0: i32, %arg1: memref<1x20x32xbf16, #tpu.memory_space<vmem>>, %arg2: memref<1x40x32xf32, #tpu.memory_space<vmem>>, %arg3: memref<1x32x256xbf16, #tpu.memory_space<vmem>>, %arg4: memref<1x64x128xbf16, #tpu.memory_space<vmem>>, %arg5: memref<1x1x256xf32, #tpu.memory_space<vmem>>, %arg6: memref<1x64x256xbf16, #tpu.memory_space<vmem>>, %arg7: memref<1x64x128xbf16, #tpu.memory_space<vmem>>, %arg8: memref<1x1x256xf32, #tpu.memory_space<vmem>>, %arg9: memref<1x2x64xf32, #tpu.memory_space<vmem>>, %arg10: memref<20x64xf32, #tpu.memory_space<vmem>>) attributes {dimension_semantics = [#tpu.dimension_semantics<parallel>], iteration_bounds = array<i64: 2>, scalar_prefetch = 0 : i64, scratch_operands = 1 : i64, tpu.core_type = #tpu.core_type<tc>, window_params = [{transform_indices = @transform_0, window_bounds = array<i64: 1, 20, 32>}, {transform_indices = @transform_1, window_bounds = array<i64: 1, 40, 32>}, {transform_indices = @transform_2, window_bounds = array<i64: 1, 32, 256>}, {transform_indices = @transform_3, window_bounds = array<i64: 1, 64, 128>}, {transform_indices = @transform_4, window_bounds = array<i64: 1, 1, 256>}, {transform_indices = @transform_5, window_bounds = array<i64: 1, 64, 256>}, {transform_indices = @transform_6, window_bounds = array<i64: 1, 64, 128>}, {transform_indices = @transform_7, window_bounds = array<i64: 1, 1, 256>}, {transform_indices = @transform_8, window_bounds = array<i64: 1, 2, 64>}]} {
    %0 = tpu.iota {dimensions = array<i32: 0>} : vector<4x64xi32>
    %1 = tpu.iota {dimensions = array<i32: 1>} : vector<4x64xi32>
    %c2_i32 = arith.constant 2 : i32
    %2 = vector.broadcast %c2_i32 : i32 to vector<4x64xi32>
    %3 = arith.cmpi slt, %0, %2 : vector<4x64xi32>
    %c32_i32 = arith.constant 32 : i32
    %4 = vector.broadcast %c32_i32 : i32 to vector<4x64xi32>
    %5 = arith.cmpi slt, %1, %4 : vector<4x64xi32>
    %6 = arith.xori %3, %5 : vector<4x64xi1>
    %cst = arith.constant dense<true> : vector<4x64xi1>
    %7 = arith.xori %6, %cst : vector<4x64xi1>
    %8 = arith.extui %7 : vector<4x64xi1> to vector<4x64xi32>
    %9 = arith.sitofp %8 : vector<4x64xi32> to vector<4x64xf32>
    %c0 = arith.constant 0 : index
    %c0_0 = arith.constant 0 : index
    %c0_1 = arith.constant 0 : index
    %10 = vector.load %arg3[%c0, %c0_0, %c0_1] : memref<1x32x256xbf16, #tpu.memory_space<vmem>>, vector<1x32x256xbf16>
    %11 = vector.shape_cast %10 : vector<1x32x256xbf16> to vector<32x256xbf16>
    %c0_2 = arith.constant 0 : index
    %c0_3 = arith.constant 0 : index
    %c0_4 = arith.constant 0 : index
    %12 = vector.load %arg4[%c0_2, %c0_3, %c0_4] : memref<1x64x128xbf16, #tpu.memory_space<vmem>>, vector<1x64x128xbf16>
    %13 = vector.shape_cast %12 : vector<1x64x128xbf16> to vector<64x128xbf16>
    %c0_5 = arith.constant 0 : index
    %c0_6 = arith.constant 0 : index
    %c0_7 = arith.constant 0 : index
    %14 = vector.load %arg5[%c0_5, %c0_6, %c0_7] : memref<1x1x256xf32, #tpu.memory_space<vmem>>, vector<1x1x256xf32>
    %15 = vector.shape_cast %14 : vector<1x1x256xf32> to vector<1x256xf32>
    %c0_8 = arith.constant 0 : index
    %c0_9 = arith.constant 0 : index
    %c0_10 = arith.constant 0 : index
    %16 = vector.load %arg1[%c0_8, %c0_9, %c0_10] : memref<1x20x32xbf16, #tpu.memory_space<vmem>>, vector<1x20x32xbf16>
    %17 = vector.shape_cast %16 : vector<1x20x32xbf16> to vector<20x32xbf16>
    %cst_11 = arith.constant dense<0.000000e+00> : vector<20x256xf32>
    %18 = tpu.matmul %17, %11, %cst_11 {dimension_numbers = #tpu.dot_dimension_numbers<[1], [0], [0], [1], [0, 0, 1, 1], [], []>} : vector<20x32xbf16>, vector<32x256xbf16>, vector<20x256xf32> -> vector<20x256xf32>
    %19 = vector.broadcast %15 : vector<1x256xf32> to vector<20x256xf32>
    %20 = arith.addf %18, %19 : vector<20x256xf32>
    %cst_12 = arith.constant 0.000000e+00 : f32
    %21 = vector.broadcast %cst_12 : f32 to vector<4x32xf32>
    %cst_13 = arith.constant 0.000000e+00 : f32
    %22 = vector.broadcast %cst_13 : f32 to vector<4x32xf32>
    %23 = vector.extract_strided_slice %20 {offsets = [0, 0], sizes = [2, 128], strides = [1, 1]} : vector<20x256xf32> to vector<2x128xf32>
    %24 = vector.extract_strided_slice %20 {offsets = [18, 128], sizes = [2, 128], strides = [1, 1]} : vector<20x256xf32> to vector<2x128xf32>
    %25 = tpu.concatenate %23, %24 in 0 : vector<2x128xf32>, vector<2x128xf32> -> vector<4x128xf32>
    %26 = tpu.concatenate %21, %21 in 1 : vector<4x32xf32>, vector<4x32xf32> -> vector<4x64xf32>
    %27 = arith.mulf %26, %9 : vector<4x64xf32>
    %28 = arith.truncf %27 : vector<4x64xf32> to vector<4x64xbf16>
    %cst_14 = arith.constant dense<0.000000e+00> : vector<4x128xf32>
    %29 = tpu.matmul %28, %13, %cst_14 {dimension_numbers = #tpu.dot_dimension_numbers<[1], [0], [0], [1], [0, 0, 1, 1], [], []>} : vector<4x64xbf16>, vector<64x128xbf16>, vector<4x128xf32> -> vector<4x128xf32>
    %30 = arith.addf %25, %29 : vector<4x128xf32>
    %31 = arith.negf %30 : vector<4x128xf32>
    %32 = math.exp %31 : vector<4x128xf32>
    %cst_15 = arith.constant 1.000000e+00 : f32
    %33 = vector.broadcast %cst_15 : f32 to vector<4x128xf32>
    %34 = arith.addf %33, %32 : vector<4x128xf32>
    %35 = arith.divf %33, %34 : vector<4x128xf32>
    %36 = math.tanh %30 : vector<4x128xf32>
    %37 = vector.extract_strided_slice %35 {offsets = [0, 0], sizes = [4, 32], strides = [1, 1]} : vector<4x128xf32> to vector<4x32xf32>
    %38 = vector.extract_strided_slice %35 {offsets = [0, 32], sizes = [4, 32], strides = [1, 1]} : vector<4x128xf32> to vector<4x32xf32>
    %39 = vector.extract_strided_slice %36 {offsets = [0, 64], sizes = [4, 32], strides = [1, 1]} : vector<4x128xf32> to vector<4x32xf32>
    %40 = vector.extract_strided_slice %35 {offsets = [0, 96], sizes = [4, 32], strides = [1, 1]} : vector<4x128xf32> to vector<4x32xf32>
    %41 = arith.mulf %38, %22 : vector<4x32xf32>
    %42 = arith.mulf %37, %39 : vector<4x32xf32>
    %43 = arith.addf %41, %42 : vector<4x32xf32>
    %44 = math.tanh %43 : vector<4x32xf32>
    %45 = arith.mulf %40, %44 : vector<4x32xf32>
    %c0_16 = arith.constant 0 : index
    %c0_17 = arith.constant 0 : index
    %c0_18 = arith.constant 0 : index
    %46 = vector.load %arg2[%c0_16, %c0_17, %c0_18] : memref<1x40x32xf32, #tpu.memory_space<vmem>>, vector<1x4x32xf32>
    %47 = vector.shape_cast %46 : vector<1x4x32xf32> to vector<4x32xf32>
    %48 = arith.mulf %47, %45 : vector<4x32xf32>
    %cst_19 = arith.constant 1.000000e+00 : f32
    %49 = vector.broadcast %cst_19 : f32 to vector<4x32xf32>
    %50 = arith.subf %49, %47 : vector<4x32xf32>
    %51 = arith.mulf %50, %21 : vector<4x32xf32>
    %52 = arith.addf %48, %51 : vector<4x32xf32>
    %53 = arith.mulf %47, %43 : vector<4x32xf32>
    %cst_20 = arith.constant 1.000000e+00 : f32
    %54 = vector.broadcast %cst_20 : f32 to vector<4x32xf32>
    %55 = arith.subf %54, %47 : vector<4x32xf32>
    %56 = arith.mulf %55, %22 : vector<4x32xf32>
    %57 = arith.addf %53, %56 : vector<4x32xf32>
    %58 = vector.extract_strided_slice %48 {offsets = [0, 0], sizes = [2, 32], strides = [1, 1]} : vector<4x32xf32> to vector<2x32xf32>
    %c0_21 = arith.constant 0 : index
    %c0_22 = arith.constant 0 : index
    %59 = vector.load %arg10[%c0_21, %c0_22] : memref<20x64xf32, #tpu.memory_space<vmem>>, vector<2x32xf32>
    tpu.vector_store %arg10[%c0_21, %c0_22], %58 {strides = array<i32>} : memref<20x64xf32, #tpu.memory_space<vmem>>, vector<2x32xf32>,
    %60 = vector.extract_strided_slice %48 {offsets = [2, 0], sizes = [2, 32], strides = [1, 1]} : vector<4x32xf32> to vector<2x32xf32>
    %c18 = arith.constant 18 : index
    %c32 = arith.constant 32 : index
    %61 = vector.load %arg10[%c18, %c32] : memref<20x64xf32, #tpu.memory_space<vmem>>, vector<2x32xf32>
    tpu.vector_store %arg10[%c18, %c32], %60 {strides = array<i32>} : memref<20x64xf32, #tpu.memory_space<vmem>>, vector<2x32xf32>,
    %62 = vector.extract_strided_slice %20 {offsets = [2, 0], sizes = [2, 128], strides = [1, 1]} : vector<20x256xf32> to vector<2x128xf32>
    %63 = vector.extract_strided_slice %20 {offsets = [16, 128], sizes = [2, 128], strides = [1, 1]} : vector<20x256xf32> to vector<2x128xf32>
    %64 = tpu.concatenate %62, %63 in 0 : vector<2x128xf32>, vector<2x128xf32> -> vector<4x128xf32>
    %65 = tpu.concatenate %52, %52 in 1 : vector<4x32xf32>, vector<4x32xf32> -> vector<4x64xf32>
    %66 = arith.mulf %65, %9 : vector<4x64xf32>
    %67 = arith.truncf %66 : vector<4x64xf32> to vector<4x64xbf16>
    %cst_23 = arith.constant dense<0.000000e+00> : vector<4x128xf32>
    %68 = tpu.matmul %67, %13, %cst_23 {dimension_numbers = #tpu.dot_dimension_numbers<[1], [0], [0], [1], [0, 0, 1, 1], [], []>} : vector<4x64xbf16>, vector<64x128xbf16>, vector<4x128xf32> -> vector<4x128xf32>
    %69 = arith.addf %64, %68 : vector<4x128xf32>
    %70 = arith.negf %69 : vector<4x128xf32>
    %71 = math.exp %70 : vector<4x128xf32>
    %cst_24 = arith.constant 1.000000e+00 : f32
    %72 = vector.broadcast %cst_24 : f32 to vector<4x128xf32>
    %73 = arith.addf %72, %71 : vector<4x128xf32>
    %74 = arith.divf %72, %73 : vector<4x128xf32>
    %75 = math.tanh %69 : vector<4x128xf32>
    %76 = vector.extract_strided_slice %74 {offsets = [0, 0], sizes = [4, 32], strides = [1, 1]} : vector<4x128xf32> to vector<4x32xf32>
    %77 = vector.extract_strided_slice %74 {offsets = [0, 32], sizes = [4, 32], strides = [1, 1]} : vector<4x128xf32> to vector<4x32xf32>
    %78 = vector.extract_strided_slice %75 {offsets = [0, 64], sizes = [4, 32], strides = [1, 1]} : vector<4x128xf32> to vector<4x32xf32>
    %79 = vector.extract_strided_slice %74 {offsets = [0, 96], sizes = [4, 32], strides = [1, 1]} : vector<4x128xf32> to vector<4x32xf32>
    %80 = arith.mulf %77, %57 : vector<4x32xf32>
    %81 = arith.mulf %76, %78 : vector<4x32xf32>
    %82 = arith.addf %80, %81 : vector<4x32xf32>
    %83 = math.tanh %82 : vector<4x32xf32>
    %84 = arith.mulf %79, %83 : vector<4x32xf32>
    %c0_25 = arith.constant 0 : index
    %c4 = arith.constant 4 : index
    %c0_26 = arith.constant 0 : index
    %85 = vector.load %arg2[%c0_25, %c4, %c0_26] : memref<1x40x32xf32, #tpu.memory_space<vmem>>, vector<1x4x32xf32>
    %86 = vector.shape_cast %85 : vector<1x4x32xf32> to vector<4x32xf32>
    %87 = arith.mulf %86, %84 : vector<4x32xf32>
    %cst_27 = arith.constant 1.000000e+00 : f32
    %88 = vector.broadcast %cst_27 : f32 to vector<4x32xf32>
    %89 = arith.subf %88, %86 : vector<4x32xf32>
    %90 = arith.mulf %89, %52 : vector<4x32xf32>
    %91 = arith.addf %87, %90 : vector<4x32xf32>
    %92 = arith.mulf %86, %82 : vector<4x32xf32>
    %cst_28 = arith.constant 1.000000e+00 : f32
    %93 = vector.broadcast %cst_28 : f32 to vector<4x32xf32>
    %94 = arith.subf %93, %86 : vector<4x32xf32>
    %95 = arith.mulf %94, %57 : vector<4x32xf32>
    %96 = arith.addf %92, %95 : vector<4x32xf32>
    %97 = vector.extract_strided_slice %87 {offsets = [0, 0], sizes = [2, 32], strides = [1, 1]} : vector<4x32xf32> to vector<2x32xf32>
    %c2 = arith.constant 2 : index
    %c0_29 = arith.constant 0 : index
    %98 = vector.load %arg10[%c2, %c0_29] : memref<20x64xf32, #tpu.memory_space<vmem>>, vector<2x32xf32>
    tpu.vector_store %arg10[%c2, %c0_29], %97 {strides = array<i32>} : memref<20x64xf32, #tpu.memory_space<vmem>>, vector<2x32xf32>,
    %99 = vector.extract_strided_slice %87 {offsets = [2, 0], sizes = [2, 32], strides = [1, 1]} : vector<4x32xf32> to vector<2x32xf32>
    %c16 = arith.constant 16 : index
    %c32_30 = arith.constant 32 : index
    %100 = vector.load %arg10[%c16, %c32_30] : memref<20x64xf32, #tpu.memory_space<vmem>>, vector<2x32xf32>
    tpu.vector_store %arg10[%c16, %c32_30], %99 {strides = array<i32>} : memref<20x64xf32, #tpu.memory_space<vmem>>, vector<2x32xf32>,
    %101 = vector.extract_strided_slice %20 {offsets = [4, 0], sizes = [2, 128], strides = [1, 1]} : vector<20x256xf32> to vector<2x128xf32>
    %102 = vector.extract_strided_slice %20 {offsets = [14, 128], sizes = [2, 128], strides = [1, 1]} : vector<20x256xf32> to vector<2x128xf32>
    %103 = tpu.concatenate %101, %102 in 0 : vector<2x128xf32>, vector<2x128xf32> -> vector<4x128xf32>
    %104 = tpu.concatenate %91, %91 in 1 : vector<4x32xf32>, vector<4x32xf32> -> vector<4x64xf32>
    %105 = arith.mulf %104, %9 : vector<4x64xf32>
    %106 = arith.truncf %105 : vector<4x64xf32> to vector<4x64xbf16>
    %cst_31 = arith.constant dense<0.000000e+00> : vector<4x128xf32>
    %107 = tpu.matmul %106, %13, %cst_31 {dimension_numbers = #tpu.dot_dimension_numbers<[1], [0], [0], [1], [0, 0, 1, 1], [], []>} : vector<4x64xbf16>, vector<64x128xbf16>, vector<4x128xf32> -> vector<4x128xf32>
    %108 = arith.addf %103, %107 : vector<4x128xf32>
    %109 = arith.negf %108 : vector<4x128xf32>
    %110 = math.exp %109 : vector<4x128xf32>
    %cst_32 = arith.constant 1.000000e+00 : f32
    %111 = vector.broadcast %cst_32 : f32 to vector<4x128xf32>
    %112 = arith.addf %111, %110 : vector<4x128xf32>
    %113 = arith.divf %111, %112 : vector<4x128xf32>
    %114 = math.tanh %108 : vector<4x128xf32>
    %115 = vector.extract_strided_slice %113 {offsets = [0, 0], sizes = [4, 32], strides = [1, 1]} : vector<4x128xf32> to vector<4x32xf32>
    %116 = vector.extract_strided_slice %113 {offsets = [0, 32], sizes = [4, 32], strides = [1, 1]} : vector<4x128xf32> to vector<4x32xf32>
    %117 = vector.extract_strided_slice %114 {offsets = [0, 64], sizes = [4, 32], strides = [1, 1]} : vector<4x128xf32> to vector<4x32xf32>
    %118 = vector.extract_strided_slice %113 {offsets = [0, 96], sizes = [4, 32], strides = [1, 1]} : vector<4x128xf32> to vector<4x32xf32>
    %119 = arith.mulf %116, %96 : vector<4x32xf32>
    %120 = arith.mulf %115, %117 : vector<4x32xf32>
    %121 = arith.addf %119, %120 : vector<4x32xf32>
    %122 = math.tanh %121 : vector<4x32xf32>
    %123 = arith.mulf %118, %122 : vector<4x32xf32>
    %c0_33 = arith.constant 0 : index
    %c8 = arith.constant 8 : index
    %c0_34 = arith.constant 0 : index
    %124 = vector.load %arg2[%c0_33, %c8, %c0_34] : memref<1x40x32xf32, #tpu.memory_space<vmem>>, vector<1x4x32xf32>
    %125 = vector.shape_cast %124 : vector<1x4x32xf32> to vector<4x32xf32>
    %126 = arith.mulf %125, %123 : vector<4x32xf32>
    %cst_35 = arith.constant 1.000000e+00 : f32
    %127 = vector.broadcast %cst_35 : f32 to vector<4x32xf32>
    %128 = arith.subf %127, %125 : vector<4x32xf32>
    %129 = arith.mulf %128, %91 : vector<4x32xf32>
    %130 = arith.addf %126, %129 : vector<4x32xf32>
    %131 = arith.mulf %125, %121 : vector<4x32xf32>
    %cst_36 = arith.constant 1.000000e+00 : f32
    %132 = vector.broadcast %cst_36 : f32 to vector<4x32xf32>
    %133 = arith.subf %132, %125 : vector<4x32xf32>
    %134 = arith.mulf %133, %96 : vector<4x32xf32>
    %135 = arith.addf %131, %134 : vector<4x32xf32>
    %136 = vector.extract_strided_slice %126 {offsets = [0, 0], sizes = [2, 32], strides = [1, 1]} : vector<4x32xf32> to vector<2x32xf32>
    %c4_37 = arith.constant 4 : index
    %c0_38 = arith.constant 0 : index
    %137 = vector.load %arg10[%c4_37, %c0_38] : memref<20x64xf32, #tpu.memory_space<vmem>>, vector<2x32xf32>
    tpu.vector_store %arg10[%c4_37, %c0_38], %136 {strides = array<i32>} : memref<20x64xf32, #tpu.memory_space<vmem>>, vector<2x32xf32>,
    %138 = vector.extract_strided_slice %126 {offsets = [2, 0], sizes = [2, 32], strides = [1, 1]} : vector<4x32xf32> to vector<2x32xf32>
    %c14 = arith.constant 14 : index
    %c32_39 = arith.constant 32 : index
    %139 = vector.load %arg10[%c14, %c32_39] : memref<20x64xf32, #tpu.memory_space<vmem>>, vector<2x32xf32>
    tpu.vector_store %arg10[%c14, %c32_39], %138 {strides = array<i32>} : memref<20x64xf32, #tpu.memory_space<vmem>>, vector<2x32xf32>,
    %140 = vector.extract_strided_slice %20 {offsets = [6, 0], sizes = [2, 128], strides = [1, 1]} : vector<20x256xf32> to vector<2x128xf32>
    %141 = vector.extract_strided_slice %20 {offsets = [12, 128], sizes = [2, 128], strides = [1, 1]} : vector<20x256xf32> to vector<2x128xf32>
    %142 = tpu.concatenate %140, %141 in 0 : vector<2x128xf32>, vector<2x128xf32> -> vector<4x128xf32>
    %143 = tpu.concatenate %130, %130 in 1 : vector<4x32xf32>, vector<4x32xf32> -> vector<4x64xf32>
    %144 = arith.mulf %143, %9 : vector<4x64xf32>
    %145 = arith.truncf %144 : vector<4x64xf32> to vector<4x64xbf16>
    %cst_40 = arith.constant dense<0.000000e+00> : vector<4x128xf32>
    %146 = tpu.matmul %145, %13, %cst_40 {dimension_numbers = #tpu.dot_dimension_numbers<[1], [0], [0], [1], [0, 0, 1, 1], [], []>} : vector<4x64xbf16>, vector<64x128xbf16>, vector<4x128xf32> -> vector<4x128xf32>
    %147 = arith.addf %142, %146 : vector<4x128xf32>
    %148 = arith.negf %147 : vector<4x128xf32>
    %149 = math.exp %148 : vector<4x128xf32>
    %cst_41 = arith.constant 1.000000e+00 : f32
    %150 = vector.broadcast %cst_41 : f32 to vector<4x128xf32>
    %151 = arith.addf %150, %149 : vector<4x128xf32>
    %152 = arith.divf %150, %151 : vector<4x128xf32>
    %153 = math.tanh %147 : vector<4x128xf32>
    %154 = vector.extract_strided_slice %152 {offsets = [0, 0], sizes = [4, 32], strides = [1, 1]} : vector<4x128xf32> to vector<4x32xf32>
    %155 = vector.extract_strided_slice %152 {offsets = [0, 32], sizes = [4, 32], strides = [1, 1]} : vector<4x128xf32> to vector<4x32xf32>
    %156 = vector.extract_strided_slice %153 {offsets = [0, 64], sizes = [4, 32], strides = [1, 1]} : vector<4x128xf32> to vector<4x32xf32>
    %157 = vector.extract_strided_slice %152 {offsets = [0, 96], sizes = [4, 32], strides = [1, 1]} : vector<4x128xf32> to vector<4x32xf32>
    %158 = arith.mulf %155, %135 : vector<4x32xf32>
    %159 = arith.mulf %154, %156 : vector<4x32xf32>
    %160 = arith.addf %158, %159 : vector<4x32xf32>
    %161 = math.tanh %160 : vector<4x32xf32>
    %162 = arith.mulf %157, %161 : vector<4x32xf32>
    %c0_42 = arith.constant 0 : index
    %c12 = arith.constant 12 : index
    %c0_43 = arith.constant 0 : index
    %163 = vector.load %arg2[%c0_42, %c12, %c0_43] : memref<1x40x32xf32, #tpu.memory_space<vmem>>, vector<1x4x32xf32>
    %164 = vector.shape_cast %163 : vector<1x4x32xf32> to vector<4x32xf32>
    %165 = arith.mulf %164, %162 : vector<4x32xf32>
    %cst_44 = arith.constant 1.000000e+00 : f32
    %166 = vector.broadcast %cst_44 : f32 to vector<4x32xf32>
    %167 = arith.subf %166, %164 : vector<4x32xf32>
    %168 = arith.mulf %167, %130 : vector<4x32xf32>
    %169 = arith.addf %165, %168 : vector<4x32xf32>
    %170 = arith.mulf %164, %160 : vector<4x32xf32>
    %cst_45 = arith.constant 1.000000e+00 : f32
    %171 = vector.broadcast %cst_45 : f32 to vector<4x32xf32>
    %172 = arith.subf %171, %164 : vector<4x32xf32>
    %173 = arith.mulf %172, %135 : vector<4x32xf32>
    %174 = arith.addf %170, %173 : vector<4x32xf32>
    %175 = vector.extract_strided_slice %165 {offsets = [0, 0], sizes = [2, 32], strides = [1, 1]} : vector<4x32xf32> to vector<2x32xf32>
    %c6 = arith.constant 6 : index
    %c0_46 = arith.constant 0 : index
    %176 = vector.load %arg10[%c6, %c0_46] : memref<20x64xf32, #tpu.memory_space<vmem>>, vector<2x32xf32>
    tpu.vector_store %arg10[%c6, %c0_46], %175 {strides = array<i32>} : memref<20x64xf32, #tpu.memory_space<vmem>>, vector<2x32xf32>,
    %177 = vector.extract_strided_slice %165 {offsets = [2, 0], sizes = [2, 32], strides = [1, 1]} : vector<4x32xf32> to vector<2x32xf32>
    %c12_47 = arith.constant 12 : index
    %c32_48 = arith.constant 32 : index
    %178 = vector.load %arg10[%c12_47, %c32_48] : memref<20x64xf32, #tpu.memory_space<vmem>>, vector<2x32xf32>
    tpu.vector_store %arg10[%c12_47, %c32_48], %177 {strides = array<i32>} : memref<20x64xf32, #tpu.memory_space<vmem>>, vector<2x32xf32>,
    %179 = vector.extract_strided_slice %20 {offsets = [8, 0], sizes = [2, 128], strides = [1, 1]} : vector<20x256xf32> to vector<2x128xf32>
    %180 = vector.extract_strided_slice %20 {offsets = [10, 128], sizes = [2, 128], strides = [1, 1]} : vector<20x256xf32> to vector<2x128xf32>
    %181 = tpu.concatenate %179, %180 in 0 : vector<2x128xf32>, vector<2x128xf32> -> vector<4x128xf32>
    %182 = tpu.concatenate %169, %169 in 1 : vector<4x32xf32>, vector<4x32xf32> -> vector<4x64xf32>
    %183 = arith.mulf %182, %9 : vector<4x64xf32>
    %184 = arith.truncf %183 : vector<4x64xf32> to vector<4x64xbf16>
    %cst_49 = arith.constant dense<0.000000e+00> : vector<4x128xf32>
    %185 = tpu.matmul %184, %13, %cst_49 {dimension_numbers = #tpu.dot_dimension_numbers<[1], [0], [0], [1], [0, 0, 1, 1], [], []>} : vector<4x64xbf16>, vector<64x128xbf16>, vector<4x128xf32> -> vector<4x128xf32>
    %186 = arith.addf %181, %185 : vector<4x128xf32>
    %187 = arith.negf %186 : vector<4x128xf32>
    %188 = math.exp %187 : vector<4x128xf32>
    %cst_50 = arith.constant 1.000000e+00 : f32
    %189 = vector.broadcast %cst_50 : f32 to vector<4x128xf32>
    %190 = arith.addf %189, %188 : vector<4x128xf32>
    %191 = arith.divf %189, %190 : vector<4x128xf32>
    %192 = math.tanh %186 : vector<4x128xf32>
    %193 = vector.extract_strided_slice %191 {offsets = [0, 0], sizes = [4, 32], strides = [1, 1]} : vector<4x128xf32> to vector<4x32xf32>
    %194 = vector.extract_strided_slice %191 {offsets = [0, 32], sizes = [4, 32], strides = [1, 1]} : vector<4x128xf32> to vector<4x32xf32>
    %195 = vector.extract_strided_slice %192 {offsets = [0, 64], sizes = [4, 32], strides = [1, 1]} : vector<4x128xf32> to vector<4x32xf32>
    %196 = vector.extract_strided_slice %191 {offsets = [0, 96], sizes = [4, 32], strides = [1, 1]} : vector<4x128xf32> to vector<4x32xf32>
    %197 = arith.mulf %194, %174 : vector<4x32xf32>
    %198 = arith.mulf %193, %195 : vector<4x32xf32>
    %199 = arith.addf %197, %198 : vector<4x32xf32>
    %200 = math.tanh %199 : vector<4x32xf32>
    %201 = arith.mulf %196, %200 : vector<4x32xf32>
    %c0_51 = arith.constant 0 : index
    %c16_52 = arith.constant 16 : index
    %c0_53 = arith.constant 0 : index
    %202 = vector.load %arg2[%c0_51, %c16_52, %c0_53] : memref<1x40x32xf32, #tpu.memory_space<vmem>>, vector<1x4x32xf32>
    %203 = vector.shape_cast %202 : vector<1x4x32xf32> to vector<4x32xf32>
    %204 = arith.mulf %203, %201 : vector<4x32xf32>
    %cst_54 = arith.constant 1.000000e+00 : f32
    %205 = vector.broadcast %cst_54 : f32 to vector<4x32xf32>
    %206 = arith.subf %205, %203 : vector<4x32xf32>
    %207 = arith.mulf %206, %169 : vector<4x32xf32>
    %208 = arith.addf %204, %207 : vector<4x32xf32>
    %209 = arith.mulf %203, %199 : vector<4x32xf32>
    %cst_55 = arith.constant 1.000000e+00 : f32
    %210 = vector.broadcast %cst_55 : f32 to vector<4x32xf32>
    %211 = arith.subf %210, %203 : vector<4x32xf32>
    %212 = arith.mulf %211, %174 : vector<4x32xf32>
    %213 = arith.addf %209, %212 : vector<4x32xf32>
    %214 = vector.extract_strided_slice %204 {offsets = [0, 0], sizes = [2, 32], strides = [1, 1]} : vector<4x32xf32> to vector<2x32xf32>
    %c8_56 = arith.constant 8 : index
    %c0_57 = arith.constant 0 : index
    %215 = vector.load %arg10[%c8_56, %c0_57] : memref<20x64xf32, #tpu.memory_space<vmem>>, vector<2x32xf32>
    tpu.vector_store %arg10[%c8_56, %c0_57], %214 {strides = array<i32>} : memref<20x64xf32, #tpu.memory_space<vmem>>, vector<2x32xf32>,
    %216 = vector.extract_strided_slice %204 {offsets = [2, 0], sizes = [2, 32], strides = [1, 1]} : vector<4x32xf32> to vector<2x32xf32>
    %c10 = arith.constant 10 : index
    %c32_58 = arith.constant 32 : index
    %217 = vector.load %arg10[%c10, %c32_58] : memref<20x64xf32, #tpu.memory_space<vmem>>, vector<2x32xf32>
    tpu.vector_store %arg10[%c10, %c32_58], %216 {strides = array<i32>} : memref<20x64xf32, #tpu.memory_space<vmem>>, vector<2x32xf32>,
    %218 = vector.extract_strided_slice %20 {offsets = [10, 0], sizes = [2, 128], strides = [1, 1]} : vector<20x256xf32> to vector<2x128xf32>
    %219 = vector.extract_strided_slice %20 {offsets = [8, 128], sizes = [2, 128], strides = [1, 1]} : vector<20x256xf32> to vector<2x128xf32>
    %220 = tpu.concatenate %218, %219 in 0 : vector<2x128xf32>, vector<2x128xf32> -> vector<4x128xf32>
    %221 = tpu.concatenate %208, %208 in 1 : vector<4x32xf32>, vector<4x32xf32> -> vector<4x64xf32>
    %222 = arith.mulf %221, %9 : vector<4x64xf32>
    %223 = arith.truncf %222 : vector<4x64xf32> to vector<4x64xbf16>
    %cst_59 = arith.constant dense<0.000000e+00> : vector<4x128xf32>
    %224 = tpu.matmul %223, %13, %cst_59 {dimension_numbers = #tpu.dot_dimension_numbers<[1], [0], [0], [1], [0, 0, 1, 1], [], []>} : vector<4x64xbf16>, vector<64x128xbf16>, vector<4x128xf32> -> vector<4x128xf32>
    %225 = arith.addf %220, %224 : vector<4x128xf32>
    %226 = arith.negf %225 : vector<4x128xf32>
    %227 = math.exp %226 : vector<4x128xf32>
    %cst_60 = arith.constant 1.000000e+00 : f32
    %228 = vector.broadcast %cst_60 : f32 to vector<4x128xf32>
    %229 = arith.addf %228, %227 : vector<4x128xf32>
    %230 = arith.divf %228, %229 : vector<4x128xf32>
    %231 = math.tanh %225 : vector<4x128xf32>
    %232 = vector.extract_strided_slice %230 {offsets = [0, 0], sizes = [4, 32], strides = [1, 1]} : vector<4x128xf32> to vector<4x32xf32>
    %233 = vector.extract_strided_slice %230 {offsets = [0, 32], sizes = [4, 32], strides = [1, 1]} : vector<4x128xf32> to vector<4x32xf32>
    %234 = vector.extract_strided_slice %231 {offsets = [0, 64], sizes = [4, 32], strides = [1, 1]} : vector<4x128xf32> to vector<4x32xf32>
    %235 = vector.extract_strided_slice %230 {offsets = [0, 96], sizes = [4, 32], strides = [1, 1]} : vector<4x128xf32> to vector<4x32xf32>
    %236 = arith.mulf %233, %213 : vector<4x32xf32>
    %237 = arith.mulf %232, %234 : vector<4x32xf32>
    %238 = arith.addf %236, %237 : vector<4x32xf32>
    %239 = math.tanh %238 : vector<4x32xf32>
    %240 = arith.mulf %235, %239 : vector<4x32xf32>
    %c0_61 = arith.constant 0 : index
    %c20 = arith.constant 20 : index
    %c0_62 = arith.constant 0 : index
    %241 = vector.load %arg2[%c0_61, %c20, %c0_62] : memref<1x40x32xf32, #tpu.memory_space<vmem>>, vector<1x4x32xf32>
    %242 = vector.shape_cast %241 : vector<1x4x32xf32> to vector<4x32xf32>
    %243 = arith.mulf %242, %240 : vector<4x32xf32>
    %cst_63 = arith.constant 1.000000e+00 : f32
    %244 = vector.broadcast %cst_63 : f32 to vector<4x32xf32>
    %245 = arith.subf %244, %242 : vector<4x32xf32>
    %246 = arith.mulf %245, %208 : vector<4x32xf32>
    %247 = arith.addf %243, %246 : vector<4x32xf32>
    %248 = arith.mulf %242, %238 : vector<4x32xf32>
    %cst_64 = arith.constant 1.000000e+00 : f32
    %249 = vector.broadcast %cst_64 : f32 to vector<4x32xf32>
    %250 = arith.subf %249, %242 : vector<4x32xf32>
    %251 = arith.mulf %250, %213 : vector<4x32xf32>
    %252 = arith.addf %248, %251 : vector<4x32xf32>
    %253 = vector.extract_strided_slice %243 {offsets = [0, 0], sizes = [2, 32], strides = [1, 1]} : vector<4x32xf32> to vector<2x32xf32>
    %c10_65 = arith.constant 10 : index
    %c0_66 = arith.constant 0 : index
    %254 = vector.load %arg10[%c10_65, %c0_66] : memref<20x64xf32, #tpu.memory_space<vmem>>, vector<2x32xf32>
    tpu.vector_store %arg10[%c10_65, %c0_66], %253 {strides = array<i32>} : memref<20x64xf32, #tpu.memory_space<vmem>>, vector<2x32xf32>,
    %255 = vector.extract_strided_slice %243 {offsets = [2, 0], sizes = [2, 32], strides = [1, 1]} : vector<4x32xf32> to vector<2x32xf32>
    %c8_67 = arith.constant 8 : index
    %c32_68 = arith.constant 32 : index
    %256 = vector.load %arg10[%c8_67, %c32_68] : memref<20x64xf32, #tpu.memory_space<vmem>>, vector<2x32xf32>
    tpu.vector_store %arg10[%c8_67, %c32_68], %255 {strides = array<i32>} : memref<20x64xf32, #tpu.memory_space<vmem>>, vector<2x32xf32>,
    %257 = vector.extract_strided_slice %20 {offsets = [12, 0], sizes = [2, 128], strides = [1, 1]} : vector<20x256xf32> to vector<2x128xf32>
    %258 = vector.extract_strided_slice %20 {offsets = [6, 128], sizes = [2, 128], strides = [1, 1]} : vector<20x256xf32> to vector<2x128xf32>
    %259 = tpu.concatenate %257, %258 in 0 : vector<2x128xf32>, vector<2x128xf32> -> vector<4x128xf32>
    %260 = tpu.concatenate %247, %247 in 1 : vector<4x32xf32>, vector<4x32xf32> -> vector<4x64xf32>
    %261 = arith.mulf %260, %9 : vector<4x64xf32>
    %262 = arith.truncf %261 : vector<4x64xf32> to vector<4x64xbf16>
    %cst_69 = arith.constant dense<0.000000e+00> : vector<4x128xf32>
    %263 = tpu.matmul %262, %13, %cst_69 {dimension_numbers = #tpu.dot_dimension_numbers<[1], [0], [0], [1], [0, 0, 1, 1], [], []>} : vector<4x64xbf16>, vector<64x128xbf16>, vector<4x128xf32> -> vector<4x128xf32>
    %264 = arith.addf %259, %263 : vector<4x128xf32>
    %265 = arith.negf %264 : vector<4x128xf32>
    %266 = math.exp %265 : vector<4x128xf32>
    %cst_70 = arith.constant 1.000000e+00 : f32
    %267 = vector.broadcast %cst_70 : f32 to vector<4x128xf32>
    %268 = arith.addf %267, %266 : vector<4x128xf32>
    %269 = arith.divf %267, %268 : vector<4x128xf32>
    %270 = math.tanh %264 : vector<4x128xf32>
    %271 = vector.extract_strided_slice %269 {offsets = [0, 0], sizes = [4, 32], strides = [1, 1]} : vector<4x128xf32> to vector<4x32xf32>
    %272 = vector.extract_strided_slice %269 {offsets = [0, 32], sizes = [4, 32], strides = [1, 1]} : vector<4x128xf32> to vector<4x32xf32>
    %273 = vector.extract_strided_slice %270 {offsets = [0, 64], sizes = [4, 32], strides = [1, 1]} : vector<4x128xf32> to vector<4x32xf32>
    %274 = vector.extract_strided_slice %269 {offsets = [0, 96], sizes = [4, 32], strides = [1, 1]} : vector<4x128xf32> to vector<4x32xf32>
    %275 = arith.mulf %272, %252 : vector<4x32xf32>
    %276 = arith.mulf %271, %273 : vector<4x32xf32>
    %277 = arith.addf %275, %276 : vector<4x32xf32>
    %278 = math.tanh %277 : vector<4x32xf32>
    %279 = arith.mulf %274, %278 : vector<4x32xf32>
    %c0_71 = arith.constant 0 : index
    %c24 = arith.constant 24 : index
    %c0_72 = arith.constant 0 : index
    %280 = vector.load %arg2[%c0_71, %c24, %c0_72] : memref<1x40x32xf32, #tpu.memory_space<vmem>>, vector<1x4x32xf32>
    %281 = vector.shape_cast %280 : vector<1x4x32xf32> to vector<4x32xf32>
    %282 = arith.mulf %281, %279 : vector<4x32xf32>
    %cst_73 = arith.constant 1.000000e+00 : f32
    %283 = vector.broadcast %cst_73 : f32 to vector<4x32xf32>
    %284 = arith.subf %283, %281 : vector<4x32xf32>
    %285 = arith.mulf %284, %247 : vector<4x32xf32>
    %286 = arith.addf %282, %285 : vector<4x32xf32>
    %287 = arith.mulf %281, %277 : vector<4x32xf32>
    %cst_74 = arith.constant 1.000000e+00 : f32
    %288 = vector.broadcast %cst_74 : f32 to vector<4x32xf32>
    %289 = arith.subf %288, %281 : vector<4x32xf32>
    %290 = arith.mulf %289, %252 : vector<4x32xf32>
    %291 = arith.addf %287, %290 : vector<4x32xf32>
    %292 = vector.extract_strided_slice %282 {offsets = [0, 0], sizes = [2, 32], strides = [1, 1]} : vector<4x32xf32> to vector<2x32xf32>
    %c12_75 = arith.constant 12 : index
    %c0_76 = arith.constant 0 : index
    %293 = vector.load %arg10[%c12_75, %c0_76] : memref<20x64xf32, #tpu.memory_space<vmem>>, vector<2x32xf32>
    tpu.vector_store %arg10[%c12_75, %c0_76], %292 {strides = array<i32>} : memref<20x64xf32, #tpu.memory_space<vmem>>, vector<2x32xf32>,
    %294 = vector.extract_strided_slice %282 {offsets = [2, 0], sizes = [2, 32], strides = [1, 1]} : vector<4x32xf32> to vector<2x32xf32>
    %c6_77 = arith.constant 6 : index
    %c32_78 = arith.constant 32 : index
    %295 = vector.load %arg10[%c6_77, %c32_78] : memref<20x64xf32, #tpu.memory_space<vmem>>, vector<2x32xf32>
    tpu.vector_store %arg10[%c6_77, %c32_78], %294 {strides = array<i32>} : memref<20x64xf32, #tpu.memory_space<vmem>>, vector<2x32xf32>,
    %296 = vector.extract_strided_slice %20 {offsets = [14, 0], sizes = [2, 128], strides = [1, 1]} : vector<20x256xf32> to vector<2x128xf32>
    %297 = vector.extract_strided_slice %20 {offsets = [4, 128], sizes = [2, 128], strides = [1, 1]} : vector<20x256xf32> to vector<2x128xf32>
    %298 = tpu.concatenate %296, %297 in 0 : vector<2x128xf32>, vector<2x128xf32> -> vector<4x128xf32>
    %299 = tpu.concatenate %286, %286 in 1 : vector<4x32xf32>, vector<4x32xf32> -> vector<4x64xf32>
    %300 = arith.mulf %299, %9 : vector<4x64xf32>
    %301 = arith.truncf %300 : vector<4x64xf32> to vector<4x64xbf16>
    %cst_79 = arith.constant dense<0.000000e+00> : vector<4x128xf32>
    %302 = tpu.matmul %301, %13, %cst_79 {dimension_numbers = #tpu.dot_dimension_numbers<[1], [0], [0], [1], [0, 0, 1, 1], [], []>} : vector<4x64xbf16>, vector<64x128xbf16>, vector<4x128xf32> -> vector<4x128xf32>
    %303 = arith.addf %298, %302 : vector<4x128xf32>
    %304 = arith.negf %303 : vector<4x128xf32>
    %305 = math.exp %304 : vector<4x128xf32>
    %cst_80 = arith.constant 1.000000e+00 : f32
    %306 = vector.broadcast %cst_80 : f32 to vector<4x128xf32>
    %307 = arith.addf %306, %305 : vector<4x128xf32>
    %308 = arith.divf %306, %307 : vector<4x128xf32>
    %309 = math.tanh %303 : vector<4x128xf32>
    %310 = vector.extract_strided_slice %308 {offsets = [0, 0], sizes = [4, 32], strides = [1, 1]} : vector<4x128xf32> to vector<4x32xf32>
    %311 = vector.extract_strided_slice %308 {offsets = [0, 32], sizes = [4, 32], strides = [1, 1]} : vector<4x128xf32> to vector<4x32xf32>
    %312 = vector.extract_strided_slice %309 {offsets = [0, 64], sizes = [4, 32], strides = [1, 1]} : vector<4x128xf32> to vector<4x32xf32>
    %313 = vector.extract_strided_slice %308 {offsets = [0, 96], sizes = [4, 32], strides = [1, 1]} : vector<4x128xf32> to vector<4x32xf32>
    %314 = arith.mulf %311, %291 : vector<4x32xf32>
    %315 = arith.mulf %310, %312 : vector<4x32xf32>
    %316 = arith.addf %314, %315 : vector<4x32xf32>
    %317 = math.tanh %316 : vector<4x32xf32>
    %318 = arith.mulf %313, %317 : vector<4x32xf32>
    %c0_81 = arith.constant 0 : index
    %c28 = arith.constant 28 : index
    %c0_82 = arith.constant 0 : index
    %319 = vector.load %arg2[%c0_81, %c28, %c0_82] : memref<1x40x32xf32, #tpu.memory_space<vmem>>, vector<1x4x32xf32>
    %320 = vector.shape_cast %319 : vector<1x4x32xf32> to vector<4x32xf32>
    %321 = arith.mulf %320, %318 : vector<4x32xf32>
    %cst_83 = arith.constant 1.000000e+00 : f32
    %322 = vector.broadcast %cst_83 : f32 to vector<4x32xf32>
    %323 = arith.subf %322, %320 : vector<4x32xf32>
    %324 = arith.mulf %323, %286 : vector<4x32xf32>
    %325 = arith.addf %321, %324 : vector<4x32xf32>
    %326 = arith.mulf %320, %316 : vector<4x32xf32>
    %cst_84 = arith.constant 1.000000e+00 : f32
    %327 = vector.broadcast %cst_84 : f32 to vector<4x32xf32>
    %328 = arith.subf %327, %320 : vector<4x32xf32>
    %329 = arith.mulf %328, %291 : vector<4x32xf32>
    %330 = arith.addf %326, %329 : vector<4x32xf32>
    %331 = vector.extract_strided_slice %321 {offsets = [0, 0], sizes = [2, 32], strides = [1, 1]} : vector<4x32xf32> to vector<2x32xf32>
    %c14_85 = arith.constant 14 : index
    %c0_86 = arith.constant 0 : index
    %332 = vector.load %arg10[%c14_85, %c0_86] : memref<20x64xf32, #tpu.memory_space<vmem>>, vector<2x32xf32>
    tpu.vector_store %arg10[%c14_85, %c0_86], %331 {strides = array<i32>} : memref<20x64xf32, #tpu.memory_space<vmem>>, vector<2x32xf32>,
    %333 = vector.extract_strided_slice %321 {offsets = [2, 0], sizes = [2, 32], strides = [1, 1]} : vector<4x32xf32> to vector<2x32xf32>
    %c4_87 = arith.constant 4 : index
    %c32_88 = arith.constant 32 : index
    %334 = vector.load %arg10[%c4_87, %c32_88] : memref<20x64xf32, #tpu.memory_space<vmem>>, vector<2x32xf32>
    tpu.vector_store %arg10[%c4_87, %c32_88], %333 {strides = array<i32>} : memref<20x64xf32, #tpu.memory_space<vmem>>, vector<2x32xf32>,
    %335 = vector.extract_strided_slice %20 {offsets = [16, 0], sizes = [2, 128], strides = [1, 1]} : vector<20x256xf32> to vector<2x128xf32>
    %336 = vector.extract_strided_slice %20 {offsets = [2, 128], sizes = [2, 128], strides = [1, 1]} : vector<20x256xf32> to vector<2x128xf32>
    %337 = tpu.concatenate %335, %336 in 0 : vector<2x128xf32>, vector<2x128xf32> -> vector<4x128xf32>
    %338 = tpu.concatenate %325, %325 in 1 : vector<4x32xf32>, vector<4x32xf32> -> vector<4x64xf32>
    %339 = arith.mulf %338, %9 : vector<4x64xf32>
    %340 = arith.truncf %339 : vector<4x64xf32> to vector<4x64xbf16>
    %cst_89 = arith.constant dense<0.000000e+00> : vector<4x128xf32>
    %341 = tpu.matmul %340, %13, %cst_89 {dimension_numbers = #tpu.dot_dimension_numbers<[1], [0], [0], [1], [0, 0, 1, 1], [], []>} : vector<4x64xbf16>, vector<64x128xbf16>, vector<4x128xf32> -> vector<4x128xf32>
    %342 = arith.addf %337, %341 : vector<4x128xf32>
    %343 = arith.negf %342 : vector<4x128xf32>
    %344 = math.exp %343 : vector<4x128xf32>
    %cst_90 = arith.constant 1.000000e+00 : f32
    %345 = vector.broadcast %cst_90 : f32 to vector<4x128xf32>
    %346 = arith.addf %345, %344 : vector<4x128xf32>
    %347 = arith.divf %345, %346 : vector<4x128xf32>
    %348 = math.tanh %342 : vector<4x128xf32>
    %349 = vector.extract_strided_slice %347 {offsets = [0, 0], sizes = [4, 32], strides = [1, 1]} : vector<4x128xf32> to vector<4x32xf32>
    %350 = vector.extract_strided_slice %347 {offsets = [0, 32], sizes = [4, 32], strides = [1, 1]} : vector<4x128xf32> to vector<4x32xf32>
    %351 = vector.extract_strided_slice %348 {offsets = [0, 64], sizes = [4, 32], strides = [1, 1]} : vector<4x128xf32> to vector<4x32xf32>
    %352 = vector.extract_strided_slice %347 {offsets = [0, 96], sizes = [4, 32], strides = [1, 1]} : vector<4x128xf32> to vector<4x32xf32>
    %353 = arith.mulf %350, %330 : vector<4x32xf32>
    %354 = arith.mulf %349, %351 : vector<4x32xf32>
    %355 = arith.addf %353, %354 : vector<4x32xf32>
    %356 = math.tanh %355 : vector<4x32xf32>
    %357 = arith.mulf %352, %356 : vector<4x32xf32>
    %c0_91 = arith.constant 0 : index
    %c32_92 = arith.constant 32 : index
    %c0_93 = arith.constant 0 : index
    %358 = vector.load %arg2[%c0_91, %c32_92, %c0_93] : memref<1x40x32xf32, #tpu.memory_space<vmem>>, vector<1x4x32xf32>
    %359 = vector.shape_cast %358 : vector<1x4x32xf32> to vector<4x32xf32>
    %360 = arith.mulf %359, %357 : vector<4x32xf32>
    %cst_94 = arith.constant 1.000000e+00 : f32
    %361 = vector.broadcast %cst_94 : f32 to vector<4x32xf32>
    %362 = arith.subf %361, %359 : vector<4x32xf32>
    %363 = arith.mulf %362, %325 : vector<4x32xf32>
    %364 = arith.addf %360, %363 : vector<4x32xf32>
    %365 = arith.mulf %359, %355 : vector<4x32xf32>
    %cst_95 = arith.constant 1.000000e+00 : f32
    %366 = vector.broadcast %cst_95 : f32 to vector<4x32xf32>
    %367 = arith.subf %366, %359 : vector<4x32xf32>
    %368 = arith.mulf %367, %330 : vector<4x32xf32>
    %369 = arith.addf %365, %368 : vector<4x32xf32>
    %370 = vector.extract_strided_slice %360 {offsets = [0, 0], sizes = [2, 32], strides = [1, 1]} : vector<4x32xf32> to vector<2x32xf32>
    %c16_96 = arith.constant 16 : index
    %c0_97 = arith.constant 0 : index
    %371 = vector.load %arg10[%c16_96, %c0_97] : memref<20x64xf32, #tpu.memory_space<vmem>>, vector<2x32xf32>
    tpu.vector_store %arg10[%c16_96, %c0_97], %370 {strides = array<i32>} : memref<20x64xf32, #tpu.memory_space<vmem>>, vector<2x32xf32>,
    %372 = vector.extract_strided_slice %360 {offsets = [2, 0], sizes = [2, 32], strides = [1, 1]} : vector<4x32xf32> to vector<2x32xf32>
    %c2_98 = arith.constant 2 : index
    %c32_99 = arith.constant 32 : index
    %373 = vector.load %arg10[%c2_98, %c32_99] : memref<20x64xf32, #tpu.memory_space<vmem>>, vector<2x32xf32>
    tpu.vector_store %arg10[%c2_98, %c32_99], %372 {strides = array<i32>} : memref<20x64xf32, #tpu.memory_space<vmem>>, vector<2x32xf32>,
    %374 = vector.extract_strided_slice %20 {offsets = [18, 0], sizes = [2, 128], strides = [1, 1]} : vector<20x256xf32> to vector<2x128xf32>
    %375 = vector.extract_strided_slice %20 {offsets = [0, 128], sizes = [2, 128], strides = [1, 1]} : vector<20x256xf32> to vector<2x128xf32>
    %376 = tpu.concatenate %374, %375 in 0 : vector<2x128xf32>, vector<2x128xf32> -> vector<4x128xf32>
    %377 = tpu.concatenate %364, %364 in 1 : vector<4x32xf32>, vector<4x32xf32> -> vector<4x64xf32>
    %378 = arith.mulf %377, %9 : vector<4x64xf32>
    %379 = arith.truncf %378 : vector<4x64xf32> to vector<4x64xbf16>
    %cst_100 = arith.constant dense<0.000000e+00> : vector<4x128xf32>
    %380 = tpu.matmul %379, %13, %cst_100 {dimension_numbers = #tpu.dot_dimension_numbers<[1], [0], [0], [1], [0, 0, 1, 1], [], []>} : vector<4x64xbf16>, vector<64x128xbf16>, vector<4x128xf32> -> vector<4x128xf32>
    %381 = arith.addf %376, %380 : vector<4x128xf32>
    %382 = arith.negf %381 : vector<4x128xf32>
    %383 = math.exp %382 : vector<4x128xf32>
    %cst_101 = arith.constant 1.000000e+00 : f32
    %384 = vector.broadcast %cst_101 : f32 to vector<4x128xf32>
    %385 = arith.addf %384, %383 : vector<4x128xf32>
    %386 = arith.divf %384, %385 : vector<4x128xf32>
    %387 = math.tanh %381 : vector<4x128xf32>
    %388 = vector.extract_strided_slice %386 {offsets = [0, 0], sizes = [4, 32], strides = [1, 1]} : vector<4x128xf32> to vector<4x32xf32>
    %389 = vector.extract_strided_slice %386 {offsets = [0, 32], sizes = [4, 32], strides = [1, 1]} : vector<4x128xf32> to vector<4x32xf32>
    %390 = vector.extract_strided_slice %387 {offsets = [0, 64], sizes = [4, 32], strides = [1, 1]} : vector<4x128xf32> to vector<4x32xf32>
    %391 = vector.extract_strided_slice %386 {offsets = [0, 96], sizes = [4, 32], strides = [1, 1]} : vector<4x128xf32> to vector<4x32xf32>
    %392 = arith.mulf %389, %369 : vector<4x32xf32>
    %393 = arith.mulf %388, %390 : vector<4x32xf32>
    %394 = arith.addf %392, %393 : vector<4x32xf32>
    %395 = math.tanh %394 : vector<4x32xf32>
    %396 = arith.mulf %391, %395 : vector<4x32xf32>
    %c0_102 = arith.constant 0 : index
    %c36 = arith.constant 36 : index
    %c0_103 = arith.constant 0 : index
    %397 = vector.load %arg2[%c0_102, %c36, %c0_103] : memref<1x40x32xf32, #tpu.memory_space<vmem>>, vector<1x4x32xf32>
    %398 = vector.shape_cast %397 : vector<1x4x32xf32> to vector<4x32xf32>
    %399 = arith.mulf %398, %396 : vector<4x32xf32>
    %400 = vector.extract_strided_slice %399 {offsets = [0, 0], sizes = [2, 32], strides = [1, 1]} : vector<4x32xf32> to vector<2x32xf32>
    %c18_104 = arith.constant 18 : index
    %c0_105 = arith.constant 0 : index
    %401 = vector.load %arg10[%c18_104, %c0_105] : memref<20x64xf32, #tpu.memory_space<vmem>>, vector<2x32xf32>
    tpu.vector_store %arg10[%c18_104, %c0_105], %400 {strides = array<i32>} : memref<20x64xf32, #tpu.memory_space<vmem>>, vector<2x32xf32>,
    %402 = vector.extract_strided_slice %399 {offsets = [2, 0], sizes = [2, 32], strides = [1, 1]} : vector<4x32xf32> to vector<2x32xf32>
    %c0_106 = arith.constant 0 : index
    %c32_107 = arith.constant 32 : index
    %403 = vector.load %arg10[%c0_106, %c32_107] : memref<20x64xf32, #tpu.memory_space<vmem>>, vector<2x32xf32>
    tpu.vector_store %arg10[%c0_106, %c32_107], %402 {strides = array<i32>} : memref<20x64xf32, #tpu.memory_space<vmem>>, vector<2x32xf32>,
    %c0_108 = arith.constant 0 : index
    %c0_109 = arith.constant 0 : index
    %c0_110 = arith.constant 0 : index
    %404 = vector.load %arg6[%c0_108, %c0_109, %c0_110] : memref<1x64x256xbf16, #tpu.memory_space<vmem>>, vector<1x64x256xbf16>
    %405 = vector.shape_cast %404 : vector<1x64x256xbf16> to vector<64x256xbf16>
    %c0_111 = arith.constant 0 : index
    %c0_112 = arith.constant 0 : index
    %c0_113 = arith.constant 0 : index
    %406 = vector.load %arg7[%c0_111, %c0_112, %c0_113] : memref<1x64x128xbf16, #tpu.memory_space<vmem>>, vector<1x64x128xbf16>
    %407 = vector.shape_cast %406 : vector<1x64x128xbf16> to vector<64x128xbf16>
    %c0_114 = arith.constant 0 : index
    %c0_115 = arith.constant 0 : index
    %c0_116 = arith.constant 0 : index
    %408 = vector.load %arg8[%c0_114, %c0_115, %c0_116] : memref<1x1x256xf32, #tpu.memory_space<vmem>>, vector<1x1x256xf32>
    %409 = vector.shape_cast %408 : vector<1x1x256xf32> to vector<1x256xf32>
    %c0_117 = arith.constant 0 : index
    %c0_118 = arith.constant 0 : index
    %410 = vector.load %arg10[%c0_117, %c0_118] : memref<20x64xf32, #tpu.memory_space<vmem>>, vector<20x64xf32>
    %411 = arith.truncf %410 : vector<20x64xf32> to vector<20x64xbf16>
    %cst_119 = arith.constant dense<0.000000e+00> : vector<20x256xf32>
    %412 = tpu.matmul %411, %405, %cst_119 {dimension_numbers = #tpu.dot_dimension_numbers<[1], [0], [0], [1], [0, 0, 1, 1], [], []>} : vector<20x64xbf16>, vector<64x256xbf16>, vector<20x256xf32> -> vector<20x256xf32>
    %413 = vector.broadcast %409 : vector<1x256xf32> to vector<20x256xf32>
    %414 = arith.addf %412, %413 : vector<20x256xf32>
    %cst_120 = arith.constant 0.000000e+00 : f32
    %415 = vector.broadcast %cst_120 : f32 to vector<4x32xf32>
    %cst_121 = arith.constant 0.000000e+00 : f32
    %416 = vector.broadcast %cst_121 : f32 to vector<4x32xf32>
    %cst_122 = arith.constant 0.000000e+00 : f32
    %417 = vector.broadcast %cst_122 : f32 to vector<4x32xf32>
    %418 = vector.extract_strided_slice %414 {offsets = [0, 0], sizes = [2, 128], strides = [1, 1]} : vector<20x256xf32> to vector<2x128xf32>
    %419 = vector.extract_strided_slice %414 {offsets = [18, 128], sizes = [2, 128], strides = [1, 1]} : vector<20x256xf32> to vector<2x128xf32>
    %420 = tpu.concatenate %418, %419 in 0 : vector<2x128xf32>, vector<2x128xf32> -> vector<4x128xf32>
    %421 = tpu.concatenate %415, %415 in 1 : vector<4x32xf32>, vector<4x32xf32> -> vector<4x64xf32>
    %422 = arith.mulf %421, %9 : vector<4x64xf32>
    %423 = arith.truncf %422 : vector<4x64xf32> to vector<4x64xbf16>
    %cst_123 = arith.constant dense<0.000000e+00> : vector<4x128xf32>
    %424 = tpu.matmul %423, %407, %cst_123 {dimension_numbers = #tpu.dot_dimension_numbers<[1], [0], [0], [1], [0, 0, 1, 1], [], []>} : vector<4x64xbf16>, vector<64x128xbf16>, vector<4x128xf32> -> vector<4x128xf32>
    %425 = arith.addf %420, %424 : vector<4x128xf32>
    %426 = arith.negf %425 : vector<4x128xf32>
    %427 = math.exp %426 : vector<4x128xf32>
    %cst_124 = arith.constant 1.000000e+00 : f32
    %428 = vector.broadcast %cst_124 : f32 to vector<4x128xf32>
    %429 = arith.addf %428, %427 : vector<4x128xf32>
    %430 = arith.divf %428, %429 : vector<4x128xf32>
    %431 = math.tanh %425 : vector<4x128xf32>
    %432 = vector.extract_strided_slice %430 {offsets = [0, 0], sizes = [4, 32], strides = [1, 1]} : vector<4x128xf32> to vector<4x32xf32>
    %433 = vector.extract_strided_slice %430 {offsets = [0, 32], sizes = [4, 32], strides = [1, 1]} : vector<4x128xf32> to vector<4x32xf32>
    %434 = vector.extract_strided_slice %431 {offsets = [0, 64], sizes = [4, 32], strides = [1, 1]} : vector<4x128xf32> to vector<4x32xf32>
    %435 = vector.extract_strided_slice %430 {offsets = [0, 96], sizes = [4, 32], strides = [1, 1]} : vector<4x128xf32> to vector<4x32xf32>
    %436 = arith.mulf %433, %416 : vector<4x32xf32>
    %437 = arith.mulf %432, %434 : vector<4x32xf32>
    %438 = arith.addf %436, %437 : vector<4x32xf32>
    %439 = math.tanh %438 : vector<4x32xf32>
    %440 = arith.mulf %435, %439 : vector<4x32xf32>
    %c0_125 = arith.constant 0 : index
    %c0_126 = arith.constant 0 : index
    %c0_127 = arith.constant 0 : index
    %441 = vector.load %arg2[%c0_125, %c0_126, %c0_127] : memref<1x40x32xf32, #tpu.memory_space<vmem>>, vector<1x4x32xf32>
    %442 = vector.shape_cast %441 : vector<1x4x32xf32> to vector<4x32xf32>
    %443 = arith.mulf %442, %440 : vector<4x32xf32>
    %cst_128 = arith.constant 1.000000e+00 : f32
    %444 = vector.broadcast %cst_128 : f32 to vector<4x32xf32>
    %445 = arith.subf %444, %442 : vector<4x32xf32>
    %446 = arith.mulf %445, %415 : vector<4x32xf32>
    %447 = arith.addf %443, %446 : vector<4x32xf32>
    %448 = arith.mulf %442, %438 : vector<4x32xf32>
    %cst_129 = arith.constant 1.000000e+00 : f32
    %449 = vector.broadcast %cst_129 : f32 to vector<4x32xf32>
    %450 = arith.subf %449, %442 : vector<4x32xf32>
    %451 = arith.mulf %450, %416 : vector<4x32xf32>
    %452 = arith.addf %448, %451 : vector<4x32xf32>
    %453 = arith.addf %417, %443 : vector<4x32xf32>
    %454 = vector.extract_strided_slice %414 {offsets = [2, 0], sizes = [2, 128], strides = [1, 1]} : vector<20x256xf32> to vector<2x128xf32>
    %455 = vector.extract_strided_slice %414 {offsets = [16, 128], sizes = [2, 128], strides = [1, 1]} : vector<20x256xf32> to vector<2x128xf32>
    %456 = tpu.concatenate %454, %455 in 0 : vector<2x128xf32>, vector<2x128xf32> -> vector<4x128xf32>
    %457 = tpu.concatenate %447, %447 in 1 : vector<4x32xf32>, vector<4x32xf32> -> vector<4x64xf32>
    %458 = arith.mulf %457, %9 : vector<4x64xf32>
    %459 = arith.truncf %458 : vector<4x64xf32> to vector<4x64xbf16>
    %cst_130 = arith.constant dense<0.000000e+00> : vector<4x128xf32>
    %460 = tpu.matmul %459, %407, %cst_130 {dimension_numbers = #tpu.dot_dimension_numbers<[1], [0], [0], [1], [0, 0, 1, 1], [], []>} : vector<4x64xbf16>, vector<64x128xbf16>, vector<4x128xf32> -> vector<4x128xf32>
    %461 = arith.addf %456, %460 : vector<4x128xf32>
    %462 = arith.negf %461 : vector<4x128xf32>
    %463 = math.exp %462 : vector<4x128xf32>
    %cst_131 = arith.constant 1.000000e+00 : f32
    %464 = vector.broadcast %cst_131 : f32 to vector<4x128xf32>
    %465 = arith.addf %464, %463 : vector<4x128xf32>
    %466 = arith.divf %464, %465 : vector<4x128xf32>
    %467 = math.tanh %461 : vector<4x128xf32>
    %468 = vector.extract_strided_slice %466 {offsets = [0, 0], sizes = [4, 32], strides = [1, 1]} : vector<4x128xf32> to vector<4x32xf32>
    %469 = vector.extract_strided_slice %466 {offsets = [0, 32], sizes = [4, 32], strides = [1, 1]} : vector<4x128xf32> to vector<4x32xf32>
    %470 = vector.extract_strided_slice %467 {offsets = [0, 64], sizes = [4, 32], strides = [1, 1]} : vector<4x128xf32> to vector<4x32xf32>
    %471 = vector.extract_strided_slice %466 {offsets = [0, 96], sizes = [4, 32], strides = [1, 1]} : vector<4x128xf32> to vector<4x32xf32>
    %472 = arith.mulf %469, %452 : vector<4x32xf32>
    %473 = arith.mulf %468, %470 : vector<4x32xf32>
    %474 = arith.addf %472, %473 : vector<4x32xf32>
    %475 = math.tanh %474 : vector<4x32xf32>
    %476 = arith.mulf %471, %475 : vector<4x32xf32>
    %c0_132 = arith.constant 0 : index
    %c4_133 = arith.constant 4 : index
    %c0_134 = arith.constant 0 : index
    %477 = vector.load %arg2[%c0_132, %c4_133, %c0_134] : memref<1x40x32xf32, #tpu.memory_space<vmem>>, vector<1x4x32xf32>
    %478 = vector.shape_cast %477 : vector<1x4x32xf32> to vector<4x32xf32>
    %479 = arith.mulf %478, %476 : vector<4x32xf32>
    %cst_135 = arith.constant 1.000000e+00 : f32
    %480 = vector.broadcast %cst_135 : f32 to vector<4x32xf32>
    %481 = arith.subf %480, %478 : vector<4x32xf32>
    %482 = arith.mulf %481, %447 : vector<4x32xf32>
    %483 = arith.addf %479, %482 : vector<4x32xf32>
    %484 = arith.mulf %478, %474 : vector<4x32xf32>
    %cst_136 = arith.constant 1.000000e+00 : f32
    %485 = vector.broadcast %cst_136 : f32 to vector<4x32xf32>
    %486 = arith.subf %485, %478 : vector<4x32xf32>
    %487 = arith.mulf %486, %452 : vector<4x32xf32>
    %488 = arith.addf %484, %487 : vector<4x32xf32>
    %489 = arith.addf %453, %479 : vector<4x32xf32>
    %490 = vector.extract_strided_slice %414 {offsets = [4, 0], sizes = [2, 128], strides = [1, 1]} : vector<20x256xf32> to vector<2x128xf32>
    %491 = vector.extract_strided_slice %414 {offsets = [14, 128], sizes = [2, 128], strides = [1, 1]} : vector<20x256xf32> to vector<2x128xf32>
    %492 = tpu.concatenate %490, %491 in 0 : vector<2x128xf32>, vector<2x128xf32> -> vector<4x128xf32>
    %493 = tpu.concatenate %483, %483 in 1 : vector<4x32xf32>, vector<4x32xf32> -> vector<4x64xf32>
    %494 = arith.mulf %493, %9 : vector<4x64xf32>
    %495 = arith.truncf %494 : vector<4x64xf32> to vector<4x64xbf16>
    %cst_137 = arith.constant dense<0.000000e+00> : vector<4x128xf32>
    %496 = tpu.matmul %495, %407, %cst_137 {dimension_numbers = #tpu.dot_dimension_numbers<[1], [0], [0], [1], [0, 0, 1, 1], [], []>} : vector<4x64xbf16>, vector<64x128xbf16>, vector<4x128xf32> -> vector<4x128xf32>
    %497 = arith.addf %492, %496 : vector<4x128xf32>
    %498 = arith.negf %497 : vector<4x128xf32>
    %499 = math.exp %498 : vector<4x128xf32>
    %cst_138 = arith.constant 1.000000e+00 : f32
    %500 = vector.broadcast %cst_138 : f32 to vector<4x128xf32>
    %501 = arith.addf %500, %499 : vector<4x128xf32>
    %502 = arith.divf %500, %501 : vector<4x128xf32>
    %503 = math.tanh %497 : vector<4x128xf32>
    %504 = vector.extract_strided_slice %502 {offsets = [0, 0], sizes = [4, 32], strides = [1, 1]} : vector<4x128xf32> to vector<4x32xf32>
    %505 = vector.extract_strided_slice %502 {offsets = [0, 32], sizes = [4, 32], strides = [1, 1]} : vector<4x128xf32> to vector<4x32xf32>
    %506 = vector.extract_strided_slice %503 {offsets = [0, 64], sizes = [4, 32], strides = [1, 1]} : vector<4x128xf32> to vector<4x32xf32>
    %507 = vector.extract_strided_slice %502 {offsets = [0, 96], sizes = [4, 32], strides = [1, 1]} : vector<4x128xf32> to vector<4x32xf32>
    %508 = arith.mulf %505, %488 : vector<4x32xf32>
    %509 = arith.mulf %504, %506 : vector<4x32xf32>
    %510 = arith.addf %508, %509 : vector<4x32xf32>
    %511 = math.tanh %510 : vector<4x32xf32>
    %512 = arith.mulf %507, %511 : vector<4x32xf32>
    %c0_139 = arith.constant 0 : index
    %c8_140 = arith.constant 8 : index
    %c0_141 = arith.constant 0 : index
    %513 = vector.load %arg2[%c0_139, %c8_140, %c0_141] : memref<1x40x32xf32, #tpu.memory_space<vmem>>, vector<1x4x32xf32>
    %514 = vector.shape_cast %513 : vector<1x4x32xf32> to vector<4x32xf32>
    %515 = arith.mulf %514, %512 : vector<4x32xf32>
    %cst_142 = arith.constant 1.000000e+00 : f32
    %516 = vector.broadcast %cst_142 : f32 to vector<4x32xf32>
    %517 = arith.subf %516, %514 : vector<4x32xf32>
    %518 = arith.mulf %517, %483 : vector<4x32xf32>
    %519 = arith.addf %515, %518 : vector<4x32xf32>
    %520 = arith.mulf %514, %510 : vector<4x32xf32>
    %cst_143 = arith.constant 1.000000e+00 : f32
    %521 = vector.broadcast %cst_143 : f32 to vector<4x32xf32>
    %522 = arith.subf %521, %514 : vector<4x32xf32>
    %523 = arith.mulf %522, %488 : vector<4x32xf32>
    %524 = arith.addf %520, %523 : vector<4x32xf32>
    %525 = arith.addf %489, %515 : vector<4x32xf32>
    %526 = vector.extract_strided_slice %414 {offsets = [6, 0], sizes = [2, 128], strides = [1, 1]} : vector<20x256xf32> to vector<2x128xf32>
    %527 = vector.extract_strided_slice %414 {offsets = [12, 128], sizes = [2, 128], strides = [1, 1]} : vector<20x256xf32> to vector<2x128xf32>
    %528 = tpu.concatenate %526, %527 in 0 : vector<2x128xf32>, vector<2x128xf32> -> vector<4x128xf32>
    %529 = tpu.concatenate %519, %519 in 1 : vector<4x32xf32>, vector<4x32xf32> -> vector<4x64xf32>
    %530 = arith.mulf %529, %9 : vector<4x64xf32>
    %531 = arith.truncf %530 : vector<4x64xf32> to vector<4x64xbf16>
    %cst_144 = arith.constant dense<0.000000e+00> : vector<4x128xf32>
    %532 = tpu.matmul %531, %407, %cst_144 {dimension_numbers = #tpu.dot_dimension_numbers<[1], [0], [0], [1], [0, 0, 1, 1], [], []>} : vector<4x64xbf16>, vector<64x128xbf16>, vector<4x128xf32> -> vector<4x128xf32>
    %533 = arith.addf %528, %532 : vector<4x128xf32>
    %534 = arith.negf %533 : vector<4x128xf32>
    %535 = math.exp %534 : vector<4x128xf32>
    %cst_145 = arith.constant 1.000000e+00 : f32
    %536 = vector.broadcast %cst_145 : f32 to vector<4x128xf32>
    %537 = arith.addf %536, %535 : vector<4x128xf32>
    %538 = arith.divf %536, %537 : vector<4x128xf32>
    %539 = math.tanh %533 : vector<4x128xf32>
    %540 = vector.extract_strided_slice %538 {offsets = [0, 0], sizes = [4, 32], strides = [1, 1]} : vector<4x128xf32> to vector<4x32xf32>
    %541 = vector.extract_strided_slice %538 {offsets = [0, 32], sizes = [4, 32], strides = [1, 1]} : vector<4x128xf32> to vector<4x32xf32>
    %542 = vector.extract_strided_slice %539 {offsets = [0, 64], sizes = [4, 32], strides = [1, 1]} : vector<4x128xf32> to vector<4x32xf32>
    %543 = vector.extract_strided_slice %538 {offsets = [0, 96], sizes = [4, 32], strides = [1, 1]} : vector<4x128xf32> to vector<4x32xf32>
    %544 = arith.mulf %541, %524 : vector<4x32xf32>
    %545 = arith.mulf %540, %542 : vector<4x32xf32>
    %546 = arith.addf %544, %545 : vector<4x32xf32>
    %547 = math.tanh %546 : vector<4x32xf32>
    %548 = arith.mulf %543, %547 : vector<4x32xf32>
    %c0_146 = arith.constant 0 : index
    %c12_147 = arith.constant 12 : index
    %c0_148 = arith.constant 0 : index
    %549 = vector.load %arg2[%c0_146, %c12_147, %c0_148] : memref<1x40x32xf32, #tpu.memory_space<vmem>>, vector<1x4x32xf32>
    %550 = vector.shape_cast %549 : vector<1x4x32xf32> to vector<4x32xf32>
    %551 = arith.mulf %550, %548 : vector<4x32xf32>
    %cst_149 = arith.constant 1.000000e+00 : f32
    %552 = vector.broadcast %cst_149 : f32 to vector<4x32xf32>
    %553 = arith.subf %552, %550 : vector<4x32xf32>
    %554 = arith.mulf %553, %519 : vector<4x32xf32>
    %555 = arith.addf %551, %554 : vector<4x32xf32>
    %556 = arith.mulf %550, %546 : vector<4x32xf32>
    %cst_150 = arith.constant 1.000000e+00 : f32
    %557 = vector.broadcast %cst_150 : f32 to vector<4x32xf32>
    %558 = arith.subf %557, %550 : vector<4x32xf32>
    %559 = arith.mulf %558, %524 : vector<4x32xf32>
    %560 = arith.addf %556, %559 : vector<4x32xf32>
    %561 = arith.addf %525, %551 : vector<4x32xf32>
    %562 = vector.extract_strided_slice %414 {offsets = [8, 0], sizes = [2, 128], strides = [1, 1]} : vector<20x256xf32> to vector<2x128xf32>
    %563 = vector.extract_strided_slice %414 {offsets = [10, 128], sizes = [2, 128], strides = [1, 1]} : vector<20x256xf32> to vector<2x128xf32>
    %564 = tpu.concatenate %562, %563 in 0 : vector<2x128xf32>, vector<2x128xf32> -> vector<4x128xf32>
    %565 = tpu.concatenate %555, %555 in 1 : vector<4x32xf32>, vector<4x32xf32> -> vector<4x64xf32>
    %566 = arith.mulf %565, %9 : vector<4x64xf32>
    %567 = arith.truncf %566 : vector<4x64xf32> to vector<4x64xbf16>
    %cst_151 = arith.constant dense<0.000000e+00> : vector<4x128xf32>
    %568 = tpu.matmul %567, %407, %cst_151 {dimension_numbers = #tpu.dot_dimension_numbers<[1], [0], [0], [1], [0, 0, 1, 1], [], []>} : vector<4x64xbf16>, vector<64x128xbf16>, vector<4x128xf32> -> vector<4x128xf32>
    %569 = arith.addf %564, %568 : vector<4x128xf32>
    %570 = arith.negf %569 : vector<4x128xf32>
    %571 = math.exp %570 : vector<4x128xf32>
    %cst_152 = arith.constant 1.000000e+00 : f32
    %572 = vector.broadcast %cst_152 : f32 to vector<4x128xf32>
    %573 = arith.addf %572, %571 : vector<4x128xf32>
    %574 = arith.divf %572, %573 : vector<4x128xf32>
    %575 = math.tanh %569 : vector<4x128xf32>
    %576 = vector.extract_strided_slice %574 {offsets = [0, 0], sizes = [4, 32], strides = [1, 1]} : vector<4x128xf32> to vector<4x32xf32>
    %577 = vector.extract_strided_slice %574 {offsets = [0, 32], sizes = [4, 32], strides = [1, 1]} : vector<4x128xf32> to vector<4x32xf32>
    %578 = vector.extract_strided_slice %575 {offsets = [0, 64], sizes = [4, 32], strides = [1, 1]} : vector<4x128xf32> to vector<4x32xf32>
    %579 = vector.extract_strided_slice %574 {offsets = [0, 96], sizes = [4, 32], strides = [1, 1]} : vector<4x128xf32> to vector<4x32xf32>
    %580 = arith.mulf %577, %560 : vector<4x32xf32>
    %581 = arith.mulf %576, %578 : vector<4x32xf32>
    %582 = arith.addf %580, %581 : vector<4x32xf32>
    %583 = math.tanh %582 : vector<4x32xf32>
    %584 = arith.mulf %579, %583 : vector<4x32xf32>
    %c0_153 = arith.constant 0 : index
    %c16_154 = arith.constant 16 : index
    %c0_155 = arith.constant 0 : index
    %585 = vector.load %arg2[%c0_153, %c16_154, %c0_155] : memref<1x40x32xf32, #tpu.memory_space<vmem>>, vector<1x4x32xf32>
    %586 = vector.shape_cast %585 : vector<1x4x32xf32> to vector<4x32xf32>
    %587 = arith.mulf %586, %584 : vector<4x32xf32>
    %cst_156 = arith.constant 1.000000e+00 : f32
    %588 = vector.broadcast %cst_156 : f32 to vector<4x32xf32>
    %589 = arith.subf %588, %586 : vector<4x32xf32>
    %590 = arith.mulf %589, %555 : vector<4x32xf32>
    %591 = arith.addf %587, %590 : vector<4x32xf32>
    %592 = arith.mulf %586, %582 : vector<4x32xf32>
    %cst_157 = arith.constant 1.000000e+00 : f32
    %593 = vector.broadcast %cst_157 : f32 to vector<4x32xf32>
    %594 = arith.subf %593, %586 : vector<4x32xf32>
    %595 = arith.mulf %594, %560 : vector<4x32xf32>
    %596 = arith.addf %592, %595 : vector<4x32xf32>
    %597 = arith.addf %561, %587 : vector<4x32xf32>
    %598 = vector.extract_strided_slice %414 {offsets = [10, 0], sizes = [2, 128], strides = [1, 1]} : vector<20x256xf32> to vector<2x128xf32>
    %599 = vector.extract_strided_slice %414 {offsets = [8, 128], sizes = [2, 128], strides = [1, 1]} : vector<20x256xf32> to vector<2x128xf32>
    %600 = tpu.concatenate %598, %599 in 0 : vector<2x128xf32>, vector<2x128xf32> -> vector<4x128xf32>
    %601 = tpu.concatenate %591, %591 in 1 : vector<4x32xf32>, vector<4x32xf32> -> vector<4x64xf32>
    %602 = arith.mulf %601, %9 : vector<4x64xf32>
    %603 = arith.truncf %602 : vector<4x64xf32> to vector<4x64xbf16>
    %cst_158 = arith.constant dense<0.000000e+00> : vector<4x128xf32>
    %604 = tpu.matmul %603, %407, %cst_158 {dimension_numbers = #tpu.dot_dimension_numbers<[1], [0], [0], [1], [0, 0, 1, 1], [], []>} : vector<4x64xbf16>, vector<64x128xbf16>, vector<4x128xf32> -> vector<4x128xf32>
    %605 = arith.addf %600, %604 : vector<4x128xf32>
    %606 = arith.negf %605 : vector<4x128xf32>
    %607 = math.exp %606 : vector<4x128xf32>
    %cst_159 = arith.constant 1.000000e+00 : f32
    %608 = vector.broadcast %cst_159 : f32 to vector<4x128xf32>
    %609 = arith.addf %608, %607 : vector<4x128xf32>
    %610 = arith.divf %608, %609 : vector<4x128xf32>
    %611 = math.tanh %605 : vector<4x128xf32>
    %612 = vector.extract_strided_slice %610 {offsets = [0, 0], sizes = [4, 32], strides = [1, 1]} : vector<4x128xf32> to vector<4x32xf32>
    %613 = vector.extract_strided_slice %610 {offsets = [0, 32], sizes = [4, 32], strides = [1, 1]} : vector<4x128xf32> to vector<4x32xf32>
    %614 = vector.extract_strided_slice %611 {offsets = [0, 64], sizes = [4, 32], strides = [1, 1]} : vector<4x128xf32> to vector<4x32xf32>
    %615 = vector.extract_strided_slice %610 {offsets = [0, 96], sizes = [4, 32], strides = [1, 1]} : vector<4x128xf32> to vector<4x32xf32>
    %616 = arith.mulf %613, %596 : vector<4x32xf32>
    %617 = arith.mulf %612, %614 : vector<4x32xf32>
    %618 = arith.addf %616, %617 : vector<4x32xf32>
    %619 = math.tanh %618 : vector<4x32xf32>
    %620 = arith.mulf %615, %619 : vector<4x32xf32>
    %c0_160 = arith.constant 0 : index
    %c20_161 = arith.constant 20 : index
    %c0_162 = arith.constant 0 : index
    %621 = vector.load %arg2[%c0_160, %c20_161, %c0_162] : memref<1x40x32xf32, #tpu.memory_space<vmem>>, vector<1x4x32xf32>
    %622 = vector.shape_cast %621 : vector<1x4x32xf32> to vector<4x32xf32>
    %623 = arith.mulf %622, %620 : vector<4x32xf32>
    %cst_163 = arith.constant 1.000000e+00 : f32
    %624 = vector.broadcast %cst_163 : f32 to vector<4x32xf32>
    %625 = arith.subf %624, %622 : vector<4x32xf32>
    %626 = arith.mulf %625, %591 : vector<4x32xf32>
    %627 = arith.addf %623, %626 : vector<4x32xf32>
    %628 = arith.mulf %622, %618 : vector<4x32xf32>
    %cst_164 = arith.constant 1.000000e+00 : f32
    %629 = vector.broadcast %cst_164 : f32 to vector<4x32xf32>
    %630 = arith.subf %629, %622 : vector<4x32xf32>
    %631 = arith.mulf %630, %596 : vector<4x32xf32>
    %632 = arith.addf %628, %631 : vector<4x32xf32>
    %633 = arith.addf %597, %623 : vector<4x32xf32>
    %634 = vector.extract_strided_slice %414 {offsets = [12, 0], sizes = [2, 128], strides = [1, 1]} : vector<20x256xf32> to vector<2x128xf32>
    %635 = vector.extract_strided_slice %414 {offsets = [6, 128], sizes = [2, 128], strides = [1, 1]} : vector<20x256xf32> to vector<2x128xf32>
    %636 = tpu.concatenate %634, %635 in 0 : vector<2x128xf32>, vector<2x128xf32> -> vector<4x128xf32>
    %637 = tpu.concatenate %627, %627 in 1 : vector<4x32xf32>, vector<4x32xf32> -> vector<4x64xf32>
    %638 = arith.mulf %637, %9 : vector<4x64xf32>
    %639 = arith.truncf %638 : vector<4x64xf32> to vector<4x64xbf16>
    %cst_165 = arith.constant dense<0.000000e+00> : vector<4x128xf32>
    %640 = tpu.matmul %639, %407, %cst_165 {dimension_numbers = #tpu.dot_dimension_numbers<[1], [0], [0], [1], [0, 0, 1, 1], [], []>} : vector<4x64xbf16>, vector<64x128xbf16>, vector<4x128xf32> -> vector<4x128xf32>
    %641 = arith.addf %636, %640 : vector<4x128xf32>
    %642 = arith.negf %641 : vector<4x128xf32>
    %643 = math.exp %642 : vector<4x128xf32>
    %cst_166 = arith.constant 1.000000e+00 : f32
    %644 = vector.broadcast %cst_166 : f32 to vector<4x128xf32>
    %645 = arith.addf %644, %643 : vector<4x128xf32>
    %646 = arith.divf %644, %645 : vector<4x128xf32>
    %647 = math.tanh %641 : vector<4x128xf32>
    %648 = vector.extract_strided_slice %646 {offsets = [0, 0], sizes = [4, 32], strides = [1, 1]} : vector<4x128xf32> to vector<4x32xf32>
    %649 = vector.extract_strided_slice %646 {offsets = [0, 32], sizes = [4, 32], strides = [1, 1]} : vector<4x128xf32> to vector<4x32xf32>
    %650 = vector.extract_strided_slice %647 {offsets = [0, 64], sizes = [4, 32], strides = [1, 1]} : vector<4x128xf32> to vector<4x32xf32>
    %651 = vector.extract_strided_slice %646 {offsets = [0, 96], sizes = [4, 32], strides = [1, 1]} : vector<4x128xf32> to vector<4x32xf32>
    %652 = arith.mulf %649, %632 : vector<4x32xf32>
    %653 = arith.mulf %648, %650 : vector<4x32xf32>
    %654 = arith.addf %652, %653 : vector<4x32xf32>
    %655 = math.tanh %654 : vector<4x32xf32>
    %656 = arith.mulf %651, %655 : vector<4x32xf32>
    %c0_167 = arith.constant 0 : index
    %c24_168 = arith.constant 24 : index
    %c0_169 = arith.constant 0 : index
    %657 = vector.load %arg2[%c0_167, %c24_168, %c0_169] : memref<1x40x32xf32, #tpu.memory_space<vmem>>, vector<1x4x32xf32>
    %658 = vector.shape_cast %657 : vector<1x4x32xf32> to vector<4x32xf32>
    %659 = arith.mulf %658, %656 : vector<4x32xf32>
    %cst_170 = arith.constant 1.000000e+00 : f32
    %660 = vector.broadcast %cst_170 : f32 to vector<4x32xf32>
    %661 = arith.subf %660, %658 : vector<4x32xf32>
    %662 = arith.mulf %661, %627 : vector<4x32xf32>
    %663 = arith.addf %659, %662 : vector<4x32xf32>
    %664 = arith.mulf %658, %654 : vector<4x32xf32>
    %cst_171 = arith.constant 1.000000e+00 : f32
    %665 = vector.broadcast %cst_171 : f32 to vector<4x32xf32>
    %666 = arith.subf %665, %658 : vector<4x32xf32>
    %667 = arith.mulf %666, %632 : vector<4x32xf32>
    %668 = arith.addf %664, %667 : vector<4x32xf32>
    %669 = arith.addf %633, %659 : vector<4x32xf32>
    %670 = vector.extract_strided_slice %414 {offsets = [14, 0], sizes = [2, 128], strides = [1, 1]} : vector<20x256xf32> to vector<2x128xf32>
    %671 = vector.extract_strided_slice %414 {offsets = [4, 128], sizes = [2, 128], strides = [1, 1]} : vector<20x256xf32> to vector<2x128xf32>
    %672 = tpu.concatenate %670, %671 in 0 : vector<2x128xf32>, vector<2x128xf32> -> vector<4x128xf32>
    %673 = tpu.concatenate %663, %663 in 1 : vector<4x32xf32>, vector<4x32xf32> -> vector<4x64xf32>
    %674 = arith.mulf %673, %9 : vector<4x64xf32>
    %675 = arith.truncf %674 : vector<4x64xf32> to vector<4x64xbf16>
    %cst_172 = arith.constant dense<0.000000e+00> : vector<4x128xf32>
    %676 = tpu.matmul %675, %407, %cst_172 {dimension_numbers = #tpu.dot_dimension_numbers<[1], [0], [0], [1], [0, 0, 1, 1], [], []>} : vector<4x64xbf16>, vector<64x128xbf16>, vector<4x128xf32> -> vector<4x128xf32>
    %677 = arith.addf %672, %676 : vector<4x128xf32>
    %678 = arith.negf %677 : vector<4x128xf32>
    %679 = math.exp %678 : vector<4x128xf32>
    %cst_173 = arith.constant 1.000000e+00 : f32
    %680 = vector.broadcast %cst_173 : f32 to vector<4x128xf32>
    %681 = arith.addf %680, %679 : vector<4x128xf32>
    %682 = arith.divf %680, %681 : vector<4x128xf32>
    %683 = math.tanh %677 : vector<4x128xf32>
    %684 = vector.extract_strided_slice %682 {offsets = [0, 0], sizes = [4, 32], strides = [1, 1]} : vector<4x128xf32> to vector<4x32xf32>
    %685 = vector.extract_strided_slice %682 {offsets = [0, 32], sizes = [4, 32], strides = [1, 1]} : vector<4x128xf32> to vector<4x32xf32>
    %686 = vector.extract_strided_slice %683 {offsets = [0, 64], sizes = [4, 32], strides = [1, 1]} : vector<4x128xf32> to vector<4x32xf32>
    %687 = vector.extract_strided_slice %682 {offsets = [0, 96], sizes = [4, 32], strides = [1, 1]} : vector<4x128xf32> to vector<4x32xf32>
    %688 = arith.mulf %685, %668 : vector<4x32xf32>
    %689 = arith.mulf %684, %686 : vector<4x32xf32>
    %690 = arith.addf %688, %689 : vector<4x32xf32>
    %691 = math.tanh %690 : vector<4x32xf32>
    %692 = arith.mulf %687, %691 : vector<4x32xf32>
    %c0_174 = arith.constant 0 : index
    %c28_175 = arith.constant 28 : index
    %c0_176 = arith.constant 0 : index
    %693 = vector.load %arg2[%c0_174, %c28_175, %c0_176] : memref<1x40x32xf32, #tpu.memory_space<vmem>>, vector<1x4x32xf32>
    %694 = vector.shape_cast %693 : vector<1x4x32xf32> to vector<4x32xf32>
    %695 = arith.mulf %694, %692 : vector<4x32xf32>
    %cst_177 = arith.constant 1.000000e+00 : f32
    %696 = vector.broadcast %cst_177 : f32 to vector<4x32xf32>
    %697 = arith.subf %696, %694 : vector<4x32xf32>
    %698 = arith.mulf %697, %663 : vector<4x32xf32>
    %699 = arith.addf %695, %698 : vector<4x32xf32>
    %700 = arith.mulf %694, %690 : vector<4x32xf32>
    %cst_178 = arith.constant 1.000000e+00 : f32
    %701 = vector.broadcast %cst_178 : f32 to vector<4x32xf32>
    %702 = arith.subf %701, %694 : vector<4x32xf32>
    %703 = arith.mulf %702, %668 : vector<4x32xf32>
    %704 = arith.addf %700, %703 : vector<4x32xf32>
    %705 = arith.addf %669, %695 : vector<4x32xf32>
    %706 = vector.extract_strided_slice %414 {offsets = [16, 0], sizes = [2, 128], strides = [1, 1]} : vector<20x256xf32> to vector<2x128xf32>
    %707 = vector.extract_strided_slice %414 {offsets = [2, 128], sizes = [2, 128], strides = [1, 1]} : vector<20x256xf32> to vector<2x128xf32>
    %708 = tpu.concatenate %706, %707 in 0 : vector<2x128xf32>, vector<2x128xf32> -> vector<4x128xf32>
    %709 = tpu.concatenate %699, %699 in 1 : vector<4x32xf32>, vector<4x32xf32> -> vector<4x64xf32>
    %710 = arith.mulf %709, %9 : vector<4x64xf32>
    %711 = arith.truncf %710 : vector<4x64xf32> to vector<4x64xbf16>
    %cst_179 = arith.constant dense<0.000000e+00> : vector<4x128xf32>
    %712 = tpu.matmul %711, %407, %cst_179 {dimension_numbers = #tpu.dot_dimension_numbers<[1], [0], [0], [1], [0, 0, 1, 1], [], []>} : vector<4x64xbf16>, vector<64x128xbf16>, vector<4x128xf32> -> vector<4x128xf32>
    %713 = arith.addf %708, %712 : vector<4x128xf32>
    %714 = arith.negf %713 : vector<4x128xf32>
    %715 = math.exp %714 : vector<4x128xf32>
    %cst_180 = arith.constant 1.000000e+00 : f32
    %716 = vector.broadcast %cst_180 : f32 to vector<4x128xf32>
    %717 = arith.addf %716, %715 : vector<4x128xf32>
    %718 = arith.divf %716, %717 : vector<4x128xf32>
    %719 = math.tanh %713 : vector<4x128xf32>
    %720 = vector.extract_strided_slice %718 {offsets = [0, 0], sizes = [4, 32], strides = [1, 1]} : vector<4x128xf32> to vector<4x32xf32>
    %721 = vector.extract_strided_slice %718 {offsets = [0, 32], sizes = [4, 32], strides = [1, 1]} : vector<4x128xf32> to vector<4x32xf32>
    %722 = vector.extract_strided_slice %719 {offsets = [0, 64], sizes = [4, 32], strides = [1, 1]} : vector<4x128xf32> to vector<4x32xf32>
    %723 = vector.extract_strided_slice %718 {offsets = [0, 96], sizes = [4, 32], strides = [1, 1]} : vector<4x128xf32> to vector<4x32xf32>
    %724 = arith.mulf %721, %704 : vector<4x32xf32>
    %725 = arith.mulf %720, %722 : vector<4x32xf32>
    %726 = arith.addf %724, %725 : vector<4x32xf32>
    %727 = math.tanh %726 : vector<4x32xf32>
    %728 = arith.mulf %723, %727 : vector<4x32xf32>
    %c0_181 = arith.constant 0 : index
    %c32_182 = arith.constant 32 : index
    %c0_183 = arith.constant 0 : index
    %729 = vector.load %arg2[%c0_181, %c32_182, %c0_183] : memref<1x40x32xf32, #tpu.memory_space<vmem>>, vector<1x4x32xf32>
    %730 = vector.shape_cast %729 : vector<1x4x32xf32> to vector<4x32xf32>
    %731 = arith.mulf %730, %728 : vector<4x32xf32>
    %cst_184 = arith.constant 1.000000e+00 : f32
    %732 = vector.broadcast %cst_184 : f32 to vector<4x32xf32>
    %733 = arith.subf %732, %730 : vector<4x32xf32>
    %734 = arith.mulf %733, %699 : vector<4x32xf32>
    %735 = arith.addf %731, %734 : vector<4x32xf32>
    %736 = arith.mulf %730, %726 : vector<4x32xf32>
    %cst_185 = arith.constant 1.000000e+00 : f32
    %737 = vector.broadcast %cst_185 : f32 to vector<4x32xf32>
    %738 = arith.subf %737, %730 : vector<4x32xf32>
    %739 = arith.mulf %738, %704 : vector<4x32xf32>
    %740 = arith.addf %736, %739 : vector<4x32xf32>
    %741 = arith.addf %705, %731 : vector<4x32xf32>
    %742 = vector.extract_strided_slice %414 {offsets = [18, 0], sizes = [2, 128], strides = [1, 1]} : vector<20x256xf32> to vector<2x128xf32>
    %743 = vector.extract_strided_slice %414 {offsets = [0, 128], sizes = [2, 128], strides = [1, 1]} : vector<20x256xf32> to vector<2x128xf32>
    %744 = tpu.concatenate %742, %743 in 0 : vector<2x128xf32>, vector<2x128xf32> -> vector<4x128xf32>
    %745 = tpu.concatenate %735, %735 in 1 : vector<4x32xf32>, vector<4x32xf32> -> vector<4x64xf32>
    %746 = arith.mulf %745, %9 : vector<4x64xf32>
    %747 = arith.truncf %746 : vector<4x64xf32> to vector<4x64xbf16>
    %cst_186 = arith.constant dense<0.000000e+00> : vector<4x128xf32>
    %748 = tpu.matmul %747, %407, %cst_186 {dimension_numbers = #tpu.dot_dimension_numbers<[1], [0], [0], [1], [0, 0, 1, 1], [], []>} : vector<4x64xbf16>, vector<64x128xbf16>, vector<4x128xf32> -> vector<4x128xf32>
    %749 = arith.addf %744, %748 : vector<4x128xf32>
    %750 = arith.negf %749 : vector<4x128xf32>
    %751 = math.exp %750 : vector<4x128xf32>
    %cst_187 = arith.constant 1.000000e+00 : f32
    %752 = vector.broadcast %cst_187 : f32 to vector<4x128xf32>
    %753 = arith.addf %752, %751 : vector<4x128xf32>
    %754 = arith.divf %752, %753 : vector<4x128xf32>
    %755 = math.tanh %749 : vector<4x128xf32>
    %756 = vector.extract_strided_slice %754 {offsets = [0, 0], sizes = [4, 32], strides = [1, 1]} : vector<4x128xf32> to vector<4x32xf32>
    %757 = vector.extract_strided_slice %754 {offsets = [0, 32], sizes = [4, 32], strides = [1, 1]} : vector<4x128xf32> to vector<4x32xf32>
    %758 = vector.extract_strided_slice %755 {offsets = [0, 64], sizes = [4, 32], strides = [1, 1]} : vector<4x128xf32> to vector<4x32xf32>
    %759 = vector.extract_strided_slice %754 {offsets = [0, 96], sizes = [4, 32], strides = [1, 1]} : vector<4x128xf32> to vector<4x32xf32>
    %760 = arith.mulf %757, %740 : vector<4x32xf32>
    %761 = arith.mulf %756, %758 : vector<4x32xf32>
    %762 = arith.addf %760, %761 : vector<4x32xf32>
    %763 = math.tanh %762 : vector<4x32xf32>
    %764 = arith.mulf %759, %763 : vector<4x32xf32>
    %c0_188 = arith.constant 0 : index
    %c36_189 = arith.constant 36 : index
    %c0_190 = arith.constant 0 : index
    %765 = vector.load %arg2[%c0_188, %c36_189, %c0_190] : memref<1x40x32xf32, #tpu.memory_space<vmem>>, vector<1x4x32xf32>
    %766 = vector.shape_cast %765 : vector<1x4x32xf32> to vector<4x32xf32>
    %767 = arith.mulf %766, %764 : vector<4x32xf32>
    %768 = arith.addf %741, %767 : vector<4x32xf32>
    %769 = vector.extract_strided_slice %768 {offsets = [0, 0], sizes = [2, 32], strides = [1, 1]} : vector<4x32xf32> to vector<2x32xf32>
    %770 = vector.extract_strided_slice %768 {offsets = [2, 0], sizes = [2, 32], strides = [1, 1]} : vector<4x32xf32> to vector<2x32xf32>
    %771 = tpu.concatenate %769, %770 in 1 : vector<2x32xf32>, vector<2x32xf32> -> vector<2x64xf32>
    %c0_191 = arith.constant 0 : index
    %c0_192 = arith.constant 0 : index
    %c0_193 = arith.constant 0 : index
    %772 = vector.load %arg9[%c0_191, %c0_192, %c0_193] : memref<1x2x64xf32, #tpu.memory_space<vmem>>, vector<1x2x64xf32>
    %773 = vector.shape_cast %772 : vector<1x2x64xf32> to vector<2x64xf32>
    %774 = vector.shape_cast %771 : vector<2x64xf32> to vector<1x2x64xf32>
    tpu.vector_store %arg9[%c0_191, %c0_192, %c0_193], %774 {strides = array<i32>} : memref<1x2x64xf32, #tpu.memory_space<vmem>>, vector<1x2x64xf32>,
    return
  }
  func.func @transform_0(%arg0: i32) -> (i32, i32, i32) {
    %c0_i32 = arith.constant 0 : i32
    %c0_i32_0 = arith.constant 0 : i32
    %c0_i32_1 = arith.constant 0 : i32
    return %arg0, %c0_i32, %c0_i32_0 : i32, i32, i32
  }
  func.func @transform_1(%arg0: i32) -> (i32, i32, i32) {
    %c0_i32 = arith.constant 0 : i32
    %c0_i32_0 = arith.constant 0 : i32
    %c0_i32_1 = arith.constant 0 : i32
    return %arg0, %c0_i32, %c0_i32_0 : i32, i32, i32
  }
  func.func @transform_2(%arg0: i32) -> (i32, i32, i32) {
    %c0_i32 = arith.constant 0 : i32
    %c0_i32_0 = arith.constant 0 : i32
    %c0_i32_1 = arith.constant 0 : i32
    return %arg0, %c0_i32, %c0_i32_0 : i32, i32, i32
  }
  func.func @transform_3(%arg0: i32) -> (i32, i32, i32) {
    %c0_i32 = arith.constant 0 : i32
    %c0_i32_0 = arith.constant 0 : i32
    %c0_i32_1 = arith.constant 0 : i32
    return %arg0, %c0_i32, %c0_i32_0 : i32, i32, i32
  }
  func.func @transform_4(%arg0: i32) -> (i32, i32, i32) {
    %c0_i32 = arith.constant 0 : i32
    %c0_i32_0 = arith.constant 0 : i32
    %c0_i32_1 = arith.constant 0 : i32
    return %arg0, %c0_i32, %c0_i32_0 : i32, i32, i32
  }
  func.func @transform_5(%arg0: i32) -> (i32, i32, i32) {
    %c0_i32 = arith.constant 0 : i32
    %c0_i32_0 = arith.constant 0 : i32
    %c0_i32_1 = arith.constant 0 : i32
    return %arg0, %c0_i32, %c0_i32_0 : i32, i32, i32
  }
  func.func @transform_6(%arg0: i32) -> (i32, i32, i32) {
    %c0_i32 = arith.constant 0 : i32
    %c0_i32_0 = arith.constant 0 : i32
    %c0_i32_1 = arith.constant 0 : i32
    return %arg0, %c0_i32, %c0_i32_0 : i32, i32, i32
  }
  func.func @transform_7(%arg0: i32) -> (i32, i32, i32) {
    %c0_i32 = arith.constant 0 : i32
    %c0_i32_0 = arith.constant 0 : i32
    %c0_i32_1 = arith.constant 0 : i32
    return %arg0, %c0_i32, %c0_i32_0 : i32, i32, i32
  }
  func.func @transform_8(%arg0: i32) -> (i32, i32, i32) {
    %c0_i32 = arith.constant 0 : i32
    %c0_i32_0 = arith.constant 0 : i32
    %c0_i32_1 = arith.constant 0 : i32
    return %arg0, %c0_i32, %c0_i32_0 : i32, i32, i32
  }
}

</mosaic_0001>

<llo_original>
// kernel: tpu_custom_call.1
$region0: #{tpu_custom_call.1}
  #allocation0 [shape = 'u32[]', space=smem, size = 0x4, offset = 0x4, fixed_abs, tag = 'smem constant byte address 0x4 - core index']
  #allocation1 [shape = 'u32[144,128]{1,0:T(1,128)}', space=vmem, size = 0x12000, scoped, tag = 'internal scratch']
  #allocation2 [shape = 'f32[20,64]{1,0:T(8,128)}', space=vmem, size = 0x3000, scoped, tag = 'scratch operand']
  %s0 = inlined_call_operand.vmem [shape: bf16[2,20,32], index: 0, kind: input, shape index: {}]
  %s1 = inlined_call_operand.vmem [shape: f32[2,40,32], index: 1, kind: input, shape index: {}]
  %s2 = inlined_call_operand.vmem [shape: bf16[2,32,256], index: 2, kind: input, shape index: {}]
  %s3 = inlined_call_operand.hbm [shape: bf16[2,64,128], index: 3, kind: input, shape index: {}]
  %s4 = inlined_call_operand.vmem [shape: f32[2,1,256], index: 4, kind: input, shape index: {}]
  %s5 = inlined_call_operand.vmem [shape: bf16[2,64,256], index: 5, kind: input, shape index: {}]
  %s6 = inlined_call_operand.hbm [shape: bf16[2,64,128], index: 6, kind: input, shape index: {}]
  %s7 = inlined_call_operand.hbm [shape: f32[2,1,256], index: 7, kind: input, shape index: {}]
  %s8 = inlined_call_operand.hbm [shape: f32[2,2,64], index: 8, kind: output, shape index: {}]
  %s9 = sld [smem:[#allocation0]]
  $region77: #{tpu_custom_call.1} parent=0
    _
  %s11 = ssub.s32 1, %s9
  %s12 = scalar_select 0, %s11, %s9
  $region1: #{tpu_custom_call.1} parent=0
    #allocation3 [shape = 'u8[32768]{0}', space=vmem, size = 0x8000, scoped, tag = 'input window, operand 3']
    #allocation4 [shape = 's32[2]{0}', space=sflag, size = 0x8, scoped, tag = 'scoped memory for tpu_custom_call.1']
    #allocation5 [shape = 's32[2]{0}', space=sflag, size = 0x8, scoped, tag = 'scoped memory for tpu_custom_call.1']
    #allocation6 [shape = 'u8[32768]{0}', space=vmem, size = 0x8000, scoped, tag = 'input window, operand 6']
    #allocation7 [shape = 's32[2]{0}', space=sflag, size = 0x8, scoped, tag = 'scoped memory for tpu_custom_call.1']
    #allocation8 [shape = 'u8[2048]{0}', space=vmem, size = 0x800, scoped, tag = 'input window, operand 7']
    #allocation9 [shape = 'u8[2048]{0}', space=vmem, size = 0x800, scoped, tag = 'output window, operand 0']
    %13 = vsyncpa [#allocation4], 0
    %s14 = scalar_lea.sflag [#allocation4], 1
    %15 = vsyncpa %s14, 0
    %16 = vsyncpa [#allocation7], 0
    %s17 = scalar_lea.sflag [#allocation7], 1
    %18 = vsyncpa %s17, 0
    %19 = vsyncpa [#allocation5], 0
    %s20 = scalar_lea.sflag [#allocation5], 1
    %21 = vsyncpa %s20, 0
    loop: start=0, step=1, limit=4
    $region2: #{tpu_custom_call.1} parent=1 // loop_pre_header
      _
    $region3: #{tpu_custom_call.1} parent=1 // loop_header
      %s23 = sphi 0, %s27
      %p24 = scmp.ge.s32.totalorder %s23, 4
      %s33 = sphi 0, %s35
      %s36 = sphi 0, %s33
      %s37 = sphi 0, %s36
      %s53 = sphi 0, %s37
      %s59 = sphi 0, %s61
      %s62 = sphi 0, %s59
      %s63 = sphi 0, %s62
      %s79 = sphi 0, %s63
      %s85 = sphi 0, %s87
      %s88 = sphi 0, %s85
      %s89 = sphi 0, %s88
      %s105 = sphi 0, %s89
      %s111 = sphi 0, %s113
      %s114 = sphi 0, %s111
      %s115 = sphi 0, %s114
      %s131 = sphi 0, %s115
      %s137 = sphi 0, %s139
      %s140 = sphi 0, %s137
      %s141 = sphi 0, %s140
      %s157 = sphi 0, %s141
      %s163 = sphi 0, %s165
      %s166 = sphi 0, %s163
      %s167 = sphi 0, %s166
      %s183 = sphi 0, %s167
      %s189 = sphi 0, %s191
      %s192 = sphi 0, %s189
      %s193 = sphi 0, %s192
      %s209 = sphi 0, %s193
      %s215 = sphi 0, %s217
      %s218 = sphi 0, %s215
      %s219 = sphi 0, %s218
      %s235 = sphi 0, %s219
      %s241 = sphi 0, %s243
      %s244 = sphi 0, %s241
      %s245 = sphi 0, %s244
      %s261 = sphi 0, %s245
    $region4: #{tpu_custom_call.1} parent=1 // loop_header_branch
      %26 = sbr.rel (%p24) target = $region8
    $region5: #{tpu_custom_call.1} parent=1 // loop_body
      %s28 = ssub.s32 %s23, 1
      %s29 = ssub.s32 %s23, 2
      %s30 = sadd.s32 %s23, 1
      %s31 = ssub.s32 %s23, %s30
      %p32 = scmp.eq.s32.totalorder %s31, 0
      %s34 = sadd.s32 %s33, 1
      %s35 = scalar_select %p32, %s33, %s34
      %p38 = pneg %p32
      %p39 = scmp.eq.s32.totalorder %s23, 1
      %p40 = por %p38, %p39
      %p41 = scmp.ne.s32.totalorder %s33, %s36
      %p42 = scmp.eq.s32.totalorder %s23, 0
      %p43 = por %p41, %p42
      %p44 = scmp.ne.s32.totalorder %s33, %s36
      %p45 = scmp.eq.s32.totalorder %s28, 1
      %p46 = por %p44, %p45
      %p47 = scmp.ne.s32.totalorder %s36, %s37
      %p48 = scmp.eq.s32.totalorder %s28, 0
      %p49 = por %p47, %p48
      %p50 = scmp.ne.s32.totalorder %s36, %s37
      %p51 = scmp.eq.s32.totalorder %s29, 1
      %p52 = por %p50, %p51
      %p54 = scmp.ne.s32.totalorder %s37, %s53
      %p55 = scmp.eq.s32.totalorder %s29, 0
      %p56 = por %p54, %p55
      %s57 = ssub.s32 %s23, %s30
      %p58 = scmp.eq.s32.totalorder %s57, 0
      %s60 = sadd.s32 %s59, 1
      %s61 = scalar_select %p58, %s59, %s60
      %p64 = pneg %p58
      %p65 = scmp.eq.s32.totalorder %s23, 1
      %p66 = por %p64, %p65
      %p67 = scmp.ne.s32.totalorder %s59, %s62
      %p68 = scmp.eq.s32.totalorder %s23, 0
      %p69 = por %p67, %p68
      %p70 = scmp.ne.s32.totalorder %s59, %s62
      %p71 = scmp.eq.s32.totalorder %s28, 1
      %p72 = por %p70, %p71
      %p73 = scmp.ne.s32.totalorder %s62, %s63
      %p74 = scmp.eq.s32.totalorder %s28, 0
      %p75 = por %p73, %p74
      %p76 = scmp.ne.s32.totalorder %s62, %s63
      %p77 = scmp.eq.s32.totalorder %s29, 1
      %p78 = por %p76, %p77
      %p80 = scmp.ne.s32.totalorder %s63, %s79
      %p81 = scmp.eq.s32.totalorder %s29, 0
      %p82 = por %p80, %p81
      %s83 = ssub.s32 %s23, %s30
      %p84 = scmp.eq.s32.totalorder %s83, 0
      %s86 = sadd.s32 %s85, 1
      %s87 = scalar_select %p84, %s85, %s86
      %p90 = pneg %p84
      %p91 = scmp.eq.s32.totalorder %s23, 1
      %p92 = por %p90, %p91
      %p93 = scmp.ne.s32.totalorder %s85, %s88
      %p94 = scmp.eq.s32.totalorder %s23, 0
      %p95 = por %p93, %p94
      %p96 = scmp.ne.s32.totalorder %s85, %s88
      %p97 = scmp.eq.s32.totalorder %s28, 1
      %p98 = por %p96, %p97
      %p99 = scmp.ne.s32.totalorder %s88, %s89
      %p100 = scmp.eq.s32.totalorder %s28, 0
      %p101 = por %p99, %p100
      %p102 = scmp.ne.s32.totalorder %s88, %s89
      %p103 = scmp.eq.s32.totalorder %s29, 1
      %p104 = por %p102, %p103
      %p106 = scmp.ne.s32.totalorder %s89, %s105
      %p107 = scmp.eq.s32.totalorder %s29, 0
      %p108 = por %p106, %p107
      %s109 = ssub.s32 %s23, %s30
      %p110 = scmp.eq.s32.totalorder %s109, 0
      %s112 = sadd.s32 %s111, 1
      %s113 = scalar_select %p110, %s111, %s112
      %p116 = pneg %p110
      %p117 = scmp.eq.s32.totalorder %s23, 1
      %p118 = por %p116, %p117
      %p119 = scmp.ne.s32.totalorder %s111, %s114
      %p120 = scmp.eq.s32.totalorder %s23, 0
      %p121 = por %p119, %p120
      %p122 = scmp.ne.s32.totalorder %s111, %s114
      %p123 = scmp.eq.s32.totalorder %s28, 1
      %p124 = por %p122, %p123
      %p125 = scmp.ne.s32.totalorder %s114, %s115
      %p126 = scmp.eq.s32.totalorder %s28, 0
      %p127 = por %p125, %p126
      %p128 = scmp.ne.s32.totalorder %s114, %s115
      %p129 = scmp.eq.s32.totalorder %s29, 1
      %p130 = por %p128, %p129
      %p132 = scmp.ne.s32.totalorder %s115, %s131
      %p133 = scmp.eq.s32.totalorder %s29, 0
      %p134 = por %p132, %p133
      %s135 = ssub.s32 %s23, %s30
      %p136 = scmp.eq.s32.totalorder %s135, 0
      %s138 = sadd.s32 %s137, 1
      %s139 = scalar_select %p136, %s137, %s138
      %p142 = pneg %p136
      %p143 = scmp.eq.s32.totalorder %s23, 1
      %p144 = por %p142, %p143
      %p145 = scmp.ne.s32.totalorder %s137, %s140
      %p146 = scmp.eq.s32.totalorder %s23, 0
      %p147 = por %p145, %p146
      %p148 = scmp.ne.s32.totalorder %s137, %s140
      %p149 = scmp.eq.s32.totalorder %s28, 1
      %p150 = por %p148, %p149
      %p151 = scmp.ne.s32.totalorder %s140, %s141
      %p152 = scmp.eq.s32.totalorder %s28, 0
      %p153 = por %p151, %p152
      %p154 = scmp.ne.s32.totalorder %s140, %s141
      %p155 = scmp.eq.s32.totalorder %s29, 1
      %p156 = por %p154, %p155
      %p158 = scmp.ne.s32.totalorder %s141, %s157
      %p159 = scmp.eq.s32.totalorder %s29, 0
      %p160 = por %p158, %p159
      %s161 = ssub.s32 %s23, %s30
      %p162 = scmp.eq.s32.totalorder %s161, 0
      %s164 = sadd.s32 %s163, 1
      %s165 = scalar_select %p162, %s163, %s164
      %p168 = pneg %p162
      %p169 = scmp.eq.s32.totalorder %s23, 1
      %p170 = por %p168, %p169
      %p171 = scmp.ne.s32.totalorder %s163, %s166
      %p172 = scmp.eq.s32.totalorder %s23, 0
      %p173 = por %p171, %p172
      %p174 = scmp.ne.s32.totalorder %s163, %s166
      %p175 = scmp.eq.s32.totalorder %s28, 1
      %p176 = por %p174, %p175
      %p177 = scmp.ne.s32.totalorder %s166, %s167
      %p178 = scmp.eq.s32.totalorder %s28, 0
      %p179 = por %p177, %p178
      %p180 = scmp.ne.s32.totalorder %s166, %s167
      %p181 = scmp.eq.s32.totalorder %s29, 1
      %p182 = por %p180, %p181
      %p184 = scmp.ne.s32.totalorder %s167, %s183
      %p185 = scmp.eq.s32.totalorder %s29, 0
      %p186 = por %p184, %p185
      %s187 = ssub.s32 %s23, %s30
      %p188 = scmp.eq.s32.totalorder %s187, 0
      %s190 = sadd.s32 %s189, 1
      %s191 = scalar_select %p188, %s189, %s190
      %p194 = pneg %p188
      %p195 = scmp.eq.s32.totalorder %s23, 1
      %p196 = por %p194, %p195
      %p197 = scmp.ne.s32.totalorder %s189, %s192
      %p198 = scmp.eq.s32.totalorder %s23, 0
      %p199 = por %p197, %p198
      %p200 = scmp.ne.s32.totalorder %s189, %s192
      %p201 = scmp.eq.s32.totalorder %s28, 1
      %p202 = por %p200, %p201
      %p203 = scmp.ne.s32.totalorder %s192, %s193
      %p204 = scmp.eq.s32.totalorder %s28, 0
      %p205 = por %p203, %p204
      %p206 = scmp.ne.s32.totalorder %s192, %s193
      %p207 = scmp.eq.s32.totalorder %s29, 1
      %p208 = por %p206, %p207
      %p210 = scmp.ne.s32.totalorder %s193, %s209
      %p211 = scmp.eq.s32.totalorder %s29, 0
      %p212 = por %p210, %p211
      %s213 = ssub.s32 %s23, %s30
      %p214 = scmp.eq.s32.totalorder %s213, 0
      %s216 = sadd.s32 %s215, 1
      %s217 = scalar_select %p214, %s215, %s216
      %p220 = pneg %p214
      %p221 = scmp.eq.s32.totalorder %s23, 1
      %p222 = por %p220, %p221
      %p223 = scmp.ne.s32.totalorder %s215, %s218
      %p224 = scmp.eq.s32.totalorder %s23, 0
      %p225 = por %p223, %p224
      %p226 = scmp.ne.s32.totalorder %s215, %s218
      %p227 = scmp.eq.s32.totalorder %s28, 1
      %p228 = por %p226, %p227
      %p229 = scmp.ne.s32.totalorder %s218, %s219
      %p230 = scmp.eq.s32.totalorder %s28, 0
      %p231 = por %p229, %p230
      %p232 = scmp.ne.s32.totalorder %s218, %s219
      %p233 = scmp.eq.s32.totalorder %s29, 1
      %p234 = por %p232, %p233
      %p236 = scmp.ne.s32.totalorder %s219, %s235
      %p237 = scmp.eq.s32.totalorder %s29, 0
      %p238 = por %p236, %p237
      %s239 = ssub.s32 %s23, %s30
      %p240 = scmp.eq.s32.totalorder %s239, 0
      %s242 = sadd.s32 %s241, 1
      %s243 = scalar_select %p240, %s241, %s242
      %p246 = pneg %p240
      %p247 = scmp.eq.s32.totalorder %s23, 1
      %p248 = por %p246, %p247
      %p249 = scmp.ne.s32.totalorder %s241, %s244
      %p250 = scmp.eq.s32.totalorder %s23, 0
      %p251 = por %p249, %p250
      %p252 = scmp.ne.s32.totalorder %s241, %s244
      %p253 = scmp.eq.s32.totalorder %s28, 1
      %p254 = por %p252, %p253
      %p255 = scmp.ne.s32.totalorder %s244, %s245
      %p256 = scmp.eq.s32.totalorder %s28, 0
      %p257 = por %p255, %p256
      %p258 = scmp.ne.s32.totalorder %s244, %s245
      %p259 = scmp.eq.s32.totalorder %s29, 1
      %p260 = por %p258, %p259
      %p262 = scmp.ne.s32.totalorder %s245, %s261
      %p263 = scmp.eq.s32.totalorder %s29, 0
      %p264 = por %p262, %p263
      %p265 = scmp.le.s32.totalorder 1, %s23
      %p266 = scmp.lt.s32.totalorder %s23, 3
      %p267 = pnand %p265, %p266
      %p268 = pneg %p267
      // Predicated region
      $region9: #{tpu_custom_call.1} parent=5 // pred_check
        _
      $region10: #{tpu_custom_call.1} parent=5 // pred_check_branch
        %270 = sbr.rel (%p267) target = $region12
      $region11: #{tpu_custom_call.1} parent=5 // pred_region
        %s271 = ssub.s32 %s23, 1
      $region12: #{tpu_custom_call.1} parent=5 // pred_fallthru
        _
      %p272 = scmp.lt.s32.totalorder %s23, 2
      // Predicated region
      $region13: #{tpu_custom_call.1} parent=5 // pred_check
        %p273 = pneg %p272
      $region14: #{tpu_custom_call.1} parent=5 // pred_check_branch
        %275 = sbr.rel (%p273) target = $region16
      $region15: #{tpu_custom_call.1} parent=5 // pred_region
        // Predicated region
        $region17: #{tpu_custom_call.1} parent=15 // pred_check
          %p276 = pneg %p43
        $region18: #{tpu_custom_call.1} parent=15 // pred_check_branch
          %278 = sbr.rel (%p276) target = $region20
        $region19: #{tpu_custom_call.1} parent=15 // pred_region
          %p279 = scmp.lt.s32.totalorder %s23, 1
          %s280 = scalar_select %p279, %s23, 1
          %s281 = smul.addr %s280, 3
          %s282 = smul.addr %s281, 4
          %s283 = scalar_lea.vmem %s0, %s282
        $region20: #{tpu_custom_call.1} parent=15 // pred_fallthru
          _
        // Predicated region
        $region21: #{tpu_custom_call.1} parent=15 // pred_check
          %p284 = pneg %p69
        $region22: #{tpu_custom_call.1} parent=15 // pred_check_branch
          %286 = sbr.rel (%p284) target = $region24
        $region23: #{tpu_custom_call.1} parent=15 // pred_region
          %p287 = scmp.lt.s32.totalorder %s23, 1
          %s288 = scalar_select %p287, %s23, 1
          %s289 = smul.addr %s288, 5
          %s290 = smul.addr %s289, 8
          %s291 = scalar_lea.vmem %s1, %s290
        $region24: #{tpu_custom_call.1} parent=15 // pred_fallthru
          _
        // Predicated region
        $region25: #{tpu_custom_call.1} parent=15 // pred_check
          %p292 = pneg %p95
        $region26: #{tpu_custom_call.1} parent=15 // pred_check_branch
          %294 = sbr.rel (%p292) target = $region28
        $region27: #{tpu_custom_call.1} parent=15 // pred_region
          %p295 = scmp.lt.s32.totalorder %s23, 1
          %s296 = scalar_select %p295, %s23, 1
          %s297 = smul.addr %s296, 8
          %s298 = smul.addr %s297, 4
          %s299 = scalar_lea.vmem %s2, %s298
        $region28: #{tpu_custom_call.1} parent=15 // pred_fallthru
          _
        // Predicated region
        $region29: #{tpu_custom_call.1} parent=15 // pred_check
          %p300 = pneg %p121
        $region30: #{tpu_custom_call.1} parent=15 // pred_check_branch
          %302 = sbr.rel (%p300) target = $region32
        $region31: #{tpu_custom_call.1} parent=15 // pred_region
          %s303 = sand.u32 %s111, 1
          %s304 = scalar_lea.sflag [#allocation4], %s303
          %s305 = sand.u32 %s111, 1
          %s306 = smul.addr %s305, 32
          %s307 = scalar_lea.vmem [#allocation3], %s306
          %s309 = ssub.s32 512, 512
          %310 = vsyncadd %s304, %s309
          %s311 = smul.addr %s23, 8
          %s312 = smul.addr %s311, 64
          %s313 = scalar_lea.hbm %s3, %s312
          %s314 = sshll.u32 %s307, 4
          %s315 = int_to_ptr.vmem [resolvable:$true] %s314
          %320 = dma.hbm_to_vmem [thread:$0]  %s313, 512, %s315, %s304, 64, 64, 4
        $region32: #{tpu_custom_call.1} parent=15 // pred_fallthru
          _
        // Predicated region
        $region33: #{tpu_custom_call.1} parent=15 // pred_check
          %p321 = pneg %p147
        $region34: #{tpu_custom_call.1} parent=15 // pred_check_branch
          %323 = sbr.rel (%p321) target = $region36
        $region35: #{tpu_custom_call.1} parent=15 // pred_region
          %p324 = scmp.lt.s32.totalorder %s23, 1
          %s325 = scalar_select %p324, %s23, 1
          %s326 = smul.addr %s325, 2
          %s327 = scalar_lea.vmem %s4, %s326
        $region36: #{tpu_custom_call.1} parent=15 // pred_fallthru
          _
        // Predicated region
        $region37: #{tpu_custom_call.1} parent=15 // pred_check
          %p328 = pneg %p173
        $region38: #{tpu_custom_call.1} parent=15 // pred_check_branch
          %330 = sbr.rel (%p328) target = $region40
        $region39: #{tpu_custom_call.1} parent=15 // pred_region
          %p331 = scmp.lt.s32.totalorder %s23, 1
          %s332 = scalar_select %p331, %s23, 1
          %s333 = smul.addr %s332, 16
          %s334 = smul.addr %s333, 4
          %s335 = scalar_lea.vmem %s5, %s334
        $region40: #{tpu_custom_call.1} parent=15 // pred_fallthru
          _
        // Predicated region
        $region41: #{tpu_custom_call.1} parent=15 // pred_check
          %p336 = pneg %p199
        $region42: #{tpu_custom_call.1} parent=15 // pred_check_branch
          %338 = sbr.rel (%p336) target = $region44
        $region43: #{tpu_custom_call.1} parent=15 // pred_region
          %s339 = sand.u32 %s23, 1
          %s340 = scalar_lea.sflag [#allocation7], %s339
          %s341 = sand.u32 %s189, 1
          %s342 = smul.addr %s341, 32
          %s343 = scalar_lea.vmem [#allocation6], %s342
          %s345 = ssub.s32 512, 512
          %346 = vsyncadd %s340, %s345
          %s347 = smul.addr %s23, 8
          %s348 = smul.addr %s347, 64
          %s349 = scalar_lea.hbm %s6, %s348
          %s350 = sshll.u32 %s343, 4
          %s351 = int_to_ptr.vmem [resolvable:$true] %s350
          %356 = dma.hbm_to_vmem [thread:$0]  %s349, 512, %s351, %s340, 64, 64, 4
        $region44: #{tpu_custom_call.1} parent=15 // pred_fallthru
          _
        // Predicated region
        $region45: #{tpu_custom_call.1} parent=15 // pred_check
          %p357 = pneg %p225
        $region46: #{tpu_custom_call.1} parent=15 // pred_check_branch
          %359 = sbr.rel (%p357) target = $region48
        $region47: #{tpu_custom_call.1} parent=15 // pred_region
          %s360 = sand.u32 %s23, 1
          %s361 = scalar_lea.sflag [#allocation7], %s360
          %s362 = sand.u32 %s215, 1
          %s363 = smul.addr %s362, 2
          %s364 = scalar_lea.vmem [#allocation8], %s363
          %s366 = ssub.s32 32, 32
          %367 = vsyncadd %s361, %s366
          %s368 = smul.addr %s23, 2
          %s369 = smul.addr %s368, 16
          %s370 = scalar_lea.hbm %s7, %s369
          %s372 = sshll.u32 %s364, 4
          %s373 = int_to_ptr.vmem [resolvable:$true] %s372
          %375 = dma.hbm_to_vmem [thread:$0]  %s370, 32, %s373, %s361
        $region48: #{tpu_custom_call.1} parent=15 // pred_fallthru
          _
      $region16: #{tpu_custom_call.1} parent=5 // pred_fallthru
        _
      %p376 = scmp.le.s32.totalorder 1, %s23
      %p377 = scmp.lt.s32.totalorder %s23, 3
      %p378 = pnand %p376, %p377
      %p379 = pneg %p378
      // Predicated region
      $region49: #{tpu_custom_call.1} parent=5 // pred_check
        _
      $region50: #{tpu_custom_call.1} parent=5 // pred_check_branch
        %381 = sbr.rel (%p378) target = $region52
      $region51: #{tpu_custom_call.1} parent=5 // pred_region
        %s382 = ssub.s32 %s23, 1
        %s383 = sand.u32 %s114, 1
        %s384 = scalar_lea.sflag [#allocation4], %s383
        %s385 = sand.u32 %s114, 1
        %s386 = smul.addr %s385, 32
        %s387 = scalar_lea.vmem [#allocation3], %s386
        // Predicated region
        $region53: #{tpu_custom_call.1} parent=51 // pred_check
          %p388 = pneg %p127
        $region54: #{tpu_custom_call.1} parent=51 // pred_check_branch
          %390 = sbr.rel (%p388) target = $region56
        $region55: #{tpu_custom_call.1} parent=51 // pred_region
          %391 = dma.done %s384, 512
        $region56: #{tpu_custom_call.1} parent=51 // pred_fallthru
          _
        %s392 = sand.u32 %s28, 1
        %s393 = scalar_lea.sflag [#allocation7], %s392
        %s394 = sand.u32 %s192, 1
        %s395 = smul.addr %s394, 32
        %s396 = scalar_lea.vmem [#allocation6], %s395
        // Predicated region
        $region57: #{tpu_custom_call.1} parent=51 // pred_check
          %p397 = pneg %p205
        $region58: #{tpu_custom_call.1} parent=51 // pred_check_branch
          %399 = sbr.rel (%p397) target = $region60
        $region59: #{tpu_custom_call.1} parent=51 // pred_region
          %400 = dma.done %s393, 512
        $region60: #{tpu_custom_call.1} parent=51 // pred_fallthru
          _
        %s401 = sand.u32 %s28, 1
        %s402 = scalar_lea.sflag [#allocation7], %s401
        %s403 = sand.u32 %s218, 1
        %s404 = smul.addr %s403, 2
        %s405 = scalar_lea.vmem [#allocation8], %s404
        // Predicated region
        $region61: #{tpu_custom_call.1} parent=51 // pred_check
          %p406 = pneg %p231
        $region62: #{tpu_custom_call.1} parent=51 // pred_check_branch
          %408 = sbr.rel (%p406) target = $region64
        $region63: #{tpu_custom_call.1} parent=51 // pred_region
          %409 = dma.done %s402, 32
        $region64: #{tpu_custom_call.1} parent=51 // pred_fallthru
          _
        %p410 = scmp.lt.s32.totalorder %s28, 1
        %s411 = scalar_select %p410, %s28, 1
        %s412 = smul.addr %s411, 3
        %s413 = smul.addr %s412, 4
        %s414 = scalar_lea.vmem %s0, %s413
        %p415 = pneg %p49
        %p416 = pneg %p46
        %p417 = scmp.lt.s32.totalorder %s28, 1
        %s418 = scalar_select %p417, %s28, 1
        %s419 = smul.addr %s418, 5
        %s420 = smul.addr %s419, 8
        %s421 = scalar_lea.vmem %s1, %s420
        %p422 = pneg %p75
        %p423 = pneg %p72
        %p424 = scmp.lt.s32.totalorder %s28, 1
        %s425 = scalar_select %p424, %s28, 1
        %s426 = smul.addr %s425, 8
        %s427 = smul.addr %s426, 4
        %s428 = scalar_lea.vmem %s2, %s427
        %p429 = pneg %p101
        %p430 = pneg %p98
        %s431 = sand.u32 %s114, 1
        %s432 = scalar_lea.sflag [#allocation4], %s431
        %s433 = sand.u32 %s114, 1
        %s434 = smul.addr %s433, 32
        %s435 = scalar_lea.vmem [#allocation3], %s434
        %p436 = pneg %p127
        %p437 = pneg %p124
        %p438 = scmp.lt.s32.totalorder %s28, 1
        %s439 = scalar_select %p438, %s28, 1
        %s440 = smul.addr %s439, 2
        %s441 = scalar_lea.vmem %s4, %s440
        %p442 = pneg %p153
        %p443 = pneg %p150
        %p444 = scmp.lt.s32.totalorder %s28, 1
        %s445 = scalar_select %p444, %s28, 1
        %s446 = smul.addr %s445, 16
        %s447 = smul.addr %s446, 4
        %s448 = scalar_lea.vmem %s5, %s447
        %p449 = pneg %p179
        %p450 = pneg %p176
        %s451 = sand.u32 %s28, 1
        %s452 = scalar_lea.sflag [#allocation7], %s451
        %s453 = sand.u32 %s192, 1
        %s454 = smul.addr %s453, 32
        %s455 = scalar_lea.vmem [#allocation6], %s454
        %p456 = pneg %p205
        %p457 = pneg %p202
        %s458 = sand.u32 %s28, 1
        %s459 = scalar_lea.sflag [#allocation7], %s458
        %s460 = sand.u32 %s218, 1
        %s461 = smul.addr %s460, 2
        %s462 = scalar_lea.vmem [#allocation8], %s461
        %p463 = pneg %p231
        %p464 = pneg %p228
        %p465 = pneg %p257
        %p466 = pneg %p254
        %s467 = sand.u32 %s244, 1
        %s468 = scalar_lea.sflag [#allocation5], %s467
        %s469 = sand.u32 %s244, 1
        %s470 = smul.addr %s469, 2
        %s471 = scalar_lea.vmem [#allocation9], %s470
        %p472 = scmp.lt.s32.totalorder %s28, 1
        %s473 = scalar_select %p472, %s28, 1
        %s474 = smul.addr %s473, 3
        %s475 = smul.addr %s474, 4
        %s476 = scalar_lea.vmem %s0, %s475
        %p477 = scmp.lt.s32.totalorder %s28, 1
        %s478 = scalar_select %p477, %s28, 1
        %s479 = smul.addr %s478, 5
        %s480 = smul.addr %s479, 8
        %s481 = scalar_lea.vmem %s1, %s480
        %p482 = scmp.lt.s32.totalorder %s28, 1
        %s483 = scalar_select %p482, %s28, 1
        %s484 = smul.addr %s483, 8
        %s485 = smul.addr %s484, 4
        %s486 = scalar_lea.vmem %s2, %s485
        %p487 = scmp.lt.s32.totalorder %s28, 1
        %s488 = scalar_select %p487, %s28, 1
        %s489 = smul.addr %s488, 2
        %s490 = scalar_lea.vmem %s4, %s489
        %p491 = scmp.lt.s32.totalorder %s28, 1
        %s492 = scalar_select %p491, %s28, 1
        %s493 = smul.addr %s492, 16
        %s494 = smul.addr %s493, 4
        %s495 = scalar_lea.vmem %s5, %s494
        %v497 = vlaneseq
        %v498 = vshrl.u32 %v497, 7
        %v499 = vlaneseq
        %v500 = vand.u32 %v499, 127
        %vm501 = vcmp.lt.s32.totalorder %v498, 2
        %vm502 = vcmp.lt.s32.totalorder %v500, 32
        %vm503 = vmxor %vm501, %vm502
        %vm504 = vmxor %vm503, 1
        %v505 = vsel %vm504, 1, 0
        %v506 = vcvt.s32.f32 %v505
        %v507 = vld [vmem:[%s486] sm:$0xff]
        %v508 = vld [vmem:[%s486 + $0x8] sm:$0xff]
        %v509 = vld [vmem:[%s486 + $0x10] sm:$0xff]
        %v510 = vld [vmem:[%s486 + $0x18] sm:$0xff]
        %v511 = vld [vmem:[%s387] sm:$0xf]
        %v512 = vld [vmem:[%s387 + $0x4] sm:$0xf]
        %v513 = vld [vmem:[%s387 + $0x8] sm:$0xf]
        %v514 = vld [vmem:[%s387 + $0xc] sm:$0xf]
        %v515 = vld [vmem:[%s387 + $0x10] sm:$0xf]
        %v516 = vld [vmem:[%s387 + $0x14] sm:$0xf]
        %v517 = vld [vmem:[%s387 + $0x18] sm:$0xf]
        %v518 = vld [vmem:[%s387 + $0x1c] sm:$0xf]
        %v519 = vld [vmem:[%s490] sm:$0x3]
        %v520 = vld [vmem:[%s476] sm:$0xf]
        %v521 = vld [vmem:[%s476 + $0x4] sm:$0xf]
        %v522 = vld [vmem:[%s476 + $0x8] sm:$0x3]
        %v524 = vlaneseq
        %v525 = vshrl.u32 %v524, 7
        %v526 = vsub.s32 0, %v525
        %v527 = vrot.slane %v519, %v526
        %v528 = vlaneseq
        %v529 = vshrl.u32 %v528, 7
        %v530 = vsub.s32 1, %v529
        %v531 = vrot.slane %v519, %v530
        %v537 = vunpack.c.l.b16 %v520
        %v538 = vunpack.c.l.b16 %v521
        %v539 = vunpack.c.l.b16 %v522
        %v540 = vpack.c.b16 %v538, %v537
        %v541 = vpack.c.b16 %v539, %v539
        %v546 = vunpack.c.l.b16 %v507
        %v547 = vunpack.c.h.b16 %v507
        %v548 = vunpack.c.l.b16 %v508
        %v549 = vunpack.c.h.b16 %v508
        %v550 = vunpack.c.l.b16 %v509
        %v551 = vunpack.c.h.b16 %v509
        %v552 = vunpack.c.l.b16 %v510
        %v553 = vunpack.c.h.b16 %v510
        %v554 = vpack.c.b16 %v548, %v546
        %v555 = vpack.c.b16 %v549, %v547
        %v556 = vpack.c.b16 %v552, %v550
        %v557 = vpack.c.b16 %v553, %v551
        %vm562 = vcmask 261120
        %v564 = vsel %vm562, %v540, 0
        %v567 = vsel %vm562, %v541, 0
        %569 = vmatprep.subr.bf16.mxu0 0
        %570 = vmatpush1.bf16.msra.mxu0 0
        %571 = vmatprep.subr.bf16.mxu0 0
        %572 = vmatpush1.bf16.msra.mxu0 0
        %573 = vmatprep.subr.bf16.mxu0 0
        %574 = vmatpush1.bf16.msra.mxu0 0
        %575 = vmatprep.subr.bf16.mxu0 0
        %576 = vmatpush1.bf16.msra.mxu0 0
        %577 = vmatprep.subr.bf16.mxu0 0
        %578 = vmatpush1.bf16.msra.mxu0 0
        %579 = vmatprep.subr.bf16.mxu0 0
        %580 = vmatpush1.bf16.msra.mxu0 0
        %581 = vmatprep.subr.bf16.mxu0 %v557
        %582 = vmatpush1.bf16.msra.mxu0 %v556
        %583 = vmatprep.subr.bf16.mxu0 %v555
        %584 = vmatpush1.bf16.msra.mxu0 %v554
        %585 = vmatprep.subr.bf16.mxu0 0
        %586 = vmatpush2.bf16.msra.mxu0 0
        %587 = vmatprep.subr.bf16.mxu0 0
        %588 = vmatpush2.bf16.msra.mxu0 0
        %589 = vmatprep.subr.bf16.mxu0 0
        %590 = vmatpush2.bf16.msra.mxu0 0
        %591 = vmatprep.subr.bf16.mxu0 0
        %592 = vmatpush2.bf16.msra.mxu0 0
        %593 = vmatprep.subr.bf16.mxu0 0
        %594 = vmatpush2.bf16.msra.mxu0 0
        %595 = vmatprep.subr.bf16.mxu0 0
        %596 = vmatpush2.bf16.msra.mxu0 0
        %597 = vmatprep.subr.bf16.mxu0 0
        %598 = vmatpush2.bf16.msra.mxu0 0
        %599 = vmatprep.subr.bf16.mxu0 0
        %600 = vmatpush2.bf16.msra.mxu0 0
        %601 = vmatprep.mubr.bf16.mxu0 0
        %602 = vmatmul.mubr.bf16.gmra.mxu0 %v564
        %v603 = vpop.f32.mrf.mxu0
        %v604 = vadd.f32 %v527, %v603
        %v605 = vpop.f32.mrf.mxu0
        %v606 = vadd.f32 %v531, %v605
        %v607 = vpop.f32.mrf.mxu0
        %v608 = vadd.f32 %v527, %v607
        %v609 = vpop.f32.mrf.mxu0
        %v610 = vadd.f32 %v531, %v609
        %611 = vmatprep.mubr.bf16.mxu0 0
        %612 = vmatmul.mubr.bf16.gmra.mxu0 %v567
        %v613 = vpop.f32.mrf.mxu0
        %v614 = vadd.f32 %v527, %v613
        %v615 = vpop.f32.mrf.mxu0
        %v616 = vadd.f32 %v531, %v615
        %v617 = vpop.f32.mrf.mxu0
        %v618 = vpop.f32.mrf.mxu0
        %619 = vdwg.mxu0
        %vm620 = vcmask 1041408
        %v621 = vsel %vm620, %v604, %v616
        %v622 = vmul.f32 %v506, 0.0
        %v623 = vpack.c.bf16 %v622, %v622
        %v632 = vunpack.c.l.b16 %v511
        %v633 = vunpack.c.l.b16 %v512
        %v634 = vunpack.c.l.b16 %v513
        %v635 = vunpack.c.l.b16 %v514
        %v636 = vunpack.c.l.b16 %v515
        %v637 = vunpack.c.l.b16 %v516
        %v638 = vunpack.c.l.b16 %v517
        %v639 = vunpack.c.l.b16 %v518
        %v640 = vpack.c.b16 %v633, %v632
        %v641 = vpack.c.b16 %v635, %v634
        %v642 = vpack.c.b16 %v637, %v636
        %v643 = vpack.c.b16 %v639, %v638
        %vm648 = vcmask 523264
        %v650 = vsel %vm648, %v623, 0
        %652 = vmatprep.subr.bf16.mxu0 0
        %653 = vmatpush1.bf16.msra.mxu0 0
        %654 = vmatprep.subr.bf16.mxu0 0
        %655 = vmatpush1.bf16.msra.mxu0 0
        %656 = vmatprep.subr.bf16.mxu0 0
        %657 = vmatpush1.bf16.msra.mxu0 0
        %658 = vmatprep.subr.bf16.mxu0 0
        %659 = vmatpush1.bf16.msra.mxu0 0
        %660 = vmatprep.subr.bf16.mxu0 0
        %661 = vmatpush1.bf16.msra.mxu0 %v643
        %662 = vmatprep.subr.bf16.mxu0 0
        %663 = vmatpush1.bf16.msra.mxu0 %v642
        %664 = vmatprep.subr.bf16.mxu0 0
        %665 = vmatpush1.bf16.msra.mxu0 %v641
        %666 = vmatprep.subr.bf16.mxu0 0
        %667 = vmatpush1.bf16.msra.mxu0 %v640
        %668 = vmatprep.subr.bf16.mxu0 0
        %669 = vmatpush2.bf16.msra.mxu0 0
        %670 = vmatprep.subr.bf16.mxu0 0
        %671 = vmatpush2.bf16.msra.mxu0 0
        %672 = vmatprep.subr.bf16.mxu0 0
        %673 = vmatpush2.bf16.msra.mxu0 0
        %674 = vmatprep.subr.bf16.mxu0 0
        %675 = vmatpush2.bf16.msra.mxu0 0
        %676 = vmatprep.subr.bf16.mxu0 0
        %677 = vmatpush2.bf16.msra.mxu0 0
        %678 = vmatprep.subr.bf16.mxu0 0
        %679 = vmatpush2.bf16.msra.mxu0 0
        %680 = vmatprep.subr.bf16.mxu0 0
        %681 = vmatpush2.bf16.msra.mxu0 0
        %682 = vmatprep.subr.bf16.mxu0 0
        %683 = vmatpush2.bf16.msra.mxu0 0
        %684 = vmatprep.mubr.bf16.mxu0 0
        %685 = vmatmul.mubr.bf16.gmra.mxu0 %v650
        %v686 = vpop.f32.mrf.mxu0
        %v687 = vadd.f32 0.0, %v686
        %v688 = vpop.f32.mrf.mxu0
        %v689 = vpop.f32.mrf.mxu0
        %v690 = vpop.f32.mrf.mxu0
        %691 = vdwg.mxu0
        %v692 = vadd.f32 %v621, %v687
        %v693 = vxor.u32 %v692, 2147483648
        %v694 = vmul.f32 %v693, 1.442695
        %v695 = vpow.pop %v694
        %v696 = vadd.f32 %v695, 1.0
        %v697 = vrcp.pop %v696
        %v698 = vmul.f32 1.0, %v697
        %v699 = vtanh.pop %v692
        %v700 = vmul.f32 %v698, 0.0
        %702 = vrot.lane.b32.xlu0 %v699, 64
        %v703 = vpop.permute.xlu0 %702
        %v705 = vmul.f32 %v698, %v703
        %707 = vrot.lane.b32.xlu0 %v705, 32
        %v708 = vpop.permute.xlu0 %707
        %v710 = vadd.f32 %v700, %v708
        %v711 = vtanh.pop %v710
        %713 = vrot.lane.b32.xlu0 %v711, 64
        %v714 = vpop.permute.xlu0 %713
        %v716 = vmul.f32 %v698, %v714
        %v717 = vld [vmem:[%s481] sm:$0xf]
        %719 = vrot.lane.b32.xlu0 %v716, 32
        %v720 = vpop.permute.xlu0 %719
        %v722 = vmul.f32 %v717, %v720
        %v723 = vsub.f32 1.0, %v717
        %v724 = vmul.f32 %v723, 0.0
        %v725 = vadd.f32 %v722, %v724
        %727 = vrot.lane.b32.xlu0 %v710, 96
        %v728 = vpop.permute.xlu0 %727
        %v730 = vmul.f32 %v717, %v728
        %v731 = vadd.f32 %v730, %v724
        %vm732 = vcmask 254976
        %733 = vst.msk [vmem:[#allocation2] sm:$0x3] %vm732, %v722
        %735 = vrot.lane.b32.xlu0 %v722, 32
        %v736 = vpop.permute.xlu0 %735
        %vm738 = vcmask 519426
        %739 = vst.msk [vmem:[#allocation2 + $0x10] sm:$0xc] %vm738, %v736
        %v741 = vrot.slane %v604, 2
        %v744 = vrot.slane %v616, 6
        %v746 = vsel %vm620, %v741, %v744
        %748 = vrot.lane.b32.xlu0 %v725, 32
        %v749 = vpop.permute.xlu0 %748
        %v751 = vsel %vm562, %v725, %v749
        %v752 = vmul.f32 %v751, %v506
        %v753 = vpack.c.bf16 %v752, %v752
        %v755 = vsel %vm648, %v753, 0
        %757 = vmatprep.subr.bf16.mxu0 0
        %758 = vmatpush1.bf16.msra.mxu0 0
        %759 = vmatprep.subr.bf16.mxu0 0
        %760 = vmatpush1.bf16.msra.mxu0 0
        %761 = vmatprep.subr.bf16.mxu0 0
        %762 = vmatpush1.bf16.msra.mxu0 0
        %763 = vmatprep.subr.bf16.mxu0 0
        %764 = vmatpush1.bf16.msra.mxu0 0
        %765 = vmatprep.subr.bf16.mxu0 0
        %766 = vmatpush1.bf16.msra.mxu0 %v643
        %767 = vmatprep.subr.bf16.mxu0 0
        %768 = vmatpush1.bf16.msra.mxu0 %v642
        %769 = vmatprep.subr.bf16.mxu0 0
        %770 = vmatpush1.bf16.msra.mxu0 %v641
        %771 = vmatprep.subr.bf16.mxu0 0
        %772 = vmatpush1.bf16.msra.mxu0 %v640
        %773 = vmatprep.subr.bf16.mxu0 0
        %774 = vmatpush2.bf16.msra.mxu0 0
        %775 = vmatprep.subr.bf16.mxu0 0
        %776 = vmatpush2.bf16.msra.mxu0 0
        %777 = vmatprep.subr.bf16.mxu0 0
        %778 = vmatpush2.bf16.msra.mxu0 0
        %779 = vmatprep.subr.bf16.mxu0 0
        %780 = vmatpush2.bf16.msra.mxu0 0
        %781 = vmatprep.subr.bf16.mxu0 0
        %782 = vmatpush2.bf16.msra.mxu0 0
        %783 = vmatprep.subr.bf16.mxu0 0
        %784 = vmatpush2.bf16.msra.mxu0 0
        %785 = vmatprep.subr.bf16.mxu0 0
        %786 = vmatpush2.bf16.msra.mxu0 0
        %787 = vmatprep.subr.bf16.mxu0 0
        %788 = vmatpush2.bf16.msra.mxu0 0
        %789 = vmatprep.mubr.bf16.mxu0 0
        %790 = vmatmul.mubr.bf16.gmra.mxu0 %v755
        %v791 = vpop.f32.mrf.mxu0
        %v792 = vadd.f32 0.0, %v791
        %v793 = vpop.f32.mrf.mxu0
        %v794 = vpop.f32.mrf.mxu0
        %v795 = vpop.f32.mrf.mxu0
        %796 = vdwg.mxu0
        %v797 = vadd.f32 %v746, %v792
        %v798 = vxor.u32 %v797, 2147483648
        %v799 = vmul.f32 %v798, 1.442695
        %v800 = vpow.pop %v799
        %v801 = vadd.f32 %v800, 1.0
        %v802 = vrcp.pop %v801
        %v803 = vmul.f32 1.0, %v802
        %v804 = vtanh.pop %v797
        %806 = vrot.lane.b32.xlu0 %v731, 32
        %v807 = vpop.permute.xlu0 %806
        %v809 = vmul.f32 %v803, %v807
        %811 = vrot.lane.b32.xlu0 %v804, 64
        %v812 = vpop.permute.xlu0 %811
        %v814 = vmul.f32 %v803, %v812
        %816 = vrot.lane.b32.xlu0 %v814, 32
        %v817 = vpop.permute.xlu0 %816
        %v819 = vadd.f32 %v809, %v817
        %v820 = vtanh.pop %v819
        %822 = vrot.lane.b32.xlu0 %v820, 64
        %v823 = vpop.permute.xlu0 %822
        %v825 = vmul.f32 %v803, %v823
        %v826 = vld [vmem:[%s481 + $0x4] sm:$0xf]
        %828 = vrot.lane.b32.xlu0 %v825, 32
        %v829 = vpop.permute.xlu0 %828
        %v831 = vmul.f32 %v826, %v829
        %v832 = vsub.f32 1.0, %v826
        %v833 = vmul.f32 %v832, %v725
        %v834 = vadd.f32 %v831, %v833
        %836 = vrot.lane.b32.xlu0 %v819, 96
        %v837 = vpop.permute.xlu0 %836
        %v839 = vmul.f32 %v826, %v837
        %v840 = vmul.f32 %v832, %v731
        %v841 = vadd.f32 %v839, %v840
        %842 = vst.msk [vmem:[#allocation2 + $0x2] sm:$0x3] %vm732, %v831
        %844 = vrot.lane.b32.xlu0 %v831, 32
        %v845 = vpop.permute.xlu0 %844
        %847 = vst.msk [vmem:[#allocation2 + $0xe] sm:$0xc] %vm738, %v845
        %v848 = vrot.slane %v604, 4
        %v851 = vrot.slane %v610, 4
        %v853 = vsel %vm620, %v848, %v851
        %855 = vrot.lane.b32.xlu0 %v834, 32
        %v856 = vpop.permute.xlu0 %855
        %v858 = vsel %vm562, %v834, %v856
        %v859 = vmul.f32 %v858, %v506
        %v860 = vpack.c.bf16 %v859, %v859
        %v862 = vsel %vm648, %v860, 0
        %864 = vmatprep.subr.bf16.mxu0 0
        %865 = vmatpush1.bf16.msra.mxu0 0
        %866 = vmatprep.subr.bf16.mxu0 0
        %867 = vmatpush1.bf16.msra.mxu0 0
        %868 = vmatprep.subr.bf16.mxu0 0
        %869 = vmatpush1.bf16.msra.mxu0 0
        %870 = vmatprep.subr.bf16.mxu0 0
        %871 = vmatpush1.bf16.msra.mxu0 0
        %872 = vmatprep.subr.bf16.mxu0 0
        %873 = vmatpush1.bf16.msra.mxu0 %v643
        %874 = vmatprep.subr.bf16.mxu0 0
        %875 = vmatpush1.bf16.msra.mxu0 %v642
        %876 = vmatprep.subr.bf16.mxu0 0
        %877 = vmatpush1.bf16.msra.mxu0 %v641
        %878 = vmatprep.subr.bf16.mxu0 0
        %879 = vmatpush1.bf16.msra.mxu0 %v640
        %880 = vmatprep.subr.bf16.mxu0 0
        %881 = vmatpush2.bf16.msra.mxu0 0
        %882 = vmatprep.subr.bf16.mxu0 0
        %883 = vmatpush2.bf16.msra.mxu0 0
        %884 = vmatprep.subr.bf16.mxu0 0
        %885 = vmatpush2.bf16.msra.mxu0 0
        %886 = vmatprep.subr.bf16.mxu0 0
        %887 = vmatpush2.bf16.msra.mxu0 0
        %888 = vmatprep.subr.bf16.mxu0 0
        %889 = vmatpush2.bf16.msra.mxu0 0
        %890 = vmatprep.subr.bf16.mxu0 0
        %891 = vmatpush2.bf16.msra.mxu0 0
        %892 = vmatprep.subr.bf16.mxu0 0
        %893 = vmatpush2.bf16.msra.mxu0 0
        %894 = vmatprep.subr.bf16.mxu0 0
        %895 = vmatpush2.bf16.msra.mxu0 0
        %896 = vmatprep.mubr.bf16.mxu0 0
        %897 = vmatmul.mubr.bf16.gmra.mxu0 %v862
        %v898 = vpop.f32.mrf.mxu0
        %v899 = vadd.f32 0.0, %v898
        %v900 = vpop.f32.mrf.mxu0
        %v901 = vpop.f32.mrf.mxu0
        %v902 = vpop.f32.mrf.mxu0
        %903 = vdwg.mxu0
        %v904 = vadd.f32 %v853, %v899
        %v905 = vxor.u32 %v904, 2147483648
        %v906 = vmul.f32 %v905, 1.442695
        %v907 = vpow.pop %v906
        %v908 = vadd.f32 %v907, 1.0
        %v909 = vrcp.pop %v908
        %v910 = vmul.f32 1.0, %v909
        %v911 = vtanh.pop %v904
        %913 = vrot.lane.b32.xlu0 %v841, 32
        %v914 = vpop.permute.xlu0 %913
        %v916 = vmul.f32 %v910, %v914
        %918 = vrot.lane.b32.xlu0 %v911, 64
        %v919 = vpop.permute.xlu0 %918
        %v921 = vmul.f32 %v910, %v919
        %923 = vrot.lane.b32.xlu0 %v921, 32
        %v924 = vpop.permute.xlu0 %923
        %v926 = vadd.f32 %v916, %v924
        %v927 = vtanh.pop %v926
        %929 = vrot.lane.b32.xlu0 %v927, 64
        %v930 = vpop.permute.xlu0 %929
        %v932 = vmul.f32 %v910, %v930
        %v933 = vld [vmem:[%s481 + $0x8] sm:$0xf]
        %935 = vrot.lane.b32.xlu0 %v932, 32
        %v936 = vpop.permute.xlu0 %935
        %v938 = vmul.f32 %v933, %v936
        %v939 = vsub.f32 1.0, %v933
        %v940 = vmul.f32 %v939, %v834
        %v941 = vadd.f32 %v938, %v940
        %943 = vrot.lane.b32.xlu0 %v926, 96
        %v944 = vpop.permute.xlu0 %943
        %v946 = vmul.f32 %v933, %v944
        %v947 = vmul.f32 %v939, %v841
        %v948 = vadd.f32 %v946, %v947
        %949 = vst.msk [vmem:[#allocation2 + $0x4] sm:$0x3] %vm732, %v938
        %951 = vrot.lane.b32.xlu0 %v938, 32
        %v952 = vpop.permute.xlu0 %951
        %954 = vst.msk [vmem:[#allocation2 + $0xc] sm:$0xc] %vm738, %v952
        %v955 = vrot.slane %v604, 6
        %v957 = vrot.slane %v610, 2
        %v959 = vsel %vm620, %v955, %v957
        %961 = vrot.lane.b32.xlu0 %v941, 32
        %v962 = vpop.permute.xlu0 %961
        %v964 = vsel %vm562, %v941, %v962
        %v965 = vmul.f32 %v964, %v506
        %v966 = vpack.c.bf16 %v965, %v965
        %v968 = vsel %vm648, %v966, 0
        %970 = vmatprep.subr.bf16.mxu0 0
        %971 = vmatpush1.bf16.msra.mxu0 0
        %972 = vmatprep.subr.bf16.mxu0 0
        %973 = vmatpush1.bf16.msra.mxu0 0
        %974 = vmatprep.subr.bf16.mxu0 0
        %975 = vmatpush1.bf16.msra.mxu0 0
        %976 = vmatprep.subr.bf16.mxu0 0
        %977 = vmatpush1.bf16.msra.mxu0 0
        %978 = vmatprep.subr.bf16.mxu0 0
        %979 = vmatpush1.bf16.msra.mxu0 %v643
        %980 = vmatprep.subr.bf16.mxu0 0
        %981 = vmatpush1.bf16.msra.mxu0 %v642
        %982 = vmatprep.subr.bf16.mxu0 0
        %983 = vmatpush1.bf16.msra.mxu0 %v641
        %984 = vmatprep.subr.bf16.mxu0 0
        %985 = vmatpush1.bf16.msra.mxu0 %v640
        %986 = vmatprep.subr.bf16.mxu0 0
        %987 = vmatpush2.bf16.msra.mxu0 0
        %988 = vmatprep.subr.bf16.mxu0 0
        %989 = vmatpush2.bf16.msra.mxu0 0
        %990 = vmatprep.subr.bf16.mxu0 0
        %991 = vmatpush2.bf16.msra.mxu0 0
        %992 = vmatprep.subr.bf16.mxu0 0
        %993 = vmatpush2.bf16.msra.mxu0 0
        %994 = vmatprep.subr.bf16.mxu0 0
        %995 = vmatpush2.bf16.msra.mxu0 0
        %996 = vmatprep.subr.bf16.mxu0 0
        %997 = vmatpush2.bf16.msra.mxu0 0
        %998 = vmatprep.subr.bf16.mxu0 0
        %999 = vmatpush2.bf16.msra.mxu0 0
        %1000 = vmatprep.subr.bf16.mxu0 0
        %1001 = vmatpush2.bf16.msra.mxu0 0
        %1002 = vmatprep.mubr.bf16.mxu0 0
        %1003 = vmatmul.mubr.bf16.gmra.mxu0 %v968
        %v1004 = vpop.f32.mrf.mxu0
        %v1005 = vadd.f32 0.0, %v1004
        %v1006 = vpop.f32.mrf.mxu0
        %v1007 = vpop.f32.mrf.mxu0
        %v1008 = vpop.f32.mrf.mxu0
        %1009 = vdwg.mxu0
        %v1010 = vadd.f32 %v959, %v1005
        %v1011 = vxor.u32 %v1010, 2147483648
        %v1012 = vmul.f32 %v1011, 1.442695
        %v1013 = vpow.pop %v1012
        %v1014 = vadd.f32 %v1013, 1.0
        %v1015 = vrcp.pop %v1014
        %v1016 = vmul.f32 1.0, %v1015
        %v1017 = vtanh.pop %v1010
        %1019 = vrot.lane.b32.xlu0 %v948, 32
        %v1020 = vpop.permute.xlu0 %1019
        %v1022 = vmul.f32 %v1016, %v1020
        %1024 = vrot.lane.b32.xlu0 %v1017, 64
        %v1025 = vpop.permute.xlu0 %1024
        %v1027 = vmul.f32 %v1016, %v1025
        %1029 = vrot.lane.b32.xlu0 %v1027, 32
        %v1030 = vpop.permute.xlu0 %1029
        %v1032 = vadd.f32 %v1022, %v1030
        %v1033 = vtanh.pop %v1032
        %1035 = vrot.lane.b32.xlu0 %v1033, 64
        %v1036 = vpop.permute.xlu0 %1035
        %v1038 = vmul.f32 %v1016, %v1036
        %v1039 = vld [vmem:[%s481 + $0xc] sm:$0xf]
        %1041 = vrot.lane.b32.xlu0 %v1038, 32
        %v1042 = vpop.permute.xlu0 %1041
        %v1044 = vmul.f32 %v1039, %v1042
        %v1045 = vsub.f32 1.0, %v1039
        %v1046 = vmul.f32 %v1045, %v941
        %v1047 = vadd.f32 %v1044, %v1046
        %1049 = vrot.lane.b32.xlu0 %v1032, 96
        %v1050 = vpop.permute.xlu0 %1049
        %v1052 = vmul.f32 %v1039, %v1050
        %v1053 = vmul.f32 %v1045, %v948
        %v1054 = vadd.f32 %v1052, %v1053
        %1055 = vst.msk [vmem:[#allocation2 + $0x6] sm:$0x3] %vm732, %v1044
        %1057 = vrot.lane.b32.xlu0 %v1044, 32
        %v1058 = vpop.permute.xlu0 %1057
        %1060 = vst.msk [vmem:[#allocation2 + $0xa] sm:$0xc] %vm738, %v1058
        %v1061 = vsel %vm620, %v608, %v610
        %1063 = vrot.lane.b32.xlu0 %v1047, 32
        %v1064 = vpop.permute.xlu0 %1063
        %v1066 = vsel %vm562, %v1047, %v1064
        %v1067 = vmul.f32 %v1066, %v506
        %v1068 = vpack.c.bf16 %v1067, %v1067
        %v1070 = vsel %vm648, %v1068, 0
        %1072 = vmatprep.subr.bf16.mxu0 0
        %1073 = vmatpush1.bf16.msra.mxu0 0
        %1074 = vmatprep.subr.bf16.mxu0 0
        %1075 = vmatpush1.bf16.msra.mxu0 0
        %1076 = vmatprep.subr.bf16.mxu0 0
        %1077 = vmatpush1.bf16.msra.mxu0 0
        %1078 = vmatprep.subr.bf16.mxu0 0
        %1079 = vmatpush1.bf16.msra.mxu0 0
        %1080 = vmatprep.subr.bf16.mxu0 0
        %1081 = vmatpush1.bf16.msra.mxu0 %v643
        %1082 = vmatprep.subr.bf16.mxu0 0
        %1083 = vmatpush1.bf16.msra.mxu0 %v642
        %1084 = vmatprep.subr.bf16.mxu0 0
        %1085 = vmatpush1.bf16.msra.mxu0 %v641
        %1086 = vmatprep.subr.bf16.mxu0 0
        %1087 = vmatpush1.bf16.msra.mxu0 %v640
        %1088 = vmatprep.subr.bf16.mxu0 0
        %1089 = vmatpush2.bf16.msra.mxu0 0
        %1090 = vmatprep.subr.bf16.mxu0 0
        %1091 = vmatpush2.bf16.msra.mxu0 0
        %1092 = vmatprep.subr.bf16.mxu0 0
        %1093 = vmatpush2.bf16.msra.mxu0 0
        %1094 = vmatprep.subr.bf16.mxu0 0
        %1095 = vmatpush2.bf16.msra.mxu0 0
        %1096 = vmatprep.subr.bf16.mxu0 0
        %1097 = vmatpush2.bf16.msra.mxu0 0
        %1098 = vmatprep.subr.bf16.mxu0 0
        %1099 = vmatpush2.bf16.msra.mxu0 0
        %1100 = vmatprep.subr.bf16.mxu0 0
        %1101 = vmatpush2.bf16.msra.mxu0 0
        %1102 = vmatprep.subr.bf16.mxu0 0
        %1103 = vmatpush2.bf16.msra.mxu0 0
        %1104 = vmatprep.mubr.bf16.mxu0 0
        %1105 = vmatmul.mubr.bf16.gmra.mxu0 %v1070
        %v1106 = vpop.f32.mrf.mxu0
        %v1107 = vadd.f32 0.0, %v1106
        %v1108 = vpop.f32.mrf.mxu0
        %v1109 = vpop.f32.mrf.mxu0
        %v1110 = vpop.f32.mrf.mxu0
        %1111 = vdwg.mxu0
        %v1112 = vadd.f32 %v1061, %v1107
        %v1113 = vxor.u32 %v1112, 2147483648
        %v1114 = vmul.f32 %v1113, 1.442695
        %v1115 = vpow.pop %v1114
        %v1116 = vadd.f32 %v1115, 1.0
        %v1117 = vrcp.pop %v1116
        %v1118 = vmul.f32 1.0, %v1117
        %v1119 = vtanh.pop %v1112
        %1121 = vrot.lane.b32.xlu0 %v1054, 32
        %v1122 = vpop.permute.xlu0 %1121
        %v1124 = vmul.f32 %v1118, %v1122
        %1126 = vrot.lane.b32.xlu0 %v1119, 64
        %v1127 = vpop.permute.xlu0 %1126
        %v1129 = vmul.f32 %v1118, %v1127
        %1131 = vrot.lane.b32.xlu0 %v1129, 32
        %v1132 = vpop.permute.xlu0 %1131
        %v1134 = vadd.f32 %v1124, %v1132
        %v1135 = vtanh.pop %v1134
        %1137 = vrot.lane.b32.xlu0 %v1135, 64
        %v1138 = vpop.permute.xlu0 %1137
        %v1140 = vmul.f32 %v1118, %v1138
        %v1141 = vld [vmem:[%s481 + $0x10] sm:$0xf]
        %1143 = vrot.lane.b32.xlu0 %v1140, 32
        %v1144 = vpop.permute.xlu0 %1143
        %v1146 = vmul.f32 %v1141, %v1144
        %v1147 = vsub.f32 1.0, %v1141
        %v1148 = vmul.f32 %v1147, %v1047
        %v1149 = vadd.f32 %v1146, %v1148
        %1151 = vrot.lane.b32.xlu0 %v1134, 96
        %v1152 = vpop.permute.xlu0 %1151
        %v1154 = vmul.f32 %v1141, %v1152
        %v1155 = vmul.f32 %v1147, %v1054
        %v1156 = vadd.f32 %v1154, %v1155
        %1157 = vst.msk [vmem:[#allocation2 + $0x8] sm:$0x3] %vm732, %v1146
        %1159 = vrot.lane.b32.xlu0 %v1146, 32
        %v1160 = vpop.permute.xlu0 %1159
        %1162 = vst.msk [vmem:[#allocation2 + $0x8] sm:$0xc] %vm738, %v1160
        %v1164 = vrot.slane %v608, 2
        %v1166 = vrot.slane %v610, 6
        %v1168 = vsel %vm620, %v1164, %v1166
        %1170 = vrot.lane.b32.xlu0 %v1149, 32
        %v1171 = vpop.permute.xlu0 %1170
        %v1173 = vsel %vm562, %v1149, %v1171
        %v1174 = vmul.f32 %v1173, %v506
        %v1175 = vpack.c.bf16 %v1174, %v1174
        %v1177 = vsel %vm648, %v1175, 0
        %1179 = vmatprep.subr.bf16.mxu0 0
        %1180 = vmatpush1.bf16.msra.mxu0 0
        %1181 = vmatprep.subr.bf16.mxu0 0
        %1182 = vmatpush1.bf16.msra.mxu0 0
        %1183 = vmatprep.subr.bf16.mxu0 0
        %1184 = vmatpush1.bf16.msra.mxu0 0
        %1185 = vmatprep.subr.bf16.mxu0 0
        %1186 = vmatpush1.bf16.msra.mxu0 0
        %1187 = vmatprep.subr.bf16.mxu0 0
        %1188 = vmatpush1.bf16.msra.mxu0 %v643
        %1189 = vmatprep.subr.bf16.mxu0 0
        %1190 = vmatpush1.bf16.msra.mxu0 %v642
        %1191 = vmatprep.subr.bf16.mxu0 0
        %1192 = vmatpush1.bf16.msra.mxu0 %v641
        %1193 = vmatprep.subr.bf16.mxu0 0
        %1194 = vmatpush1.bf16.msra.mxu0 %v640
        %1195 = vmatprep.subr.bf16.mxu0 0
        %1196 = vmatpush2.bf16.msra.mxu0 0
        %1197 = vmatprep.subr.bf16.mxu0 0
        %1198 = vmatpush2.bf16.msra.mxu0 0
        %1199 = vmatprep.subr.bf16.mxu0 0
        %1200 = vmatpush2.bf16.msra.mxu0 0
        %1201 = vmatprep.subr.bf16.mxu0 0
        %1202 = vmatpush2.bf16.msra.mxu0 0
        %1203 = vmatprep.subr.bf16.mxu0 0
        %1204 = vmatpush2.bf16.msra.mxu0 0
        %1205 = vmatprep.subr.bf16.mxu0 0
        %1206 = vmatpush2.bf16.msra.mxu0 0
        %1207 = vmatprep.subr.bf16.mxu0 0
        %1208 = vmatpush2.bf16.msra.mxu0 0
        %1209 = vmatprep.subr.bf16.mxu0 0
        %1210 = vmatpush2.bf16.msra.mxu0 0
        %1211 = vmatprep.mubr.bf16.mxu0 0
        %1212 = vmatmul.mubr.bf16.gmra.mxu0 %v1177
        %v1213 = vpop.f32.mrf.mxu0
        %v1214 = vadd.f32 0.0, %v1213
        %v1215 = vpop.f32.mrf.mxu0
        %v1216 = vpop.f32.mrf.mxu0
        %v1217 = vpop.f32.mrf.mxu0
        %1218 = vdwg.mxu0
        %v1219 = vadd.f32 %v1168, %v1214
        %v1220 = vxor.u32 %v1219, 2147483648
        %v1221 = vmul.f32 %v1220, 1.442695
        %v1222 = vpow.pop %v1221
        %v1223 = vadd.f32 %v1222, 1.0
        %v1224 = vrcp.pop %v1223
        %v1225 = vmul.f32 1.0, %v1224
        %v1226 = vtanh.pop %v1219
        %1228 = vrot.lane.b32.xlu0 %v1156, 32
        %v1229 = vpop.permute.xlu0 %1228
        %v1231 = vmul.f32 %v1225, %v1229
        %1233 = vrot.lane.b32.xlu0 %v1226, 64
        %v1234 = vpop.permute.xlu0 %1233
        %v1236 = vmul.f32 %v1225, %v1234
        %1238 = vrot.lane.b32.xlu0 %v1236, 32
        %v1239 = vpop.permute.xlu0 %1238
        %v1241 = vadd.f32 %v1231, %v1239
        %v1242 = vtanh.pop %v1241
        %1244 = vrot.lane.b32.xlu0 %v1242, 64
        %v1245 = vpop.permute.xlu0 %1244
        %v1247 = vmul.f32 %v1225, %v1245
        %v1248 = vld [vmem:[%s481 + $0x14] sm:$0xf]
        %1250 = vrot.lane.b32.xlu0 %v1247, 32
        %v1251 = vpop.permute.xlu0 %1250
        %v1253 = vmul.f32 %v1248, %v1251
        %v1254 = vsub.f32 1.0, %v1248
        %v1255 = vmul.f32 %v1254, %v1149
        %v1256 = vadd.f32 %v1253, %v1255
        %1258 = vrot.lane.b32.xlu0 %v1241, 96
        %v1259 = vpop.permute.xlu0 %1258
        %v1261 = vmul.f32 %v1248, %v1259
        %v1262 = vmul.f32 %v1254, %v1156
        %v1263 = vadd.f32 %v1261, %v1262
        %1264 = vst.msk [vmem:[#allocation2 + $0xa] sm:$0x3] %vm732, %v1253
        %1266 = vrot.lane.b32.xlu0 %v1253, 32
        %v1267 = vpop.permute.xlu0 %1266
        %1269 = vst.msk [vmem:[#allocation2 + $0x6] sm:$0xc] %vm738, %v1267
        %v1270 = vrot.slane %v608, 4
        %v1273 = vrot.slane %v606, 4
        %v1275 = vsel %vm620, %v1270, %v1273
        %1277 = vrot.lane.b32.xlu0 %v1256, 32
        %v1278 = vpop.permute.xlu0 %1277
        %v1280 = vsel %vm562, %v1256, %v1278
        %v1281 = vmul.f32 %v1280, %v506
        %v1282 = vpack.c.bf16 %v1281, %v1281
        %v1284 = vsel %vm648, %v1282, 0
        %1286 = vmatprep.subr.bf16.mxu0 0
        %1287 = vmatpush1.bf16.msra.mxu0 0
        %1288 = vmatprep.subr.bf16.mxu0 0
        %1289 = vmatpush1.bf16.msra.mxu0 0
        %1290 = vmatprep.subr.bf16.mxu0 0
        %1291 = vmatpush1.bf16.msra.mxu0 0
        %1292 = vmatprep.subr.bf16.mxu0 0
        %1293 = vmatpush1.bf16.msra.mxu0 0
        %1294 = vmatprep.subr.bf16.mxu0 0
        %1295 = vmatpush1.bf16.msra.mxu0 %v643
        %1296 = vmatprep.subr.bf16.mxu0 0
        %1297 = vmatpush1.bf16.msra.mxu0 %v642
        %1298 = vmatprep.subr.bf16.mxu0 0
        %1299 = vmatpush1.bf16.msra.mxu0 %v641
        %1300 = vmatprep.subr.bf16.mxu0 0
        %1301 = vmatpush1.bf16.msra.mxu0 %v640
        %1302 = vmatprep.subr.bf16.mxu0 0
        %1303 = vmatpush2.bf16.msra.mxu0 0
        %1304 = vmatprep.subr.bf16.mxu0 0
        %1305 = vmatpush2.bf16.msra.mxu0 0
        %1306 = vmatprep.subr.bf16.mxu0 0
        %1307 = vmatpush2.bf16.msra.mxu0 0
        %1308 = vmatprep.subr.bf16.mxu0 0
        %1309 = vmatpush2.bf16.msra.mxu0 0
        %1310 = vmatprep.subr.bf16.mxu0 0
        %1311 = vmatpush2.bf16.msra.mxu0 0
        %1312 = vmatprep.subr.bf16.mxu0 0
        %1313 = vmatpush2.bf16.msra.mxu0 0
        %1314 = vmatprep.subr.bf16.mxu0 0
        %1315 = vmatpush2.bf16.msra.mxu0 0
        %1316 = vmatprep.subr.bf16.mxu0 0
        %1317 = vmatpush2.bf16.msra.mxu0 0
        %1318 = vmatprep.mubr.bf16.mxu0 0
        %1319 = vmatmul.mubr.bf16.gmra.mxu0 %v1284
        %v1320 = vpop.f32.mrf.mxu0
        %v1321 = vadd.f32 0.0, %v1320
        %v1322 = vpop.f32.mrf.mxu0
        %v1323 = vpop.f32.mrf.mxu0
        %v1324 = vpop.f32.mrf.mxu0
        %1325 = vdwg.mxu0
        %v1326 = vadd.f32 %v1275, %v1321
        %v1327 = vxor.u32 %v1326, 2147483648
        %v1328 = vmul.f32 %v1327, 1.442695
        %v1329 = vpow.pop %v1328
        %v1330 = vadd.f32 %v1329, 1.0
        %v1331 = vrcp.pop %v1330
        %v1332 = vmul.f32 1.0, %v1331
        %v1333 = vtanh.pop %v1326
        %1335 = vrot.lane.b32.xlu0 %v1263, 32
        %v1336 = vpop.permute.xlu0 %1335
        %v1338 = vmul.f32 %v1332, %v1336
        %1340 = vrot.lane.b32.xlu0 %v1333, 64
        %v1341 = vpop.permute.xlu0 %1340
        %v1343 = vmul.f32 %v1332, %v1341
        %1345 = vrot.lane.b32.xlu0 %v1343, 32
        %v1346 = vpop.permute.xlu0 %1345
        %v1348 = vadd.f32 %v1338, %v1346
        %v1349 = vtanh.pop %v1348
        %1351 = vrot.lane.b32.xlu0 %v1349, 64
        %v1352 = vpop.permute.xlu0 %1351
        %v1354 = vmul.f32 %v1332, %v1352
        %v1355 = vld [vmem:[%s481 + $0x18] sm:$0xf]
        %1357 = vrot.lane.b32.xlu0 %v1354, 32
        %v1358 = vpop.permute.xlu0 %1357
        %v1360 = vmul.f32 %v1355, %v1358
        %v1361 = vsub.f32 1.0, %v1355
        %v1362 = vmul.f32 %v1361, %v1256
        %v1363 = vadd.f32 %v1360, %v1362
        %1365 = vrot.lane.b32.xlu0 %v1348, 96
        %v1366 = vpop.permute.xlu0 %1365
        %v1368 = vmul.f32 %v1355, %v1366
        %v1369 = vmul.f32 %v1361, %v1263
        %v1370 = vadd.f32 %v1368, %v1369
        %1371 = vst.msk [vmem:[#allocation2 + $0xc] sm:$0x3] %vm732, %v1360
        %1373 = vrot.lane.b32.xlu0 %v1360, 32
        %v1374 = vpop.permute.xlu0 %1373
        %1376 = vst.msk [vmem:[#allocation2 + $0x4] sm:$0xc] %vm738, %v1374
        %v1377 = vrot.slane %v608, 6
        %v1379 = vrot.slane %v606, 2
        %v1381 = vsel %vm620, %v1377, %v1379
        %1383 = vrot.lane.b32.xlu0 %v1363, 32
        %v1384 = vpop.permute.xlu0 %1383
        %v1386 = vsel %vm562, %v1363, %v1384
        %v1387 = vmul.f32 %v1386, %v506
        %v1388 = vpack.c.bf16 %v1387, %v1387
        %v1390 = vsel %vm648, %v1388, 0
        %1392 = vmatprep.subr.bf16.mxu0 0
        %1393 = vmatpush1.bf16.msra.mxu0 0
        %1394 = vmatprep.subr.bf16.mxu0 0
        %1395 = vmatpush1.bf16.msra.mxu0 0
        %1396 = vmatprep.subr.bf16.mxu0 0
        %1397 = vmatpush1.bf16.msra.mxu0 0
        %1398 = vmatprep.subr.bf16.mxu0 0
        %1399 = vmatpush1.bf16.msra.mxu0 0
        %1400 = vmatprep.subr.bf16.mxu0 0
        %1401 = vmatpush1.bf16.msra.mxu0 %v643
        %1402 = vmatprep.subr.bf16.mxu0 0
        %1403 = vmatpush1.bf16.msra.mxu0 %v642
        %1404 = vmatprep.subr.bf16.mxu0 0
        %1405 = vmatpush1.bf16.msra.mxu0 %v641
        %1406 = vmatprep.subr.bf16.mxu0 0
        %1407 = vmatpush1.bf16.msra.mxu0 %v640
        %1408 = vmatprep.subr.bf16.mxu0 0
        %1409 = vmatpush2.bf16.msra.mxu0 0
        %1410 = vmatprep.subr.bf16.mxu0 0
        %1411 = vmatpush2.bf16.msra.mxu0 0
        %1412 = vmatprep.subr.bf16.mxu0 0
        %1413 = vmatpush2.bf16.msra.mxu0 0
        %1414 = vmatprep.subr.bf16.mxu0 0
        %1415 = vmatpush2.bf16.msra.mxu0 0
        %1416 = vmatprep.subr.bf16.mxu0 0
        %1417 = vmatpush2.bf16.msra.mxu0 0
        %1418 = vmatprep.subr.bf16.mxu0 0
        %1419 = vmatpush2.bf16.msra.mxu0 0
        %1420 = vmatprep.subr.bf16.mxu0 0
        %1421 = vmatpush2.bf16.msra.mxu0 0
        %1422 = vmatprep.subr.bf16.mxu0 0
        %1423 = vmatpush2.bf16.msra.mxu0 0
        %1424 = vmatprep.mubr.bf16.mxu0 0
        %1425 = vmatmul.mubr.bf16.gmra.mxu0 %v1390
        %v1426 = vpop.f32.mrf.mxu0
        %v1427 = vadd.f32 0.0, %v1426
        %v1428 = vpop.f32.mrf.mxu0
        %v1429 = vpop.f32.mrf.mxu0
        %v1430 = vpop.f32.mrf.mxu0
        %1431 = vdwg.mxu0
        %v1432 = vadd.f32 %v1381, %v1427
        %v1433 = vxor.u32 %v1432, 2147483648
        %v1434 = vmul.f32 %v1433, 1.442695
        %v1435 = vpow.pop %v1434
        %v1436 = vadd.f32 %v1435, 1.0
        %v1437 = vrcp.pop %v1436
        %v1438 = vmul.f32 1.0, %v1437
        %v1439 = vtanh.pop %v1432
        %1441 = vrot.lane.b32.xlu0 %v1370, 32
        %v1442 = vpop.permute.xlu0 %1441
        %v1444 = vmul.f32 %v1438, %v1442
        %1446 = vrot.lane.b32.xlu0 %v1439, 64
        %v1447 = vpop.permute.xlu0 %1446
        %v1449 = vmul.f32 %v1438, %v1447
        %1451 = vrot.lane.b32.xlu0 %v1449, 32
        %v1452 = vpop.permute.xlu0 %1451
        %v1454 = vadd.f32 %v1444, %v1452
        %v1455 = vtanh.pop %v1454
        %1457 = vrot.lane.b32.xlu0 %v1455, 64
        %v1458 = vpop.permute.xlu0 %1457
        %v1460 = vmul.f32 %v1438, %v1458
        %v1461 = vld [vmem:[%s481 + $0x1c] sm:$0xf]
        %1463 = vrot.lane.b32.xlu0 %v1460, 32
        %v1464 = vpop.permute.xlu0 %1463
        %v1466 = vmul.f32 %v1461, %v1464
        %v1467 = vsub.f32 1.0, %v1461
        %v1468 = vmul.f32 %v1467, %v1363
        %v1469 = vadd.f32 %v1466, %v1468
        %1471 = vrot.lane.b32.xlu0 %v1454, 96
        %v1472 = vpop.permute.xlu0 %1471
        %v1474 = vmul.f32 %v1461, %v1472
        %v1475 = vmul.f32 %v1467, %v1370
        %v1476 = vadd.f32 %v1474, %v1475
        %1477 = vst.msk [vmem:[#allocation2 + $0xe] sm:$0x3] %vm732, %v1466
        %1479 = vrot.lane.b32.xlu0 %v1466, 32
        %v1480 = vpop.permute.xlu0 %1479
        %1482 = vst.msk [vmem:[#allocation2 + $0x2] sm:$0xc] %vm738, %v1480
        %v1483 = vsel %vm620, %v614, %v606
        %1485 = vrot.lane.b32.xlu0 %v1469, 32
        %v1486 = vpop.permute.xlu0 %1485
        %v1488 = vsel %vm562, %v1469, %v1486
        %v1489 = vmul.f32 %v1488, %v506
        %v1490 = vpack.c.bf16 %v1489, %v1489
        %v1492 = vsel %vm648, %v1490, 0
        %1494 = vmatprep.subr.bf16.mxu0 0
        %1495 = vmatpush1.bf16.msra.mxu0 0
        %1496 = vmatprep.subr.bf16.mxu0 0
        %1497 = vmatpush1.bf16.msra.mxu0 0
        %1498 = vmatprep.subr.bf16.mxu0 0
        %1499 = vmatpush1.bf16.msra.mxu0 0
        %1500 = vmatprep.subr.bf16.mxu0 0
        %1501 = vmatpush1.bf16.msra.mxu0 0
        %1502 = vmatprep.subr.bf16.mxu0 0
        %1503 = vmatpush1.bf16.msra.mxu0 %v643
        %1504 = vmatprep.subr.bf16.mxu0 0
        %1505 = vmatpush1.bf16.msra.mxu0 %v642
        %1506 = vmatprep.subr.bf16.mxu0 0
        %1507 = vmatpush1.bf16.msra.mxu0 %v641
        %1508 = vmatprep.subr.bf16.mxu0 0
        %1509 = vmatpush1.bf16.msra.mxu0 %v640
        %1510 = vmatprep.subr.bf16.mxu0 0
        %1511 = vmatpush2.bf16.msra.mxu0 0
        %1512 = vmatprep.subr.bf16.mxu0 0
        %1513 = vmatpush2.bf16.msra.mxu0 0
        %1514 = vmatprep.subr.bf16.mxu0 0
        %1515 = vmatpush2.bf16.msra.mxu0 0
        %1516 = vmatprep.subr.bf16.mxu0 0
        %1517 = vmatpush2.bf16.msra.mxu0 0
        %1518 = vmatprep.subr.bf16.mxu0 0
        %1519 = vmatpush2.bf16.msra.mxu0 0
        %1520 = vmatprep.subr.bf16.mxu0 0
        %1521 = vmatpush2.bf16.msra.mxu0 0
        %1522 = vmatprep.subr.bf16.mxu0 0
        %1523 = vmatpush2.bf16.msra.mxu0 0
        %1524 = vmatprep.subr.bf16.mxu0 0
        %1525 = vmatpush2.bf16.msra.mxu0 0
        %1526 = vmatprep.mubr.bf16.mxu0 0
        %1527 = vmatmul.mubr.bf16.gmra.mxu0 %v1492
        %v1528 = vpop.f32.mrf.mxu0
        %v1529 = vadd.f32 0.0, %v1528
        %v1530 = vpop.f32.mrf.mxu0
        %v1531 = vpop.f32.mrf.mxu0
        %v1532 = vpop.f32.mrf.mxu0
        %1533 = vdwg.mxu0
        %v1534 = vadd.f32 %v1483, %v1529
        %v1535 = vxor.u32 %v1534, 2147483648
        %v1536 = vmul.f32 %v1535, 1.442695
        %v1537 = vpow.pop %v1536
        %v1538 = vadd.f32 %v1537, 1.0
        %v1539 = vrcp.pop %v1538
        %v1540 = vmul.f32 1.0, %v1539
        %v1541 = vtanh.pop %v1534
        %1543 = vrot.lane.b32.xlu0 %v1476, 32
        %v1544 = vpop.permute.xlu0 %1543
        %v1546 = vmul.f32 %v1540, %v1544
        %1548 = vrot.lane.b32.xlu0 %v1541, 64
        %v1549 = vpop.permute.xlu0 %1548
        %v1551 = vmul.f32 %v1540, %v1549
        %1553 = vrot.lane.b32.xlu0 %v1551, 32
        %v1554 = vpop.permute.xlu0 %1553
        %v1556 = vadd.f32 %v1546, %v1554
        %v1557 = vtanh.pop %v1556
        %1559 = vrot.lane.b32.xlu0 %v1557, 64
        %v1560 = vpop.permute.xlu0 %1559
        %v1562 = vmul.f32 %v1540, %v1560
        %v1563 = vld [vmem:[%s481 + $0x20] sm:$0xf]
        %1565 = vrot.lane.b32.xlu0 %v1562, 32
        %v1566 = vpop.permute.xlu0 %1565
        %v1568 = vmul.f32 %v1563, %v1566
        %v1569 = vsub.f32 1.0, %v1563
        %v1570 = vmul.f32 %v1569, %v1469
        %v1571 = vadd.f32 %v1568, %v1570
        %1573 = vrot.lane.b32.xlu0 %v1556, 96
        %v1574 = vpop.permute.xlu0 %1573
        %v1576 = vmul.f32 %v1563, %v1574
        %v1577 = vmul.f32 %v1569, %v1476
        %v1578 = vadd.f32 %v1576, %v1577
        %1579 = vst.msk [vmem:[#allocation2 + $0x10] sm:$0x3] %vm732, %v1568
        %1581 = vrot.lane.b32.xlu0 %v1568, 32
        %v1582 = vpop.permute.xlu0 %1581
        %1584 = vst.msk [vmem:[#allocation2] sm:$0xc] %vm738, %v1582
        %v1586 = vrot.slane %v614, 2
        %v1588 = vrot.slane %v606, 6
        %v1590 = vsel %vm620, %v1586, %v1588
        %1592 = vrot.lane.b32.xlu0 %v1571, 32
        %v1593 = vpop.permute.xlu0 %1592
        %v1595 = vsel %vm562, %v1571, %v1593
        %v1596 = vmul.f32 %v1595, %v506
        %v1597 = vpack.c.bf16 %v1596, %v1596
        %v1599 = vsel %vm648, %v1597, 0
        %1601 = vmatprep.subr.bf16.mxu0 0
        %1602 = vmatpush1.bf16.msra.mxu0 0
        %1603 = vmatprep.subr.bf16.mxu0 0
        %1604 = vmatpush1.bf16.msra.mxu0 0
        %1605 = vmatprep.subr.bf16.mxu0 0
        %1606 = vmatpush1.bf16.msra.mxu0 0
        %1607 = vmatprep.subr.bf16.mxu0 0
        %1608 = vmatpush1.bf16.msra.mxu0 0
        %1609 = vmatprep.subr.bf16.mxu0 0
        %1610 = vmatpush1.bf16.msra.mxu0 %v643
        %1611 = vmatprep.subr.bf16.mxu0 0
        %1612 = vmatpush1.bf16.msra.mxu0 %v642
        %1613 = vmatprep.subr.bf16.mxu0 0
        %1614 = vmatpush1.bf16.msra.mxu0 %v641
        %1615 = vmatprep.subr.bf16.mxu0 0
        %1616 = vmatpush1.bf16.msra.mxu0 %v640
        %1617 = vmatprep.subr.bf16.mxu0 0
        %1618 = vmatpush2.bf16.msra.mxu0 0
        %1619 = vmatprep.subr.bf16.mxu0 0
        %1620 = vmatpush2.bf16.msra.mxu0 0
        %1621 = vmatprep.subr.bf16.mxu0 0
        %1622 = vmatpush2.bf16.msra.mxu0 0
        %1623 = vmatprep.subr.bf16.mxu0 0
        %1624 = vmatpush2.bf16.msra.mxu0 0
        %1625 = vmatprep.subr.bf16.mxu0 0
        %1626 = vmatpush2.bf16.msra.mxu0 0
        %1627 = vmatprep.subr.bf16.mxu0 0
        %1628 = vmatpush2.bf16.msra.mxu0 0
        %1629 = vmatprep.subr.bf16.mxu0 0
        %1630 = vmatpush2.bf16.msra.mxu0 0
        %1631 = vmatprep.subr.bf16.mxu0 0
        %1632 = vmatpush2.bf16.msra.mxu0 0
        %1633 = vmatprep.mubr.bf16.mxu0 0
        %1634 = vmatmul.mubr.bf16.gmra.mxu0 %v1599
        %v1635 = vpop.f32.mrf.mxu0
        %v1636 = vadd.f32 0.0, %v1635
        %v1637 = vpop.f32.mrf.mxu0
        %v1638 = vpop.f32.mrf.mxu0
        %v1639 = vpop.f32.mrf.mxu0
        %1640 = vdwg.mxu0
        %v1641 = vadd.f32 %v1590, %v1636
        %v1642 = vxor.u32 %v1641, 2147483648
        %v1643 = vmul.f32 %v1642, 1.442695
        %v1644 = vpow.pop %v1643
        %v1645 = vadd.f32 %v1644, 1.0
        %v1646 = vrcp.pop %v1645
        %v1647 = vmul.f32 1.0, %v1646
        %v1648 = vtanh.pop %v1641
        %1650 = vrot.lane.b32.xlu0 %v1578, 32
        %v1651 = vpop.permute.xlu0 %1650
        %v1653 = vmul.f32 %v1647, %v1651
        %1655 = vrot.lane.b32.xlu0 %v1648, 64
        %v1656 = vpop.permute.xlu0 %1655
        %v1658 = vmul.f32 %v1647, %v1656
        %1660 = vrot.lane.b32.xlu0 %v1658, 32
        %v1661 = vpop.permute.xlu0 %1660
        %v1663 = vadd.f32 %v1653, %v1661
        %v1664 = vtanh.pop %v1663
        %1666 = vrot.lane.b32.xlu0 %v1664, 64
        %v1667 = vpop.permute.xlu0 %1666
        %v1669 = vmul.f32 %v1647, %v1667
        %v1670 = vld [vmem:[%s481 + $0x24] sm:$0xf]
        %1672 = vrot.lane.b32.xlu0 %v1669, 32
        %v1673 = vpop.permute.xlu0 %1672
        %v1675 = vmul.f32 %v1670, %v1673
        %1676 = vst.msk [vmem:[#allocation2 + $0x12] sm:$0x3] %vm732, %v1675
        %1678 = vrot.lane.b32.xlu0 %v1675, 32
        %v1679 = vpop.permute.xlu0 %1678
        %1681 = vst.msk [vmem:[#allocation2 - $0x2] sm:$0xc] %vm738, %v1679
        %v1682 = vld [vmem:[%s495] sm:$0xff]
        %v1683 = vld [vmem:[%s495 + $0x8] sm:$0xff]
        %v1684 = vld [vmem:[%s495 + $0x10] sm:$0xff]
        %v1685 = vld [vmem:[%s495 + $0x18] sm:$0xff]
        %v1686 = vld [vmem:[%s495 + $0x20] sm:$0xff]
        %v1687 = vld [vmem:[%s495 + $0x28] sm:$0xff]
        %v1688 = vld [vmem:[%s495 + $0x30] sm:$0xff]
        %v1689 = vld [vmem:[%s495 + $0x38] sm:$0xff]
        %v1690 = vld [vmem:[%s396] sm:$0xf]
        %v1691 = vld [vmem:[%s396 + $0x4] sm:$0xf]
        %v1692 = vld [vmem:[%s396 + $0x8] sm:$0xf]
        %v1693 = vld [vmem:[%s396 + $0xc] sm:$0xf]
        %v1694 = vld [vmem:[%s396 + $0x10] sm:$0xf]
        %v1695 = vld [vmem:[%s396 + $0x14] sm:$0xf]
        %v1696 = vld [vmem:[%s396 + $0x18] sm:$0xf]
        %v1697 = vld [vmem:[%s396 + $0x1c] sm:$0xf]
        %v1698 = vld [vmem:[%s405] sm:$0x3]
        %v1699 = vld [vmem:[#allocation2] sm:$0xff]
        %v1700 = vld [vmem:[#allocation2 + $0x8] sm:$0xff]
        %v1701 = vld [vmem:[#allocation2 + $0x10] sm:$0xf]
        %v1702 = vpack.c.bf16 %v1700, %v1699
        %v1703 = vpack.c.bf16 %v1701, %v1701
        %v1705 = vlaneseq
        %v1706 = vshrl.u32 %v1705, 7
        %v1707 = vsub.s32 0, %v1706
        %v1708 = vrot.slane %v1698, %v1707
        %v1709 = vlaneseq
        %v1710 = vshrl.u32 %v1709, 7
        %v1711 = vsub.s32 1, %v1710
        %v1712 = vrot.slane %v1698, %v1711
        %v1723 = vunpack.c.l.b16 %v1682
        %v1724 = vunpack.c.h.b16 %v1682
        %v1725 = vunpack.c.l.b16 %v1683
        %v1726 = vunpack.c.h.b16 %v1683
        %v1727 = vunpack.c.l.b16 %v1684
        %v1728 = vunpack.c.h.b16 %v1684
        %v1729 = vunpack.c.l.b16 %v1685
        %v1730 = vunpack.c.h.b16 %v1685
        %v1731 = vunpack.c.l.b16 %v1686
        %v1732 = vunpack.c.h.b16 %v1686
        %v1733 = vunpack.c.l.b16 %v1687
        %v1734 = vunpack.c.h.b16 %v1687
        %v1735 = vunpack.c.l.b16 %v1688
        %v1736 = vunpack.c.h.b16 %v1688
        %v1737 = vunpack.c.l.b16 %v1689
        %v1738 = vunpack.c.h.b16 %v1689
        %v1739 = vpack.c.b16 %v1725, %v1723
        %v1740 = vpack.c.b16 %v1726, %v1724
        %v1741 = vpack.c.b16 %v1729, %v1727
        %v1742 = vpack.c.b16 %v1730, %v1728
        %v1743 = vpack.c.b16 %v1733, %v1731
        %v1744 = vpack.c.b16 %v1734, %v1732
        %v1745 = vpack.c.b16 %v1737, %v1735
        %v1746 = vpack.c.b16 %v1738, %v1736
        %v1756 = vsel %vm648, %v1702, 0
        %v1759 = vsel %vm648, %v1703, 0
        %1761 = vmatprep.subr.bf16.mxu0 0
        %1762 = vmatpush1.bf16.msra.mxu0 0
        %1763 = vmatprep.subr.bf16.mxu0 0
        %1764 = vmatpush1.bf16.msra.mxu0 0
        %1765 = vmatprep.subr.bf16.mxu0 0
        %1766 = vmatpush1.bf16.msra.mxu0 0
        %1767 = vmatprep.subr.bf16.mxu0 0
        %1768 = vmatpush1.bf16.msra.mxu0 0
        %1769 = vmatprep.subr.bf16.mxu0 %v1746
        %1770 = vmatpush1.bf16.msra.mxu0 %v1745
        %1771 = vmatprep.subr.bf16.mxu0 %v1744
        %1772 = vmatpush1.bf16.msra.mxu0 %v1743
        %1773 = vmatprep.subr.bf16.mxu0 %v1742
        %1774 = vmatpush1.bf16.msra.mxu0 %v1741
        %1775 = vmatprep.subr.bf16.mxu0 %v1740
        %1776 = vmatpush1.bf16.msra.mxu0 %v1739
        %1777 = vmatprep.subr.bf16.mxu0 0
        %1778 = vmatpush2.bf16.msra.mxu0 0
        %1779 = vmatprep.subr.bf16.mxu0 0
        %1780 = vmatpush2.bf16.msra.mxu0 0
        %1781 = vmatprep.subr.bf16.mxu0 0
        %1782 = vmatpush2.bf16.msra.mxu0 0
        %1783 = vmatprep.subr.bf16.mxu0 0
        %1784 = vmatpush2.bf16.msra.mxu0 0
        %1785 = vmatprep.subr.bf16.mxu0 0
        %1786 = vmatpush2.bf16.msra.mxu0 0
        %1787 = vmatprep.subr.bf16.mxu0 0
        %1788 = vmatpush2.bf16.msra.mxu0 0
        %1789 = vmatprep.subr.bf16.mxu0 0
        %1790 = vmatpush2.bf16.msra.mxu0 0
        %1791 = vmatprep.subr.bf16.mxu0 0
        %1792 = vmatpush2.bf16.msra.mxu0 0
        %1793 = vmatprep.mubr.bf16.mxu0 0
        %1794 = vmatmul.mubr.bf16.gmra.mxu0 %v1756
        %v1795 = vpop.f32.mrf.mxu0
        %v1796 = vadd.f32 %v1708, %v1795
        %v1797 = vpop.f32.mrf.mxu0
        %v1798 = vadd.f32 %v1712, %v1797
        %v1799 = vpop.f32.mrf.mxu0
        %v1800 = vadd.f32 %v1708, %v1799
        %v1801 = vpop.f32.mrf.mxu0
        %v1802 = vadd.f32 %v1712, %v1801
        %1803 = vmatprep.mubr.bf16.mxu0 0
        %1804 = vmatmul.mubr.bf16.gmra.mxu0 %v1759
        %v1805 = vpop.f32.mrf.mxu0
        %v1806 = vadd.f32 %v1708, %v1805
        %v1807 = vpop.f32.mrf.mxu0
        %v1808 = vadd.f32 %v1712, %v1807
        %v1809 = vpop.f32.mrf.mxu0
        %v1810 = vpop.f32.mrf.mxu0
        %1811 = vdwg.mxu0
        %v1812 = vsel %vm620, %v1796, %v1808
        %v1821 = vunpack.c.l.b16 %v1690
        %v1822 = vunpack.c.l.b16 %v1691
        %v1823 = vunpack.c.l.b16 %v1692
        %v1824 = vunpack.c.l.b16 %v1693
        %v1825 = vunpack.c.l.b16 %v1694
        %v1826 = vunpack.c.l.b16 %v1695
        %v1827 = vunpack.c.l.b16 %v1696
        %v1828 = vunpack.c.l.b16 %v1697
        %v1829 = vpack.c.b16 %v1822, %v1821
        %v1830 = vpack.c.b16 %v1824, %v1823
        %v1831 = vpack.c.b16 %v1826, %v1825
        %v1832 = vpack.c.b16 %v1828, %v1827
        %1837 = vmatprep.subr.bf16.mxu0 0
        %1838 = vmatpush1.bf16.msra.mxu0 0
        %1839 = vmatprep.subr.bf16.mxu0 0
        %1840 = vmatpush1.bf16.msra.mxu0 0
        %1841 = vmatprep.subr.bf16.mxu0 0
        %1842 = vmatpush1.bf16.msra.mxu0 0
        %1843 = vmatprep.subr.bf16.mxu0 0
        %1844 = vmatpush1.bf16.msra.mxu0 0
        %1845 = vmatprep.subr.bf16.mxu0 0
        %1846 = vmatpush1.bf16.msra.mxu0 %v1832
        %1847 = vmatprep.subr.bf16.mxu0 0
        %1848 = vmatpush1.bf16.msra.mxu0 %v1831
        %1849 = vmatprep.subr.bf16.mxu0 0
        %1850 = vmatpush1.bf16.msra.mxu0 %v1830
        %1851 = vmatprep.subr.bf16.mxu0 0
        %1852 = vmatpush1.bf16.msra.mxu0 %v1829
        %1853 = vmatprep.subr.bf16.mxu0 0
        %1854 = vmatpush2.bf16.msra.mxu0 0
        %1855 = vmatprep.subr.bf16.mxu0 0
        %1856 = vmatpush2.bf16.msra.mxu0 0
        %1857 = vmatprep.subr.bf16.mxu0 0
        %1858 = vmatpush2.bf16.msra.mxu0 0
        %1859 = vmatprep.subr.bf16.mxu0 0
        %1860 = vmatpush2.bf16.msra.mxu0 0
        %1861 = vmatprep.subr.bf16.mxu0 0
        %1862 = vmatpush2.bf16.msra.mxu0 0
        %1863 = vmatprep.subr.bf16.mxu0 0
        %1864 = vmatpush2.bf16.msra.mxu0 0
        %1865 = vmatprep.subr.bf16.mxu0 0
        %1866 = vmatpush2.bf16.msra.mxu0 0
        %1867 = vmatprep.subr.bf16.mxu0 0
        %1868 = vmatpush2.bf16.msra.mxu0 0
        %1869 = vmatprep.mubr.bf16.mxu0 0
        %1870 = vmatmul.mubr.bf16.gmra.mxu0 %v650
        %v1871 = vpop.f32.mrf.mxu0
        %v1872 = vadd.f32 0.0, %v1871
        %v1873 = vpop.f32.mrf.mxu0
        %v1874 = vpop.f32.mrf.mxu0
        %v1875 = vpop.f32.mrf.mxu0
        %1876 = vdwg.mxu0
        %v1877 = vadd.f32 %v1812, %v1872
        %v1878 = vxor.u32 %v1877, 2147483648
        %v1879 = vmul.f32 %v1878, 1.442695
        %v1880 = vpow.pop %v1879
        %v1881 = vadd.f32 %v1880, 1.0
        %v1882 = vrcp.pop %v1881
        %v1883 = vmul.f32 1.0, %v1882
        %v1884 = vtanh.pop %v1877
        %v1885 = vmul.f32 %v1883, 0.0
        %1887 = vrot.lane.b32.xlu0 %v1884, 64
        %v1888 = vpop.permute.xlu0 %1887
        %v1890 = vmul.f32 %v1883, %v1888
        %1892 = vrot.lane.b32.xlu0 %v1890, 32
        %v1893 = vpop.permute.xlu0 %1892
        %v1895 = vadd.f32 %v1885, %v1893
        %v1896 = vtanh.pop %v1895
        %1898 = vrot.lane.b32.xlu0 %v1896, 64
        %v1899 = vpop.permute.xlu0 %1898
        %v1901 = vmul.f32 %v1883, %v1899
        %v1902 = vld [vmem:[%s481] sm:$0xf]
        %1904 = vrot.lane.b32.xlu0 %v1901, 32
        %v1905 = vpop.permute.xlu0 %1904
        %v1907 = vmul.f32 %v1902, %v1905
        %v1908 = vsub.f32 1.0, %v1902
        %v1909 = vmul.f32 %v1908, 0.0
        %v1910 = vadd.f32 %v1907, %v1909
        %1912 = vrot.lane.b32.xlu0 %v1895, 96
        %v1913 = vpop.permute.xlu0 %1912
        %v1915 = vmul.f32 %v1902, %v1913
        %v1916 = vadd.f32 %v1915, %v1909
        %v1917 = vadd.f32 %v1907, 0.0
        %v1919 = vrot.slane %v1796, 2
        %v1922 = vrot.slane %v1808, 6
        %v1924 = vsel %vm620, %v1919, %v1922
        %1926 = vrot.lane.b32.xlu0 %v1910, 32
        %v1927 = vpop.permute.xlu0 %1926
        %v1929 = vsel %vm562, %v1910, %v1927
        %v1930 = vmul.f32 %v1929, %v506
        %v1931 = vpack.c.bf16 %v1930, %v1930
        %v1933 = vsel %vm648, %v1931, 0
        %1935 = vmatprep.subr.bf16.mxu0 0
        %1936 = vmatpush1.bf16.msra.mxu0 0
        %1937 = vmatprep.subr.bf16.mxu0 0
        %1938 = vmatpush1.bf16.msra.mxu0 0
        %1939 = vmatprep.subr.bf16.mxu0 0
        %1940 = vmatpush1.bf16.msra.mxu0 0
        %1941 = vmatprep.subr.bf16.mxu0 0
        %1942 = vmatpush1.bf16.msra.mxu0 0
        %1943 = vmatprep.subr.bf16.mxu0 0
        %1944 = vmatpush1.bf16.msra.mxu0 %v1832
        %1945 = vmatprep.subr.bf16.mxu0 0
        %1946 = vmatpush1.bf16.msra.mxu0 %v1831
        %1947 = vmatprep.subr.bf16.mxu0 0
        %1948 = vmatpush1.bf16.msra.mxu0 %v1830
        %1949 = vmatprep.subr.bf16.mxu0 0
        %1950 = vmatpush1.bf16.msra.mxu0 %v1829
        %1951 = vmatprep.subr.bf16.mxu0 0
        %1952 = vmatpush2.bf16.msra.mxu0 0
        %1953 = vmatprep.subr.bf16.mxu0 0
        %1954 = vmatpush2.bf16.msra.mxu0 0
        %1955 = vmatprep.subr.bf16.mxu0 0
        %1956 = vmatpush2.bf16.msra.mxu0 0
        %1957 = vmatprep.subr.bf16.mxu0 0
        %1958 = vmatpush2.bf16.msra.mxu0 0
        %1959 = vmatprep.subr.bf16.mxu0 0
        %1960 = vmatpush2.bf16.msra.mxu0 0
        %1961 = vmatprep.subr.bf16.mxu0 0
        %1962 = vmatpush2.bf16.msra.mxu0 0
        %1963 = vmatprep.subr.bf16.mxu0 0
        %1964 = vmatpush2.bf16.msra.mxu0 0
        %1965 = vmatprep.subr.bf16.mxu0 0
        %1966 = vmatpush2.bf16.msra.mxu0 0
        %1967 = vmatprep.mubr.bf16.mxu0 0
        %1968 = vmatmul.mubr.bf16.gmra.mxu0 %v1933
        %v1969 = vpop.f32.mrf.mxu0
        %v1970 = vadd.f32 0.0, %v1969
        %v1971 = vpop.f32.mrf.mxu0
        %v1972 = vpop.f32.mrf.mxu0
        %v1973 = vpop.f32.mrf.mxu0
        %1974 = vdwg.mxu0
        %v1975 = vadd.f32 %v1924, %v1970
        %v1976 = vxor.u32 %v1975, 2147483648
        %v1977 = vmul.f32 %v1976, 1.442695
        %v1978 = vpow.pop %v1977
        %v1979 = vadd.f32 %v1978, 1.0
        %v1980 = vrcp.pop %v1979
        %v1981 = vmul.f32 1.0, %v1980
        %v1982 = vtanh.pop %v1975
        %1984 = vrot.lane.b32.xlu0 %v1916, 32
        %v1985 = vpop.permute.xlu0 %1984
        %v1987 = vmul.f32 %v1981, %v1985
        %1989 = vrot.lane.b32.xlu0 %v1982, 64
        %v1990 = vpop.permute.xlu0 %1989
        %v1992 = vmul.f32 %v1981, %v1990
        %1994 = vrot.lane.b32.xlu0 %v1992, 32
        %v1995 = vpop.permute.xlu0 %1994
        %v1997 = vadd.f32 %v1987, %v1995
        %v1998 = vtanh.pop %v1997
        %2000 = vrot.lane.b32.xlu0 %v1998, 64
        %v2001 = vpop.permute.xlu0 %2000
        %v2003 = vmul.f32 %v1981, %v2001
        %v2004 = vld [vmem:[%s481 + $0x4] sm:$0xf]
        %2006 = vrot.lane.b32.xlu0 %v2003, 32
        %v2007 = vpop.permute.xlu0 %2006
        %v2009 = vmul.f32 %v2004, %v2007
        %v2010 = vsub.f32 1.0, %v2004
        %v2011 = vmul.f32 %v2010, %v1910
        %v2012 = vadd.f32 %v2009, %v2011
        %2014 = vrot.lane.b32.xlu0 %v1997, 96
        %v2015 = vpop.permute.xlu0 %2014
        %v2017 = vmul.f32 %v2004, %v2015
        %v2018 = vmul.f32 %v2010, %v1916
        %v2019 = vadd.f32 %v2017, %v2018
        %v2020 = vadd.f32 %v1917, %v2009
        %v2021 = vrot.slane %v1796, 4
        %v2024 = vrot.slane %v1802, 4
        %v2026 = vsel %vm620, %v2021, %v2024
        %2028 = vrot.lane.b32.xlu0 %v2012, 32
        %v2029 = vpop.permute.xlu0 %2028
        %v2031 = vsel %vm562, %v2012, %v2029
        %v2032 = vmul.f32 %v2031, %v506
        %v2033 = vpack.c.bf16 %v2032, %v2032
        %v2035 = vsel %vm648, %v2033, 0
        %2037 = vmatprep.subr.bf16.mxu0 0
        %2038 = vmatpush1.bf16.msra.mxu0 0
        %2039 = vmatprep.subr.bf16.mxu0 0
        %2040 = vmatpush1.bf16.msra.mxu0 0
        %2041 = vmatprep.subr.bf16.mxu0 0
        %2042 = vmatpush1.bf16.msra.mxu0 0
        %2043 = vmatprep.subr.bf16.mxu0 0
        %2044 = vmatpush1.bf16.msra.mxu0 0
        %2045 = vmatprep.subr.bf16.mxu0 0
        %2046 = vmatpush1.bf16.msra.mxu0 %v1832
        %2047 = vmatprep.subr.bf16.mxu0 0
        %2048 = vmatpush1.bf16.msra.mxu0 %v1831
        %2049 = vmatprep.subr.bf16.mxu0 0
        %2050 = vmatpush1.bf16.msra.mxu0 %v1830
        %2051 = vmatprep.subr.bf16.mxu0 0
        %2052 = vmatpush1.bf16.msra.mxu0 %v1829
        %2053 = vmatprep.subr.bf16.mxu0 0
        %2054 = vmatpush2.bf16.msra.mxu0 0
        %2055 = vmatprep.subr.bf16.mxu0 0
        %2056 = vmatpush2.bf16.msra.mxu0 0
        %2057 = vmatprep.subr.bf16.mxu0 0
        %2058 = vmatpush2.bf16.msra.mxu0 0
        %2059 = vmatprep.subr.bf16.mxu0 0
        %2060 = vmatpush2.bf16.msra.mxu0 0
        %2061 = vmatprep.subr.bf16.mxu0 0
        %2062 = vmatpush2.bf16.msra.mxu0 0
        %2063 = vmatprep.subr.bf16.mxu0 0
        %2064 = vmatpush2.bf16.msra.mxu0 0
        %2065 = vmatprep.subr.bf16.mxu0 0
        %2066 = vmatpush2.bf16.msra.mxu0 0
        %2067 = vmatprep.subr.bf16.mxu0 0
        %2068 = vmatpush2.bf16.msra.mxu0 0
        %2069 = vmatprep.mubr.bf16.mxu0 0
        %2070 = vmatmul.mubr.bf16.gmra.mxu0 %v2035
        %v2071 = vpop.f32.mrf.mxu0
        %v2072 = vadd.f32 0.0, %v2071
        %v2073 = vpop.f32.mrf.mxu0
        %v2074 = vpop.f32.mrf.mxu0
        %v2075 = vpop.f32.mrf.mxu0
        %2076 = vdwg.mxu0
        %v2077 = vadd.f32 %v2026, %v2072
        %v2078 = vxor.u32 %v2077, 2147483648
        %v2079 = vmul.f32 %v2078, 1.442695
        %v2080 = vpow.pop %v2079
        %v2081 = vadd.f32 %v2080, 1.0
        %v2082 = vrcp.pop %v2081
        %v2083 = vmul.f32 1.0, %v2082
        %v2084 = vtanh.pop %v2077
        %2086 = vrot.lane.b32.xlu0 %v2019, 32
        %v2087 = vpop.permute.xlu0 %2086
        %v2089 = vmul.f32 %v2083, %v2087
        %2091 = vrot.lane.b32.xlu0 %v2084, 64
        %v2092 = vpop.permute.xlu0 %2091
        %v2094 = vmul.f32 %v2083, %v2092
        %2096 = vrot.lane.b32.xlu0 %v2094, 32
        %v2097 = vpop.permute.xlu0 %2096
        %v2099 = vadd.f32 %v2089, %v2097
        %v2100 = vtanh.pop %v2099
        %2102 = vrot.lane.b32.xlu0 %v2100, 64
        %v2103 = vpop.permute.xlu0 %2102
        %v2105 = vmul.f32 %v2083, %v2103
        %v2106 = vld [vmem:[%s481 + $0x8] sm:$0xf]
        %2108 = vrot.lane.b32.xlu0 %v2105, 32
        %v2109 = vpop.permute.xlu0 %2108
        %v2111 = vmul.f32 %v2106, %v2109
        %v2112 = vsub.f32 1.0, %v2106
        %v2113 = vmul.f32 %v2112, %v2012
        %v2114 = vadd.f32 %v2111, %v2113
        %2116 = vrot.lane.b32.xlu0 %v2099, 96
        %v2117 = vpop.permute.xlu0 %2116
        %v2119 = vmul.f32 %v2106, %v2117
        %v2120 = vmul.f32 %v2112, %v2019
        %v2121 = vadd.f32 %v2119, %v2120
        %v2122 = vadd.f32 %v2020, %v2111
        %v2123 = vrot.slane %v1796, 6
        %v2125 = vrot.slane %v1802, 2
        %v2127 = vsel %vm620, %v2123, %v2125
        %2129 = vrot.lane.b32.xlu0 %v2114, 32
        %v2130 = vpop.permute.xlu0 %2129
        %v2132 = vsel %vm562, %v2114, %v2130
        %v2133 = vmul.f32 %v2132, %v506
        %v2134 = vpack.c.bf16 %v2133, %v2133
        %v2136 = vsel %vm648, %v2134, 0
        %2138 = vmatprep.subr.bf16.mxu0 0
        %2139 = vmatpush1.bf16.msra.mxu0 0
        %2140 = vmatprep.subr.bf16.mxu0 0
        %2141 = vmatpush1.bf16.msra.mxu0 0
        %2142 = vmatprep.subr.bf16.mxu0 0
        %2143 = vmatpush1.bf16.msra.mxu0 0
        %2144 = vmatprep.subr.bf16.mxu0 0
        %2145 = vmatpush1.bf16.msra.mxu0 0
        %2146 = vmatprep.subr.bf16.mxu0 0
        %2147 = vmatpush1.bf16.msra.mxu0 %v1832
        %2148 = vmatprep.subr.bf16.mxu0 0
        %2149 = vmatpush1.bf16.msra.mxu0 %v1831
        %2150 = vmatprep.subr.bf16.mxu0 0
        %2151 = vmatpush1.bf16.msra.mxu0 %v1830
        %2152 = vmatprep.subr.bf16.mxu0 0
        %2153 = vmatpush1.bf16.msra.mxu0 %v1829
        %2154 = vmatprep.subr.bf16.mxu0 0
        %2155 = vmatpush2.bf16.msra.mxu0 0
        %2156 = vmatprep.subr.bf16.mxu0 0
        %2157 = vmatpush2.bf16.msra.mxu0 0
        %2158 = vmatprep.subr.bf16.mxu0 0
        %2159 = vmatpush2.bf16.msra.mxu0 0
        %2160 = vmatprep.subr.bf16.mxu0 0
        %2161 = vmatpush2.bf16.msra.mxu0 0
        %2162 = vmatprep.subr.bf16.mxu0 0
        %2163 = vmatpush2.bf16.msra.mxu0 0
        %2164 = vmatprep.subr.bf16.mxu0 0
        %2165 = vmatpush2.bf16.msra.mxu0 0
        %2166 = vmatprep.subr.bf16.mxu0 0
        %2167 = vmatpush2.bf16.msra.mxu0 0
        %2168 = vmatprep.subr.bf16.mxu0 0
        %2169 = vmatpush2.bf16.msra.mxu0 0
        %2170 = vmatprep.mubr.bf16.mxu0 0
        %2171 = vmatmul.mubr.bf16.gmra.mxu0 %v2136
        %v2172 = vpop.f32.mrf.mxu0
        %v2173 = vadd.f32 0.0, %v2172
        %v2174 = vpop.f32.mrf.mxu0
        %v2175 = vpop.f32.mrf.mxu0
        %v2176 = vpop.f32.mrf.mxu0
        %2177 = vdwg.mxu0
        %v2178 = vadd.f32 %v2127, %v2173
        %v2179 = vxor.u32 %v2178, 2147483648
        %v2180 = vmul.f32 %v2179, 1.442695
        %v2181 = vpow.pop %v2180
        %v2182 = vadd.f32 %v2181, 1.0
        %v2183 = vrcp.pop %v2182
        %v2184 = vmul.f32 1.0, %v2183
        %v2185 = vtanh.pop %v2178
        %2187 = vrot.lane.b32.xlu0 %v2121, 32
        %v2188 = vpop.permute.xlu0 %2187
        %v2190 = vmul.f32 %v2184, %v2188
        %2192 = vrot.lane.b32.xlu0 %v2185, 64
        %v2193 = vpop.permute.xlu0 %2192
        %v2195 = vmul.f32 %v2184, %v2193
        %2197 = vrot.lane.b32.xlu0 %v2195, 32
        %v2198 = vpop.permute.xlu0 %2197
        %v2200 = vadd.f32 %v2190, %v2198
        %v2201 = vtanh.pop %v2200
        %2203 = vrot.lane.b32.xlu0 %v2201, 64
        %v2204 = vpop.permute.xlu0 %2203
        %v2206 = vmul.f32 %v2184, %v2204
        %v2207 = vld [vmem:[%s481 + $0xc] sm:$0xf]
        %2209 = vrot.lane.b32.xlu0 %v2206, 32
        %v2210 = vpop.permute.xlu0 %2209
        %v2212 = vmul.f32 %v2207, %v2210
        %v2213 = vsub.f32 1.0, %v2207
        %v2214 = vmul.f32 %v2213, %v2114
        %v2215 = vadd.f32 %v2212, %v2214
        %2217 = vrot.lane.b32.xlu0 %v2200, 96
        %v2218 = vpop.permute.xlu0 %2217
        %v2220 = vmul.f32 %v2207, %v2218
        %v2221 = vmul.f32 %v2213, %v2121
        %v2222 = vadd.f32 %v2220, %v2221
        %v2223 = vadd.f32 %v2122, %v2212
        %v2224 = vsel %vm620, %v1800, %v1802
        %2226 = vrot.lane.b32.xlu0 %v2215, 32
        %v2227 = vpop.permute.xlu0 %2226
        %v2229 = vsel %vm562, %v2215, %v2227
        %v2230 = vmul.f32 %v2229, %v506
        %v2231 = vpack.c.bf16 %v2230, %v2230
        %v2233 = vsel %vm648, %v2231, 0
        %2235 = vmatprep.subr.bf16.mxu0 0
        %2236 = vmatpush1.bf16.msra.mxu0 0
        %2237 = vmatprep.subr.bf16.mxu0 0
        %2238 = vmatpush1.bf16.msra.mxu0 0
        %2239 = vmatprep.subr.bf16.mxu0 0
        %2240 = vmatpush1.bf16.msra.mxu0 0
        %2241 = vmatprep.subr.bf16.mxu0 0
        %2242 = vmatpush1.bf16.msra.mxu0 0
        %2243 = vmatprep.subr.bf16.mxu0 0
        %2244 = vmatpush1.bf16.msra.mxu0 %v1832
        %2245 = vmatprep.subr.bf16.mxu0 0
        %2246 = vmatpush1.bf16.msra.mxu0 %v1831
        %2247 = vmatprep.subr.bf16.mxu0 0
        %2248 = vmatpush1.bf16.msra.mxu0 %v1830
        %2249 = vmatprep.subr.bf16.mxu0 0
        %2250 = vmatpush1.bf16.msra.mxu0 %v1829
        %2251 = vmatprep.subr.bf16.mxu0 0
        %2252 = vmatpush2.bf16.msra.mxu0 0
        %2253 = vmatprep.subr.bf16.mxu0 0
        %2254 = vmatpush2.bf16.msra.mxu0 0
        %2255 = vmatprep.subr.bf16.mxu0 0
        %2256 = vmatpush2.bf16.msra.mxu0 0
        %2257 = vmatprep.subr.bf16.mxu0 0
        %2258 = vmatpush2.bf16.msra.mxu0 0
        %2259 = vmatprep.subr.bf16.mxu0 0
        %2260 = vmatpush2.bf16.msra.mxu0 0
        %2261 = vmatprep.subr.bf16.mxu0 0
        %2262 = vmatpush2.bf16.msra.mxu0 0
        %2263 = vmatprep.subr.bf16.mxu0 0
        %2264 = vmatpush2.bf16.msra.mxu0 0
        %2265 = vmatprep.subr.bf16.mxu0 0
        %2266 = vmatpush2.bf16.msra.mxu0 0
        %2267 = vmatprep.mubr.bf16.mxu0 0
        %2268 = vmatmul.mubr.bf16.gmra.mxu0 %v2233
        %v2269 = vpop.f32.mrf.mxu0
        %v2270 = vadd.f32 0.0, %v2269
        %v2271 = vpop.f32.mrf.mxu0
        %v2272 = vpop.f32.mrf.mxu0
        %v2273 = vpop.f32.mrf.mxu0
        %2274 = vdwg.mxu0
        %v2275 = vadd.f32 %v2224, %v2270
        %v2276 = vxor.u32 %v2275, 2147483648
        %v2277 = vmul.f32 %v2276, 1.442695
        %v2278 = vpow.pop %v2277
        %v2279 = vadd.f32 %v2278, 1.0
        %v2280 = vrcp.pop %v2279
        %v2281 = vmul.f32 1.0, %v2280
        %v2282 = vtanh.pop %v2275
        %2284 = vrot.lane.b32.xlu0 %v2222, 32
        %v2285 = vpop.permute.xlu0 %2284
        %v2287 = vmul.f32 %v2281, %v2285
        %2289 = vrot.lane.b32.xlu0 %v2282, 64
        %v2290 = vpop.permute.xlu0 %2289
        %v2292 = vmul.f32 %v2281, %v2290
        %2294 = vrot.lane.b32.xlu0 %v2292, 32
        %v2295 = vpop.permute.xlu0 %2294
        %v2297 = vadd.f32 %v2287, %v2295
        %v2298 = vtanh.pop %v2297
        %2300 = vrot.lane.b32.xlu0 %v2298, 64
        %v2301 = vpop.permute.xlu0 %2300
        %v2303 = vmul.f32 %v2281, %v2301
        %v2304 = vld [vmem:[%s481 + $0x10] sm:$0xf]
        %2306 = vrot.lane.b32.xlu0 %v2303, 32
        %v2307 = vpop.permute.xlu0 %2306
        %v2309 = vmul.f32 %v2304, %v2307
        %v2310 = vsub.f32 1.0, %v2304
        %v2311 = vmul.f32 %v2310, %v2215
        %v2312 = vadd.f32 %v2309, %v2311
        %2314 = vrot.lane.b32.xlu0 %v2297, 96
        %v2315 = vpop.permute.xlu0 %2314
        %v2317 = vmul.f32 %v2304, %v2315
        %v2318 = vmul.f32 %v2310, %v2222
        %v2319 = vadd.f32 %v2317, %v2318
        %v2320 = vadd.f32 %v2223, %v2309
        %v2322 = vrot.slane %v1800, 2
        %v2324 = vrot.slane %v1802, 6
        %v2326 = vsel %vm620, %v2322, %v2324
        %2328 = vrot.lane.b32.xlu0 %v2312, 32
        %v2329 = vpop.permute.xlu0 %2328
        %v2331 = vsel %vm562, %v2312, %v2329
        %v2332 = vmul.f32 %v2331, %v506
        %v2333 = vpack.c.bf16 %v2332, %v2332
        %v2335 = vsel %vm648, %v2333, 0
        %2337 = vmatprep.subr.bf16.mxu0 0
        %2338 = vmatpush1.bf16.msra.mxu0 0
        %2339 = vmatprep.subr.bf16.mxu0 0
        %2340 = vmatpush1.bf16.msra.mxu0 0
        %2341 = vmatprep.subr.bf16.mxu0 0
        %2342 = vmatpush1.bf16.msra.mxu0 0
        %2343 = vmatprep.subr.bf16.mxu0 0
        %2344 = vmatpush1.bf16.msra.mxu0 0
        %2345 = vmatprep.subr.bf16.mxu0 0
        %2346 = vmatpush1.bf16.msra.mxu0 %v1832
        %2347 = vmatprep.subr.bf16.mxu0 0
        %2348 = vmatpush1.bf16.msra.mxu0 %v1831
        %2349 = vmatprep.subr.bf16.mxu0 0
        %2350 = vmatpush1.bf16.msra.mxu0 %v1830
        %2351 = vmatprep.subr.bf16.mxu0 0
        %2352 = vmatpush1.bf16.msra.mxu0 %v1829
        %2353 = vmatprep.subr.bf16.mxu0 0
        %2354 = vmatpush2.bf16.msra.mxu0 0
        %2355 = vmatprep.subr.bf16.mxu0 0
        %2356 = vmatpush2.bf16.msra.mxu0 0
        %2357 = vmatprep.subr.bf16.mxu0 0
        %2358 = vmatpush2.bf16.msra.mxu0 0
        %2359 = vmatprep.subr.bf16.mxu0 0
        %2360 = vmatpush2.bf16.msra.mxu0 0
        %2361 = vmatprep.subr.bf16.mxu0 0
        %2362 = vmatpush2.bf16.msra.mxu0 0
        %2363 = vmatprep.subr.bf16.mxu0 0
        %2364 = vmatpush2.bf16.msra.mxu0 0
        %2365 = vmatprep.subr.bf16.mxu0 0
        %2366 = vmatpush2.bf16.msra.mxu0 0
        %2367 = vmatprep.subr.bf16.mxu0 0
        %2368 = vmatpush2.bf16.msra.mxu0 0
        %2369 = vmatprep.mubr.bf16.mxu0 0
        %2370 = vmatmul.mubr.bf16.gmra.mxu0 %v2335
        %v2371 = vpop.f32.mrf.mxu0
        %v2372 = vadd.f32 0.0, %v2371
        %v2373 = vpop.f32.mrf.mxu0
        %v2374 = vpop.f32.mrf.mxu0
        %v2375 = vpop.f32.mrf.mxu0
        %2376 = vdwg.mxu0
        %v2377 = vadd.f32 %v2326, %v2372
        %v2378 = vxor.u32 %v2377, 2147483648
        %v2379 = vmul.f32 %v2378, 1.442695
        %v2380 = vpow.pop %v2379
        %v2381 = vadd.f32 %v2380, 1.0
        %v2382 = vrcp.pop %v2381
        %v2383 = vmul.f32 1.0, %v2382
        %v2384 = vtanh.pop %v2377
        %2386 = vrot.lane.b32.xlu0 %v2319, 32
        %v2387 = vpop.permute.xlu0 %2386
        %v2389 = vmul.f32 %v2383, %v2387
        %2391 = vrot.lane.b32.xlu0 %v2384, 64
        %v2392 = vpop.permute.xlu0 %2391
        %v2394 = vmul.f32 %v2383, %v2392
        %2396 = vrot.lane.b32.xlu0 %v2394, 32
        %v2397 = vpop.permute.xlu0 %2396
        %v2399 = vadd.f32 %v2389, %v2397
        %v2400 = vtanh.pop %v2399
        %2402 = vrot.lane.b32.xlu0 %v2400, 64
        %v2403 = vpop.permute.xlu0 %2402
        %v2405 = vmul.f32 %v2383, %v2403
        %v2406 = vld [vmem:[%s481 + $0x14] sm:$0xf]
        %2408 = vrot.lane.b32.xlu0 %v2405, 32
        %v2409 = vpop.permute.xlu0 %2408
        %v2411 = vmul.f32 %v2406, %v2409
        %v2412 = vsub.f32 1.0, %v2406
        %v2413 = vmul.f32 %v2412, %v2312
        %v2414 = vadd.f32 %v2411, %v2413
        %2416 = vrot.lane.b32.xlu0 %v2399, 96
        %v2417 = vpop.permute.xlu0 %2416
        %v2419 = vmul.f32 %v2406, %v2417
        %v2420 = vmul.f32 %v2412, %v2319
        %v2421 = vadd.f32 %v2419, %v2420
        %v2422 = vadd.f32 %v2320, %v2411
        %v2423 = vrot.slane %v1800, 4
        %v2426 = vrot.slane %v1798, 4
        %v2428 = vsel %vm620, %v2423, %v2426
        %2430 = vrot.lane.b32.xlu0 %v2414, 32
        %v2431 = vpop.permute.xlu0 %2430
        %v2433 = vsel %vm562, %v2414, %v2431
        %v2434 = vmul.f32 %v2433, %v506
        %v2435 = vpack.c.bf16 %v2434, %v2434
        %v2437 = vsel %vm648, %v2435, 0
        %2439 = vmatprep.subr.bf16.mxu0 0
        %2440 = vmatpush1.bf16.msra.mxu0 0
        %2441 = vmatprep.subr.bf16.mxu0 0
        %2442 = vmatpush1.bf16.msra.mxu0 0
        %2443 = vmatprep.subr.bf16.mxu0 0
        %2444 = vmatpush1.bf16.msra.mxu0 0
        %2445 = vmatprep.subr.bf16.mxu0 0
        %2446 = vmatpush1.bf16.msra.mxu0 0
        %2447 = vmatprep.subr.bf16.mxu0 0
        %2448 = vmatpush1.bf16.msra.mxu0 %v1832
        %2449 = vmatprep.subr.bf16.mxu0 0
        %2450 = vmatpush1.bf16.msra.mxu0 %v1831
        %2451 = vmatprep.subr.bf16.mxu0 0
        %2452 = vmatpush1.bf16.msra.mxu0 %v1830
        %2453 = vmatprep.subr.bf16.mxu0 0
        %2454 = vmatpush1.bf16.msra.mxu0 %v1829
        %2455 = vmatprep.subr.bf16.mxu0 0
        %2456 = vmatpush2.bf16.msra.mxu0 0
        %2457 = vmatprep.subr.bf16.mxu0 0
        %2458 = vmatpush2.bf16.msra.mxu0 0
        %2459 = vmatprep.subr.bf16.mxu0 0
        %2460 = vmatpush2.bf16.msra.mxu0 0
        %2461 = vmatprep.subr.bf16.mxu0 0
        %2462 = vmatpush2.bf16.msra.mxu0 0
        %2463 = vmatprep.subr.bf16.mxu0 0
        %2464 = vmatpush2.bf16.msra.mxu0 0
        %2465 = vmatprep.subr.bf16.mxu0 0
        %2466 = vmatpush2.bf16.msra.mxu0 0
        %2467 = vmatprep.subr.bf16.mxu0 0
        %2468 = vmatpush2.bf16.msra.mxu0 0
        %2469 = vmatprep.subr.bf16.mxu0 0
        %2470 = vmatpush2.bf16.msra.mxu0 0
        %2471 = vmatprep.mubr.bf16.mxu0 0
        %2472 = vmatmul.mubr.bf16.gmra.mxu0 %v2437
        %v2473 = vpop.f32.mrf.mxu0
        %v2474 = vadd.f32 0.0, %v2473
        %v2475 = vpop.f32.mrf.mxu0
        %v2476 = vpop.f32.mrf.mxu0
        %v2477 = vpop.f32.mrf.mxu0
        %2478 = vdwg.mxu0
        %v2479 = vadd.f32 %v2428, %v2474
        %v2480 = vxor.u32 %v2479, 2147483648
        %v2481 = vmul.f32 %v2480, 1.442695
        %v2482 = vpow.pop %v2481
        %v2483 = vadd.f32 %v2482, 1.0
        %v2484 = vrcp.pop %v2483
        %v2485 = vmul.f32 1.0, %v2484
        %v2486 = vtanh.pop %v2479
        %2488 = vrot.lane.b32.xlu0 %v2421, 32
        %v2489 = vpop.permute.xlu0 %2488
        %v2491 = vmul.f32 %v2485, %v2489
        %2493 = vrot.lane.b32.xlu0 %v2486, 64
        %v2494 = vpop.permute.xlu0 %2493
        %v2496 = vmul.f32 %v2485, %v2494
        %2498 = vrot.lane.b32.xlu0 %v2496, 32
        %v2499 = vpop.permute.xlu0 %2498
        %v2501 = vadd.f32 %v2491, %v2499
        %v2502 = vtanh.pop %v2501
        %2504 = vrot.lane.b32.xlu0 %v2502, 64
        %v2505 = vpop.permute.xlu0 %2504
        %v2507 = vmul.f32 %v2485, %v2505
        %v2508 = vld [vmem:[%s481 + $0x18] sm:$0xf]
        %2510 = vrot.lane.b32.xlu0 %v2507, 32
        %v2511 = vpop.permute.xlu0 %2510
        %v2513 = vmul.f32 %v2508, %v2511
        %v2514 = vsub.f32 1.0, %v2508
        %v2515 = vmul.f32 %v2514, %v2414
        %v2516 = vadd.f32 %v2513, %v2515
        %2518 = vrot.lane.b32.xlu0 %v2501, 96
        %v2519 = vpop.permute.xlu0 %2518
        %v2521 = vmul.f32 %v2508, %v2519
        %v2522 = vmul.f32 %v2514, %v2421
        %v2523 = vadd.f32 %v2521, %v2522
        %v2524 = vadd.f32 %v2422, %v2513
        %v2525 = vrot.slane %v1800, 6
        %v2527 = vrot.slane %v1798, 2
        %v2529 = vsel %vm620, %v2525, %v2527
        %2531 = vrot.lane.b32.xlu0 %v2516, 32
        %v2532 = vpop.permute.xlu0 %2531
        %v2534 = vsel %vm562, %v2516, %v2532
        %v2535 = vmul.f32 %v2534, %v506
        %v2536 = vpack.c.bf16 %v2535, %v2535
        %v2538 = vsel %vm648, %v2536, 0
        %2540 = vmatprep.subr.bf16.mxu0 0
        %2541 = vmatpush1.bf16.msra.mxu0 0
        %2542 = vmatprep.subr.bf16.mxu0 0
        %2543 = vmatpush1.bf16.msra.mxu0 0
        %2544 = vmatprep.subr.bf16.mxu0 0
        %2545 = vmatpush1.bf16.msra.mxu0 0
        %2546 = vmatprep.subr.bf16.mxu0 0
        %2547 = vmatpush1.bf16.msra.mxu0 0
        %2548 = vmatprep.subr.bf16.mxu0 0
        %2549 = vmatpush1.bf16.msra.mxu0 %v1832
        %2550 = vmatprep.subr.bf16.mxu0 0
        %2551 = vmatpush1.bf16.msra.mxu0 %v1831
        %2552 = vmatprep.subr.bf16.mxu0 0
        %2553 = vmatpush1.bf16.msra.mxu0 %v1830
        %2554 = vmatprep.subr.bf16.mxu0 0
        %2555 = vmatpush1.bf16.msra.mxu0 %v1829
        %2556 = vmatprep.subr.bf16.mxu0 0
        %2557 = vmatpush2.bf16.msra.mxu0 0
        %2558 = vmatprep.subr.bf16.mxu0 0
        %2559 = vmatpush2.bf16.msra.mxu0 0
        %2560 = vmatprep.subr.bf16.mxu0 0
        %2561 = vmatpush2.bf16.msra.mxu0 0
        %2562 = vmatprep.subr.bf16.mxu0 0
        %2563 = vmatpush2.bf16.msra.mxu0 0
        %2564 = vmatprep.subr.bf16.mxu0 0
        %2565 = vmatpush2.bf16.msra.mxu0 0
        %2566 = vmatprep.subr.bf16.mxu0 0
        %2567 = vmatpush2.bf16.msra.mxu0 0
        %2568 = vmatprep.subr.bf16.mxu0 0
        %2569 = vmatpush2.bf16.msra.mxu0 0
        %2570 = vmatprep.subr.bf16.mxu0 0
        %2571 = vmatpush2.bf16.msra.mxu0 0
        %2572 = vmatprep.mubr.bf16.mxu0 0
        %2573 = vmatmul.mubr.bf16.gmra.mxu0 %v2538
        %v2574 = vpop.f32.mrf.mxu0
        %v2575 = vadd.f32 0.0, %v2574
        %v2576 = vpop.f32.mrf.mxu0
        %v2577 = vpop.f32.mrf.mxu0
        %v2578 = vpop.f32.mrf.mxu0
        %2579 = vdwg.mxu0
        %v2580 = vadd.f32 %v2529, %v2575
        %v2581 = vxor.u32 %v2580, 2147483648
        %v2582 = vmul.f32 %v2581, 1.442695
        %v2583 = vpow.pop %v2582
        %v2584 = vadd.f32 %v2583, 1.0
        %v2585 = vrcp.pop %v2584
        %v2586 = vmul.f32 1.0, %v2585
        %v2587 = vtanh.pop %v2580
        %2589 = vrot.lane.b32.xlu0 %v2523, 32
        %v2590 = vpop.permute.xlu0 %2589
        %v2592 = vmul.f32 %v2586, %v2590
        %2594 = vrot.lane.b32.xlu0 %v2587, 64
        %v2595 = vpop.permute.xlu0 %2594
        %v2597 = vmul.f32 %v2586, %v2595
        %2599 = vrot.lane.b32.xlu0 %v2597, 32
        %v2600 = vpop.permute.xlu0 %2599
        %v2602 = vadd.f32 %v2592, %v2600
        %v2603 = vtanh.pop %v2602
        %2605 = vrot.lane.b32.xlu0 %v2603, 64
        %v2606 = vpop.permute.xlu0 %2605
        %v2608 = vmul.f32 %v2586, %v2606
        %v2609 = vld [vmem:[%s481 + $0x1c] sm:$0xf]
        %2611 = vrot.lane.b32.xlu0 %v2608, 32
        %v2612 = vpop.permute.xlu0 %2611
        %v2614 = vmul.f32 %v2609, %v2612
        %v2615 = vsub.f32 1.0, %v2609
        %v2616 = vmul.f32 %v2615, %v2516
        %v2617 = vadd.f32 %v2614, %v2616
        %2619 = vrot.lane.b32.xlu0 %v2602, 96
        %v2620 = vpop.permute.xlu0 %2619
        %v2622 = vmul.f32 %v2609, %v2620
        %v2623 = vmul.f32 %v2615, %v2523
        %v2624 = vadd.f32 %v2622, %v2623
        %v2625 = vadd.f32 %v2524, %v2614
        %v2626 = vsel %vm620, %v1806, %v1798
        %2628 = vrot.lane.b32.xlu0 %v2617, 32
        %v2629 = vpop.permute.xlu0 %2628
        %v2631 = vsel %vm562, %v2617, %v2629
        %v2632 = vmul.f32 %v2631, %v506
        %v2633 = vpack.c.bf16 %v2632, %v2632
        %v2635 = vsel %vm648, %v2633, 0
        %2637 = vmatprep.subr.bf16.mxu0 0
        %2638 = vmatpush1.bf16.msra.mxu0 0
        %2639 = vmatprep.subr.bf16.mxu0 0
        %2640 = vmatpush1.bf16.msra.mxu0 0
        %2641 = vmatprep.subr.bf16.mxu0 0
        %2642 = vmatpush1.bf16.msra.mxu0 0
        %2643 = vmatprep.subr.bf16.mxu0 0
        %2644 = vmatpush1.bf16.msra.mxu0 0
        %2645 = vmatprep.subr.bf16.mxu0 0
        %2646 = vmatpush1.bf16.msra.mxu0 %v1832
        %2647 = vmatprep.subr.bf16.mxu0 0
        %2648 = vmatpush1.bf16.msra.mxu0 %v1831
        %2649 = vmatprep.subr.bf16.mxu0 0
        %2650 = vmatpush1.bf16.msra.mxu0 %v1830
        %2651 = vmatprep.subr.bf16.mxu0 0
        %2652 = vmatpush1.bf16.msra.mxu0 %v1829
        %2653 = vmatprep.subr.bf16.mxu0 0
        %2654 = vmatpush2.bf16.msra.mxu0 0
        %2655 = vmatprep.subr.bf16.mxu0 0
        %2656 = vmatpush2.bf16.msra.mxu0 0
        %2657 = vmatprep.subr.bf16.mxu0 0
        %2658 = vmatpush2.bf16.msra.mxu0 0
        %2659 = vmatprep.subr.bf16.mxu0 0
        %2660 = vmatpush2.bf16.msra.mxu0 0
        %2661 = vmatprep.subr.bf16.mxu0 0
        %2662 = vmatpush2.bf16.msra.mxu0 0
        %2663 = vmatprep.subr.bf16.mxu0 0
        %2664 = vmatpush2.bf16.msra.mxu0 0
        %2665 = vmatprep.subr.bf16.mxu0 0
        %2666 = vmatpush2.bf16.msra.mxu0 0
        %2667 = vmatprep.subr.bf16.mxu0 0
        %2668 = vmatpush2.bf16.msra.mxu0 0
        %2669 = vmatprep.mubr.bf16.mxu0 0
        %2670 = vmatmul.mubr.bf16.gmra.mxu0 %v2635
        %v2671 = vpop.f32.mrf.mxu0
        %v2672 = vadd.f32 0.0, %v2671
        %v2673 = vpop.f32.mrf.mxu0
        %v2674 = vpop.f32.mrf.mxu0
        %v2675 = vpop.f32.mrf.mxu0
        %2676 = vdwg.mxu0
        %v2677 = vadd.f32 %v2626, %v2672
        %v2678 = vxor.u32 %v2677, 2147483648
        %v2679 = vmul.f32 %v2678, 1.442695
        %v2680 = vpow.pop %v2679
        %v2681 = vadd.f32 %v2680, 1.0
        %v2682 = vrcp.pop %v2681
        %v2683 = vmul.f32 1.0, %v2682
        %v2684 = vtanh.pop %v2677
        %2686 = vrot.lane.b32.xlu0 %v2624, 32
        %v2687 = vpop.permute.xlu0 %2686
        %v2689 = vmul.f32 %v2683, %v2687
        %2691 = vrot.lane.b32.xlu0 %v2684, 64
        %v2692 = vpop.permute.xlu0 %2691
        %v2694 = vmul.f32 %v2683, %v2692
        %2696 = vrot.lane.b32.xlu0 %v2694, 32
        %v2697 = vpop.permute.xlu0 %2696
        %v2699 = vadd.f32 %v2689, %v2697
        %v2700 = vtanh.pop %v2699
        %2702 = vrot.lane.b32.xlu0 %v2700, 64
        %v2703 = vpop.permute.xlu0 %2702
        %v2705 = vmul.f32 %v2683, %v2703
        %v2706 = vld [vmem:[%s481 + $0x20] sm:$0xf]
        %2708 = vrot.lane.b32.xlu0 %v2705, 32
        %v2709 = vpop.permute.xlu0 %2708
        %v2711 = vmul.f32 %v2706, %v2709
        %v2712 = vsub.f32 1.0, %v2706
        %v2713 = vmul.f32 %v2712, %v2617
        %v2714 = vadd.f32 %v2711, %v2713
        %2716 = vrot.lane.b32.xlu0 %v2699, 96
        %v2717 = vpop.permute.xlu0 %2716
        %v2719 = vmul.f32 %v2706, %v2717
        %v2720 = vmul.f32 %v2712, %v2624
        %v2721 = vadd.f32 %v2719, %v2720
        %v2722 = vadd.f32 %v2625, %v2711
        %v2724 = vrot.slane %v1806, 2
        %v2726 = vrot.slane %v1798, 6
        %v2728 = vsel %vm620, %v2724, %v2726
        %2730 = vrot.lane.b32.xlu0 %v2714, 32
        %v2731 = vpop.permute.xlu0 %2730
        %v2733 = vsel %vm562, %v2714, %v2731
        %v2734 = vmul.f32 %v2733, %v506
        %v2735 = vpack.c.bf16 %v2734, %v2734
        %v2737 = vsel %vm648, %v2735, 0
        %2739 = vmatprep.subr.bf16.mxu0 0
        %2740 = vmatpush1.bf16.msra.mxu0 0
        %2741 = vmatprep.subr.bf16.mxu0 0
        %2742 = vmatpush1.bf16.msra.mxu0 0
        %2743 = vmatprep.subr.bf16.mxu0 0
        %2744 = vmatpush1.bf16.msra.mxu0 0
        %2745 = vmatprep.subr.bf16.mxu0 0
        %2746 = vmatpush1.bf16.msra.mxu0 0
        %2747 = vmatprep.subr.bf16.mxu0 0
        %2748 = vmatpush1.bf16.msra.mxu0 %v1832
        %2749 = vmatprep.subr.bf16.mxu0 0
        %2750 = vmatpush1.bf16.msra.mxu0 %v1831
        %2751 = vmatprep.subr.bf16.mxu0 0
        %2752 = vmatpush1.bf16.msra.mxu0 %v1830
        %2753 = vmatprep.subr.bf16.mxu0 0
        %2754 = vmatpush1.bf16.msra.mxu0 %v1829
        %2755 = vmatprep.subr.bf16.mxu0 0
        %2756 = vmatpush2.bf16.msra.mxu0 0
        %2757 = vmatprep.subr.bf16.mxu0 0
        %2758 = vmatpush2.bf16.msra.mxu0 0
        %2759 = vmatprep.subr.bf16.mxu0 0
        %2760 = vmatpush2.bf16.msra.mxu0 0
        %2761 = vmatprep.subr.bf16.mxu0 0
        %2762 = vmatpush2.bf16.msra.mxu0 0
        %2763 = vmatprep.subr.bf16.mxu0 0
        %2764 = vmatpush2.bf16.msra.mxu0 0
        %2765 = vmatprep.subr.bf16.mxu0 0
        %2766 = vmatpush2.bf16.msra.mxu0 0
        %2767 = vmatprep.subr.bf16.mxu0 0
        %2768 = vmatpush2.bf16.msra.mxu0 0
        %2769 = vmatprep.subr.bf16.mxu0 0
        %2770 = vmatpush2.bf16.msra.mxu0 0
        %2771 = vmatprep.mubr.bf16.mxu0 0
        %2772 = vmatmul.mubr.bf16.gmra.mxu0 %v2737
        %v2773 = vpop.f32.mrf.mxu0
        %v2774 = vadd.f32 0.0, %v2773
        %v2775 = vpop.f32.mrf.mxu0
        %v2776 = vpop.f32.mrf.mxu0
        %v2777 = vpop.f32.mrf.mxu0
        %2778 = vdwg.mxu0
        %v2779 = vadd.f32 %v2728, %v2774
        %v2780 = vxor.u32 %v2779, 2147483648
        %v2781 = vmul.f32 %v2780, 1.442695
        %v2782 = vpow.pop %v2781
        %v2783 = vadd.f32 %v2782, 1.0
        %v2784 = vrcp.pop %v2783
        %v2785 = vmul.f32 1.0, %v2784
        %v2786 = vtanh.pop %v2779
        %2788 = vrot.lane.b32.xlu0 %v2721, 32
        %v2789 = vpop.permute.xlu0 %2788
        %v2791 = vmul.f32 %v2785, %v2789
        %2793 = vrot.lane.b32.xlu0 %v2786, 64
        %v2794 = vpop.permute.xlu0 %2793
        %v2796 = vmul.f32 %v2785, %v2794
        %2798 = vrot.lane.b32.xlu0 %v2796, 32
        %v2799 = vpop.permute.xlu0 %2798
        %v2801 = vadd.f32 %v2791, %v2799
        %v2802 = vtanh.pop %v2801
        %2804 = vrot.lane.b32.xlu0 %v2802, 64
        %v2805 = vpop.permute.xlu0 %2804
        %v2807 = vmul.f32 %v2785, %v2805
        %v2808 = vld [vmem:[%s481 + $0x24] sm:$0xf]
        %2810 = vrot.lane.b32.xlu0 %v2807, 32
        %v2811 = vpop.permute.xlu0 %2810
        %v2813 = vmul.f32 %v2808, %v2811
        %v2814 = vadd.f32 %v2722, %v2813
        %v2816 = vrot.slane %v2814, 2
        %2817 = vrot.lane.b32.xlu0 %v2816, 32
        %v2818 = vpop.permute.xlu0 %2817
        %v2820 = vsel %vm562, %v2814, %v2818
        %vm2821 = vcmask 517120
        %2822 = vst.msk [vmem:[%s471] sm:$0x3] %vm2821, %v2820
        %s2823 = sand.u32 %s244, 1
        %s2824 = scalar_lea.sflag [#allocation5], %s2823
        %s2825 = sand.u32 %s244, 1
        %s2826 = smul.addr %s2825, 2
        %s2827 = scalar_lea.vmem [#allocation9], %s2826
        // Predicated region
        $region65: #{tpu_custom_call.1} parent=51 // pred_check
          %p2828 = pneg %p254
        $region66: #{tpu_custom_call.1} parent=51 // pred_check_branch
          %2830 = sbr.rel (%p2828) target = $region68
        $region67: #{tpu_custom_call.1} parent=51 // pred_region
          %s2832 = ssub.s32 32, 32
          %2833 = vsyncadd %s2824, %s2832
          %s2834 = smul.addr %s28, 32
          %s2835 = scalar_lea.hbm %s8, %s2834
          %s2837 = sshll.u32 %s2827, 4
          %s2838 = int_to_ptr.vmem [resolvable:$true] %s2837
          %2840 = dma.vmem_to_hbm [thread:$0]  %s2838, 32, %s2835, %s2824
        $region68: #{tpu_custom_call.1} parent=51 // pred_fallthru
          _
      $region52: #{tpu_custom_call.1} parent=5 // pred_fallthru
        _
      %p2841 = scmp.le.s32.totalorder 2, %s23
      // Predicated region
      $region69: #{tpu_custom_call.1} parent=5 // pred_check
        %p2842 = pneg %p2841
      $region70: #{tpu_custom_call.1} parent=5 // pred_check_branch
        %2844 = sbr.rel (%p2842) target = $region72
      $region71: #{tpu_custom_call.1} parent=5 // pred_region
        %s2845 = ssub.s32 %s23, 2
        // Predicated region
        $region73: #{tpu_custom_call.1} parent=71 // pred_check
          %p2846 = pneg %p260
        $region74: #{tpu_custom_call.1} parent=71 // pred_check_branch
          %2848 = sbr.rel (%p2846) target = $region76
        $region75: #{tpu_custom_call.1} parent=71 // pred_region
          %s2849 = sand.u32 %s245, 1
          %s2850 = scalar_lea.sflag [#allocation5], %s2849
          %s2851 = sand.u32 %s245, 1
          %s2852 = smul.addr %s2851, 2
          %s2853 = scalar_lea.vmem [#allocation9], %s2852
          %2854 = dma.done %s2850, 32
        $region76: #{tpu_custom_call.1} parent=71 // pred_fallthru
          _
      $region72: #{tpu_custom_call.1} parent=5 // pred_fallthru
        _
    $region6: #{tpu_custom_call.1} parent=1 // loop_footer
      %s27 = sadd.s32 1, %s23
    $region7: #{tpu_custom_call.1} parent=1 // loop_footer_branch
      %22 = sbr.rel target = $region3
    $region8: #{tpu_custom_call.1} parent=1 // loop_exit
      _
    %2855 = vsyncpa [#allocation4], 1
    %s2856 = scalar_lea.sflag [#allocation4], 1
    %2857 = vsyncpa %s2856, 1
    %2858 = vsyncpa [#allocation7], 1
    %s2859 = scalar_lea.sflag [#allocation7], 1
    %2860 = vsyncpa %s2859, 1
    %2861 = vsyncpa [#allocation5], 1
    %s2862 = scalar_lea.sflag [#allocation5], 1
    %2863 = vsyncpa %s2862, 1

</llo_original>
